<compile_context>
chip_gen: v7x
topology: tpu7x:2x2x1
jax: 0.10.0
libtpu: 0.0.40
codegen_flags: <defaults>
</compile_context>

<pallas_src>
import functools

import jax
import jax.numpy as jnp
from jax.experimental import pallas as pl
from jax.experimental.pallas import tpu as pltpu

EPS = 1e-5
LANE = 128
BOTTLENECK_MULTIPLE = 4


# ----------------------------------------------------------------------------
# helpers
# ----------------------------------------------------------------------------
def _round_up(n, m=LANE):
    return ((n + m - 1) // m) * m


def _pad_to_shape(a, shape):
    pads = [(0, s - d) for d, s in zip(a.shape, shape)]
    if all(p == (0, 0) for p in pads):
        return a
    return jnp.pad(a, pads)


@functools.lru_cache(maxsize=None)
def _vmem_limit_bytes():
    """Scoped VMEM limit: ~3/4 of physical, clamped to [32, 96] MiB.

    v5e/v6e (128 MiB) -> 96 MiB; v7x (64 MiB) -> 48 MiB; unknown -> 48 MiB.
    """
    try:
        info = pltpu.get_tpu_info()
        cap = getattr(info, "vmem_capacity_bytes", None)
        if cap:
            return int(min(96 * 2**20, max(32 * 2**20, (int(cap) * 3) // 4)))
    except Exception:
        pass
    return 48 * 2**20


@functools.lru_cache(maxsize=None)
def _row_tile_cap():
    # Bigger row tiles amortize per-grid-step overhead and cut weight-sweep
    # count; keep them smaller on 64 MiB-VMEM parts (v7x).
    return 512 if _vmem_limit_bytes() >= 64 * 2**20 else 256


def _pick_row_tile(p, cap=None):
    cap = cap or _row_tile_cap()
    if p <= cap:
        return p
    start = cap - (cap % 8)
    for t in range(start, 7, -8):          # multiples of 8 (sublane granularity)
        if p % t == 0:
            return t
    # TODO(synk): pad rows / use a cdiv grid for awkward N*H*W instead of a
    # full-P fallback tile.
    return p


def _compiler_params(sem):
    return pltpu.CompilerParams(dimension_semantics=sem,
                                vmem_limit_bytes=_vmem_limit_bytes())


# ----------------------------------------------------------------------------
# Kernel A: single matmul (+optional fused input-BN+ReLU) + BN partial stats
#           (used for conv1, conv3 and the projection shortcut)
# ----------------------------------------------------------------------------
def _mm_stats_kernel(*refs, fuse_bn):
    if fuse_bn:
        x_ref, w_ref, sc_ref, sh_ref, y_ref, s_ref, q_ref = refs
    else:
        x_ref, w_ref, y_ref, s_ref, q_ref = refs
        sc_ref = sh_ref = None

    x = x_ref[...]
    if fuse_bn:
        # BN(+ReLU) of the previous stage rides on the VPU under the MXU.
        x = jnp.maximum(x.astype(jnp.float32) * sc_ref[...] + sh_ref[...], 0.0)
        x = x.astype(jnp.bfloat16)
    y = jnp.dot(x, w_ref[...], preferred_element_type=jnp.float32)
    y_ref[...] = y.astype(y_ref.dtype)
    s_ref[...] = jnp.sum(y, axis=0, keepdims=True)
    q_ref[...] = jnp.sum(y * y, axis=0, keepdims=True)


def matmul_stats(x, w, scale=None, shift=None, out_dtype=jnp.bfloat16):
    """y = bn_relu?(x) @ w  (bf16 out) + per-row-tile sum / sumsq of y."""
    p, k = x.shape
    c = w.shape[1]
    rt = _pick_row_tile(p)
    nr = p // rt
    fuse = scale is not None

    in_specs = [
        pl.BlockSpec((rt, k), lambda i: (i, 0)),
        pl.BlockSpec((k, c), lambda i: (0, 0)),          # resident weight
    ]
    args = [x, w]
    if fuse:
        in_specs += [pl.BlockSpec((1, k), lambda i: (0, 0)),
                     pl.BlockSpec((1, k), lambda i: (0, 0))]
        args += [scale, shift]

    return pl.pallas_call(
        functools.partial(_mm_stats_kernel, fuse_bn=fuse),
        grid_spec=pltpu.PrefetchScalarGridSpec(
            num_scalar_prefetch=0,
            grid=(nr,),
            in_specs=in_specs,
            out_specs=[
                pl.BlockSpec((rt, c), lambda i: (i, 0)),
                pl.BlockSpec((None, 1, c), lambda i: (i, 0, 0)),
                pl.BlockSpec((None, 1, c), lambda i: (i, 0, 0)),
            ],
        ),
        out_shape=(
            jax.ShapeDtypeStruct((p, c), out_dtype),
            jax.ShapeDtypeStruct((nr, 1, c), jnp.float32),
            jax.ShapeDtypeStruct((nr, 1, c), jnp.float32),
        ),
        compiler_params=_compiler_params(("parallel",)),
    )(*args)


# ----------------------------------------------------------------------------
# Kernel B: BN1 apply + ReLU + zero-pad writer (per image)
# ----------------------------------------------------------------------------
def _bn_pad_kernel(x_ref, sc_ref, sh_ref, o_ref):
    h, w, _ = x_ref.shape
    a = jnp.maximum(x_ref[...].astype(jnp.float32) * sc_ref[...] + sh_ref[...],
                    0.0)
    o_ref[...] = jnp.zeros_like(o_ref)
    o_ref[pl.ds(1, h), pl.ds(1, w), :] = a.astype(o_ref.dtype)


def bn_pad(y1_img, scale, shift, out_dtype=jnp.bfloat16):
    n, h, w, c = y1_img.shape
    return pl.pallas_call(
        _bn_pad_kernel,
        grid_spec=pltpu.PrefetchScalarGridSpec(
            num_scalar_prefetch=0,
            grid=(n,),
            in_specs=[
                pl.BlockSpec((None, h, w, c), lambda b: (b, 0, 0, 0)),
                pl.BlockSpec((1, c), lambda b: (0, 0)),
                pl.BlockSpec((1, c), lambda b: (0, 0)),
            ],
            out_specs=pl.BlockSpec((None, h + 2, w + 2, c),
                                   lambda b: (b, 0, 0, 0)),
        ),
        out_shape=jax.ShapeDtypeStruct((n, h + 2, w + 2, c), out_dtype),
        compiler_params=_compiler_params(("parallel",)),
    )(y1_img, scale, shift)


# ----------------------------------------------------------------------------
# Kernel C: 3x3 conv as 9 in-VMEM tap-gather matmuls (+ BN partial stats)
# ----------------------------------------------------------------------------
def _conv2_kernel(ph_ref, w2_ref, y_ref, s_ref, q_ref, *, stride, ho, wo, hph):
    cin = w2_ref.shape[1]
    cout = w2_ref.shape[2]
    acc = jnp.zeros((ho * wo, cout), jnp.float32)
    for ky in range(3):
        for kx in range(3):
            # stride folded into the phase layout: tap (ky,kx) is a contiguous
            # shifted window of phase (ky%s, kx%s).
            ph = (ky % stride) * stride + (kx % stride)
            dy, dx = ky // stride, kx // stride
            r0 = ph * hph + dy
            tap = ph_ref[r0:r0 + ho, dx:dx + wo, :]
            acc = acc + jnp.dot(tap.reshape(ho * wo, cin),
                                w2_ref[ky * 3 + kx],
                                preferred_element_type=jnp.float32)
    y_ref[...] = acc.astype(y_ref.dtype)
    s_ref[...] = jnp.sum(acc, axis=0, keepdims=True)
    q_ref[...] = jnp.sum(acc * acc, axis=0, keepdims=True)


def conv2_taps(phases, w2, *, stride, ho, wo, hph, out_dtype=jnp.bfloat16):
    n, hall, wph, c = phases.shape
    cout = w2.shape[2]
    kern = functools.partial(_conv2_kernel, stride=stride, ho=ho, wo=wo,
                             hph=hph)
    return pl.pallas_call(
        kern,
        grid_spec=pltpu.PrefetchScalarGridSpec(
            num_scalar_prefetch=0,
            grid=(n,),
            in_specs=[
                pl.BlockSpec((None, hall, wph, c), lambda b: (b, 0, 0, 0)),
                pl.BlockSpec((9, c, cout), lambda b: (0, 0, 0)),   # resident
            ],
            out_specs=[
                pl.BlockSpec((None, ho * wo, cout), lambda b: (b, 0, 0)),
                pl.BlockSpec((None, 1, cout), lambda b: (b, 0, 0)),
                pl.BlockSpec((None, 1, cout), lambda b: (b, 0, 0)),
            ],
        ),
        out_shape=(
            jax.ShapeDtypeStruct((n, ho * wo, cout), out_dtype),
            jax.ShapeDtypeStruct((n, 1, cout), jnp.float32),
            jax.ShapeDtypeStruct((n, 1, cout), jnp.float32),
        ),
        compiler_params=_compiler_params(("parallel",)),
    )(phases, w2)


# ----------------------------------------------------------------------------
# Kernel D: dual BN apply + residual add + ReLU (bf16 out)
# ----------------------------------------------------------------------------
def _dual_bn_add_relu_kernel(ya_ref, yb_ref, sca_ref, sha_ref,
                             scb_ref, shb_ref, o_ref):
    a = ya_ref[...].astype(jnp.float32) * sca_ref[...] + sha_ref[...]
    b = yb_ref[...].astype(jnp.float32) * scb_ref[...] + shb_ref[...]
    o_ref[...] = jnp.maximum(a + b, 0.0).astype(o_ref.dtype)


def dual_bn_add_relu(ya, yb, sca, sha, scb, shb, out_dtype=jnp.bfloat16):
    p, c = ya.shape
    rt = _pick_row_tile(p)
    nr = p // rt
    vec = pl.BlockSpec((1, c), lambda i: (0, 0))
    big = pl.BlockSpec((rt, c), lambda i: (i, 0))
    return pl.pallas_call(
        _dual_bn_add_relu_kernel,
        grid_spec=pltpu.PrefetchScalarGridSpec(
            num_scalar_prefetch=0,
            grid=(nr,),
            in_specs=[big, big, vec, vec, vec, vec],
            out_specs=big,
        ),
        out_shape=jax.ShapeDtypeStruct((p, c), out_dtype),
        compiler_params=_compiler_params(("parallel",)),
    )(ya, yb, sca, sha, scb, shb)


# ----------------------------------------------------------------------------
# BatchNorm finalize (tiny, per-channel): fold stats into scale/shift
# ----------------------------------------------------------------------------
def _fold_bn(sum_tiles, sumsq_tiles, count, gamma, beta):
    # NOTE: stats come from the f32 accumulator but are applied to the
    # bf16-rounded activation (small, tolerated systematic mismatch).
    s = jnp.sum(sum_tiles, axis=0)                 # (1, C)
    q = jnp.sum(sumsq_tiles, axis=0)               # (1, C)
    mean = s / count
    var = jnp.maximum(q / count - mean * mean, 0.0)
    scale = gamma.reshape(1, -1) * jax.lax.rsqrt(var + EPS)
    shift = beta.reshape(1, -1) - mean * scale
    return scale.astype(jnp.float32), shift.astype(jnp.float32)


# ----------------------------------------------------------------------------
# Parameters (PyTorch shapes: OIHW conv weights) + one-time weight prep
# ----------------------------------------------------------------------------
def init_params(key, in_channel, out_channel):
    cout = out_channel * BOTTLENECK_MULTIPLE
    ks = jax.random.split(key, 4)
    return {
        "w1": 0.1 * jax.random.normal(ks[0], (out_channel, in_channel, 1, 1), jnp.float32),
        "g1": jnp.ones((out_channel,), jnp.float32),
        "b1": jnp.zeros((out_channel,), jnp.float32),
        "w2": 0.1 * jax.random.normal(ks[1], (out_channel, out_channel, 3, 3), jnp.float32),
        "g2": jnp.ones((out_channel,), jnp.float32),
        "b2": jnp.zeros((out_channel,), jnp.float32),
        "w3": 0.1 * jax.random.normal(ks[2], (cout, out_channel, 1, 1), jnp.float32),
        "g3": jnp.ones((cout,), jnp.float32),
        "b3": jnp.zeros((cout,), jnp.float32),
        "ws": 0.1 * jax.random.normal(ks[3], (cout, in_channel, 1, 1), jnp.float32),
        "gs": jnp.ones((cout,), jnp.float32),
        "bs": jnp.zeros((cout,), jnp.float32),
    }


def prepare_params(params):
    """One-time weight transpose / channel-pad / bf16 cast (hoisted out of fwd)."""
    bf16 = jnp.bfloat16
    cmid, cin = params["w1"].shape[0], params["w1"].shape[1]
    cout = params["w3"].shape[0]
    cin_p, cmid_p, cout_p = _round_up(cin), _round_up(cmid), _round_up(cout)

    w1 = _pad_to_shape(params["w1"].reshape(cmid, cin).T, (cin_p, cmid_p)).astype(bf16)
    w2 = jnp.transpose(params["w2"], (2, 3, 1, 0)).reshape(9, cmid, cmid)
    w2 = _pad_to_shape(w2, (9, cmid_p, cmid_p)).astype(bf16)
    w3 = _pad_to_shape(params["w3"].reshape(cout, cmid).T, (cmid_p, cout_p)).astype(bf16)
    ws = _pad_to_shape(params["ws"].reshape(cout, cin).T, (cin_p, cout_p)).astype(bf16)

    prepped = {
        "w1": w1, "w2": w2, "w3": w3, "ws": ws,
        "g1": _pad_to_shape(params["g1"], (cmid_p,)), "b1": _pad_to_shape(params["b1"], (cmid_p,)),
        "g2": _pad_to_shape(params["g2"], (cmid_p,)), "b2": _pad_to_shape(params["b2"], (cmid_p,)),
        "g3": _pad_to_shape(params["g3"], (cout_p,)), "b3": _pad_to_shape(params["b3"], (cout_p,)),
        "gs": _pad_to_shape(params["gs"], (cout_p,)), "bs": _pad_to_shape(params["bs"], (cout_p,)),
    }
    return prepped, cout


# ----------------------------------------------------------------------------
# Forward pass
# ----------------------------------------------------------------------------
def bottleneck_forward(x_nchw, prepped, *, stride=1, out_channels):
    bf16 = jnp.bfloat16
    x = jnp.transpose(x_nchw, (0, 2, 3, 1))                          # NHWC
    n, h, w, cin = x.shape
    cin_p = prepped["w1"].shape[0]
    cmid_p = prepped["w1"].shape[1]
    cout_p = prepped["w3"].shape[1]
    s = stride
    ho = (h - 1) // s + 1
    wo = (w - 1) // s + 1
    p0, p2 = n * h * w, n * ho * wo

    x_p = _pad_to_shape(x, (n, h, w, cin_p)).astype(bf16)
    x_flat = x_p.reshape(p0, cin_p)

    # ---- conv1 (1x1) + BN1 partial stats -----------------------------------
    y1, s1, q1 = matmul_stats(x_flat, prepped["w1"])
    sc1, sh1 = _fold_bn(s1, q1, p0, prepped["g1"], prepped["b1"])

    # ---- BN1 apply + ReLU + zero-pad (written once, per image) -------------
    h1_pad = bn_pad(y1.reshape(n, h, w, cmid_p), sc1, sh1)   # (n,h+2,w+2,Cmid)

    # stride folded into a phase decomposition so all in-kernel tap reads are
    # contiguous (identity / zero-copy for stride==1).
    if s == 1:
        phases = h1_pad
        hph = h + 2
    else:
        hph = -(-(h + 2) // s)
        wph = -(-(w + 2) // s)
        slabs = []
        for py in range(s):
            for px in range(s):
                v = h1_pad[:, py::s, px::s, :]
                slabs.append(_pad_to_shape(v, (n, hph, wph, cmid_p)))
        phases = jnp.concatenate(slabs, axis=1)     # (n, s*s*hph, wph, Cmid)

    # ---- conv2 (3x3, stride, pad=1): 9 in-VMEM tap matmuls + BN2 stats -----
    y2, s2, q2 = conv2_taps(phases, prepped["w2"], stride=s, ho=ho, wo=wo,
                            hph=hph)
    sc2, sh2 = _fold_bn(s2, q2, p2, prepped["g2"], prepped["b2"])

    # ---- conv3 (1x1) with fused BN2+ReLU on its input + BN3 stats ----------
    y3, s3, q3 = matmul_stats(y2.reshape(p2, cmid_p), prepped["w3"],
                              scale=sc2, shift=sh2)
    sc3, sh3 = _fold_bn(s3, q3, p2, prepped["g3"], prepped["b3"])

    # ---- projection shortcut (1x1, stride) + BNs stats ----------------------
    # TODO(synk): for stride>1 the strided subsample of x is still one XLA
    # slice; fold it into the conv2 kernel's per-image grid to remove it.
    xs_flat = x_flat if s == 1 else x_p[:, ::s, ::s, :].reshape(p2, cin_p)
    ysc, ss, qs = matmul_stats(xs_flat, prepped["ws"])
    scs, shs = _fold_bn(ss, qs, p2, prepped["gs"], prepped["bs"])

    # ---- BN3 + BNs + add + ReLU (bf16 out) ----------------------------------
    out = dual_bn_add_relu(y3, ysc, sc3, sh3, scs, shs)      # bf16 (p2, Cout_p)
    out = out.reshape(n, ho, wo, cout_p)[..., :out_channels]
    return jnp.transpose(out, (0, 3, 1, 2)).astype(jnp.float32)      # NCHW f32


# ----------------------------------------------------------------------------
# Pure-JAX reference (PyTorch training-mode semantics, NCHW, f32 HIGHEST)
# ----------------------------------------------------------------------------
def _ref_bn(x, g, b):
    mean = x.mean(axis=(0, 2, 3), keepdims=True)
    var = ((x - mean) ** 2).mean(axis=(0, 2, 3), keepdims=True)
    return (x - mean) / jnp.sqrt(var + EPS) * g.reshape(1, -1, 1, 1) + b.reshape(1, -1, 1, 1)


def _ref_conv(x, w, stride, pad):
    return jax.lax.conv_general_dilated(
        x, w, (stride, stride), pad,
        dimension_numbers=("NCHW", "OIHW", "NCHW"),
        precision=jax.lax.Precision.HIGHEST)


def reference_forward(x, p, stride=1):
    out = jax.nn.relu(_ref_bn(_ref_conv(x, p["w1"], 1, "VALID"), p["g1"], p["b1"]))
    out = jax.nn.relu(_ref_bn(_ref_conv(out, p["w2"], stride, [(1, 1), (1, 1)]), p["g2"], p["b2"]))
    out = _ref_bn(_ref_conv(out, p["w3"], 1, "VALID"), p["g3"], p["b3"])
    sc = _ref_bn(_ref_conv(x, p["ws"], stride, "VALID"), p["gs"], p["bs"])
    return jax.nn.relu(out + sc)


# ----------------------------------------------------------------------------
if __name__ == "__main__":
    key = jax.random.PRNGKey(0)
    k_x, k_p = jax.random.split(key)

    N, Cin, H, W = 2, 4, 16, 16
    Cmid = 4
    stride = 2

    x = jax.random.normal(k_x, (N, Cin, H, W), jnp.float32)
    params = init_params(k_p, Cin, Cmid)
    prepped, cout = prepare_params(params)

    fwd = jax.jit(functools.partial(bottleneck_forward, stride=stride,
                                    out_channels=cout))
    out = jax.block_until_ready(fwd(x, prepped))

    ref = jax.block_until_ready(reference_forward(x, params, stride=stride))
    assert out.shape == ref.shape == (N, Cmid * BOTTLENECK_MULTIPLE, H // stride, W // stride)

    max_err = float(jnp.max(jnp.abs(out - ref)))
    rel_err = float(jnp.linalg.norm(out - ref) / (jnp.linalg.norm(ref) + 1e-12))
    # bf16 MXU inputs + bf16 intermediates/output => looser-than-f32 agreement
    # with the f32-HIGHEST reference; thresholds sized for a 3-matmul bf16
    # cascade plus a bf16 final store.
    assert max_err < 1.5e-1 and rel_err < 5e-2, (max_err, rel_err)

    print("KERNEL_OK")
</pallas_src>

<mosaic_0001>
module attributes {stable_mosaic.version = 11 : i64} {
  func.func @_mm_stats_kernel(%arg0: i32, %arg1: memref<256x128xbf16, #tpu.memory_space<vmem>>, %arg2: memref<128x128xbf16, #tpu.memory_space<vmem>>, %arg3: memref<256x128xbf16, #tpu.memory_space<vmem>>, %arg4: memref<1x1x128xf32, #tpu.memory_space<vmem>>, %arg5: memref<1x1x128xf32, #tpu.memory_space<vmem>>) attributes {dimension_semantics = [#tpu.dimension_semantics<parallel>], iteration_bounds = array<i64: 2>, scalar_prefetch = 0 : i64, scratch_operands = 0 : i64, tpu.core_type = #tpu.core_type<tc>, window_params = [{transform_indices = @transform_0, window_bounds = array<i64: 256, 128>}, {pipeline_mode = #tpu.pipeline_mode<synchronous>, transform_indices = @transform_1, window_bounds = array<i64: 128, 128>}, {transform_indices = @transform_2, window_bounds = array<i64: 256, 128>}, {transform_indices = @transform_3, window_bounds = array<i64: 1, 1, 128>}, {transform_indices = @transform_4, window_bounds = array<i64: 1, 1, 128>}]} {
    %c0 = arith.constant 0 : index
    %c0_0 = arith.constant 0 : index
    %0 = vector.load %arg1[%c0, %c0_0] : memref<256x128xbf16, #tpu.memory_space<vmem>>, vector<256x128xbf16>
    %c0_1 = arith.constant 0 : index
    %c0_2 = arith.constant 0 : index
    %1 = vector.load %arg2[%c0_1, %c0_2] : memref<128x128xbf16, #tpu.memory_space<vmem>>, vector<128x128xbf16>
    %cst = arith.constant dense<0.000000e+00> : vector<256x128xf32>
    %2 = tpu.matmul %0, %1, %cst {dimension_numbers = #tpu.dot_dimension_numbers<[1], [0], [0], [1], [0, 0, 1, 1], [], []>} : vector<256x128xbf16>, vector<128x128xbf16>, vector<256x128xf32> -> vector<256x128xf32>
    %3 = arith.truncf %2 : vector<256x128xf32> to vector<256x128xbf16>
    %c0_3 = arith.constant 0 : index
    %c0_4 = arith.constant 0 : index
    %4 = vector.load %arg3[%c0_3, %c0_4] : memref<256x128xbf16, #tpu.memory_space<vmem>>, vector<256x128xbf16>
    tpu.vector_store %arg3[%c0_3, %c0_4], %3 {strides = array<i32>} : memref<256x128xbf16, #tpu.memory_space<vmem>>, vector<256x128xbf16>,
    %cst_5 = arith.constant dense<0.000000e+00> : vector<128xf32>
    %5 = vector.multi_reduction <add>, %2, %cst_5 [0] : vector<256x128xf32> to vector<128xf32>
    %6 = vector.shape_cast %5 : vector<128xf32> to vector<1x128xf32>
    %c0_6 = arith.constant 0 : index
    %c0_7 = arith.constant 0 : index
    %c0_8 = arith.constant 0 : index
    %7 = vector.load %arg4[%c0_6, %c0_7, %c0_8] : memref<1x1x128xf32, #tpu.memory_space<vmem>>, vector<1x1x128xf32>
    %8 = vector.shape_cast %7 : vector<1x1x128xf32> to vector<1x128xf32>
    %9 = vector.shape_cast %6 : vector<1x128xf32> to vector<1x1x128xf32>
    tpu.vector_store %arg4[%c0_6, %c0_7, %c0_8], %9 {strides = array<i32>} : memref<1x1x128xf32, #tpu.memory_space<vmem>>, vector<1x1x128xf32>,
    %10 = arith.mulf %2, %2 : vector<256x128xf32>
    %cst_9 = arith.constant dense<0.000000e+00> : vector<128xf32>
    %11 = vector.multi_reduction <add>, %10, %cst_9 [0] : vector<256x128xf32> to vector<128xf32>
    %12 = vector.shape_cast %11 : vector<128xf32> to vector<1x128xf32>
    %c0_10 = arith.constant 0 : index
    %c0_11 = arith.constant 0 : index
    %c0_12 = arith.constant 0 : index
    %13 = vector.load %arg5[%c0_10, %c0_11, %c0_12] : memref<1x1x128xf32, #tpu.memory_space<vmem>>, vector<1x1x128xf32>
    %14 = vector.shape_cast %13 : vector<1x1x128xf32> to vector<1x128xf32>
    %15 = vector.shape_cast %12 : vector<1x128xf32> to vector<1x1x128xf32>
    tpu.vector_store %arg5[%c0_10, %c0_11, %c0_12], %15 {strides = array<i32>} : memref<1x1x128xf32, #tpu.memory_space<vmem>>, vector<1x1x128xf32>,
    return
  }
  func.func @transform_0(%arg0: i32) -> (i32, i32) {
    %c0_i32 = arith.constant 0 : i32
    %c0_i32_0 = arith.constant 0 : i32
    return %arg0, %c0_i32 : i32, i32
  }
  func.func @transform_1(%arg0: i32) -> (i32, i32) {
    %c0_i32 = arith.constant 0 : i32
    %c0_i32_0 = arith.constant 0 : i32
    %c0_i32_1 = arith.constant 0 : i32
    return %c0_i32, %c0_i32_0 : i32, i32
  }
  func.func @transform_2(%arg0: i32) -> (i32, i32) {
    %c0_i32 = arith.constant 0 : i32
    %c0_i32_0 = arith.constant 0 : i32
    return %arg0, %c0_i32 : i32, i32
  }
  func.func @transform_3(%arg0: i32) -> (i32, i32, i32) {
    %c0_i32 = arith.constant 0 : i32
    %c0_i32_0 = arith.constant 0 : i32
    %c0_i32_1 = arith.constant 0 : i32
    return %arg0, %c0_i32, %c0_i32_0 : i32, i32, i32
  }
  func.func @transform_4(%arg0: i32) -> (i32, i32, i32) {
    %c0_i32 = arith.constant 0 : i32
    %c0_i32_0 = arith.constant 0 : i32
    %c0_i32_1 = arith.constant 0 : i32
    return %arg0, %c0_i32, %c0_i32_0 : i32, i32, i32
  }
}

module attributes {stable_mosaic.version = 11 : i64} {
  func.func @_bn_pad_kernel(%arg0: i32, %arg1: memref<1x16x16x128xbf16, #tpu.memory_space<vmem>>, %arg2: memref<1x128xf32, #tpu.memory_space<vmem>>, %arg3: memref<1x128xf32, #tpu.memory_space<vmem>>, %arg4: memref<1x18x18x128xbf16, #tpu.memory_space<vmem>>) attributes {dimension_semantics = [#tpu.dimension_semantics<parallel>], iteration_bounds = array<i64: 2>, scalar_prefetch = 0 : i64, scratch_operands = 0 : i64, tpu.core_type = #tpu.core_type<tc>, window_params = [{transform_indices = @transform_0, window_bounds = array<i64: 1, 16, 16, 128>}, {pipeline_mode = #tpu.pipeline_mode<synchronous>, transform_indices = @transform_1, window_bounds = array<i64: 1, 128>}, {pipeline_mode = #tpu.pipeline_mode<synchronous>, transform_indices = @transform_2, window_bounds = array<i64: 1, 128>}, {transform_indices = @transform_3, window_bounds = array<i64: 1, 18, 18, 128>}]} {
    %c0 = arith.constant 0 : index
    %c0_0 = arith.constant 0 : index
    %c0_1 = arith.constant 0 : index
    %c0_2 = arith.constant 0 : index
    %0 = vector.load %arg1[%c0, %c0_0, %c0_1, %c0_2] : memref<1x16x16x128xbf16, #tpu.memory_space<vmem>>, vector<1x16x16x128xbf16>
    %1 = vector.shape_cast %0 : vector<1x16x16x128xbf16> to vector<16x16x128xbf16>
    %2 = arith.extf %1 : vector<16x16x128xbf16> to vector<16x16x128xf32>
    %c0_3 = arith.constant 0 : index
    %c0_4 = arith.constant 0 : index
    %3 = vector.load %arg2[%c0_3, %c0_4] : memref<1x128xf32, #tpu.memory_space<vmem>>, vector<1x128xf32>
    %4 = vector.shape_cast %3 : vector<1x128xf32> to vector<1x1x128xf32>
    %5 = vector.broadcast %4 : vector<1x1x128xf32> to vector<16x16x128xf32>
    %6 = arith.mulf %2, %5 : vector<16x16x128xf32>
    %c0_5 = arith.constant 0 : index
    %c0_6 = arith.constant 0 : index
    %7 = vector.load %arg3[%c0_5, %c0_6] : memref<1x128xf32, #tpu.memory_space<vmem>>, vector<1x128xf32>
    %8 = vector.shape_cast %7 : vector<1x128xf32> to vector<1x1x128xf32>
    %9 = vector.broadcast %8 : vector<1x1x128xf32> to vector<16x16x128xf32>
    %10 = arith.addf %6, %9 : vector<16x16x128xf32>
    %cst = arith.constant 0.000000e+00 : f32
    %11 = vector.broadcast %cst : f32 to vector<16x16x128xf32>
    %12 = arith.maximumf %10, %11 : vector<16x16x128xf32>
    %cst_7 = arith.constant 0.000000e+00 : bf16
    %13 = vector.broadcast %cst_7 : bf16 to vector<18x18x128xbf16>
    %c0_8 = arith.constant 0 : index
    %c0_9 = arith.constant 0 : index
    %c0_10 = arith.constant 0 : index
    %c0_11 = arith.constant 0 : index
    %14 = vector.load %arg4[%c0_8, %c0_9, %c0_10, %c0_11] : memref<1x18x18x128xbf16, #tpu.memory_space<vmem>>, vector<1x18x18x128xbf16>
    %15 = vector.shape_cast %14 : vector<1x18x18x128xbf16> to vector<18x18x128xbf16>
    %16 = vector.shape_cast %13 : vector<18x18x128xbf16> to vector<1x18x18x128xbf16>
    tpu.vector_store %arg4[%c0_8, %c0_9, %c0_10, %c0_11], %16 {strides = array<i32>} : memref<1x18x18x128xbf16, #tpu.memory_space<vmem>>, vector<1x18x18x128xbf16>,
    %17 = arith.truncf %12 : vector<16x16x128xf32> to vector<16x16x128xbf16>
    %c0_12 = arith.constant 0 : index
    %c1 = arith.constant 1 : index
    %c1_13 = arith.constant 1 : index
    %c0_14 = arith.constant 0 : index
    %18 = vector.load %arg4[%c0_12, %c1, %c1_13, %c0_14] : memref<1x18x18x128xbf16, #tpu.memory_space<vmem>>, vector<1x16x16x128xbf16>
    %19 = vector.shape_cast %18 : vector<1x16x16x128xbf16> to vector<16x16x128xbf16>
    %20 = vector.shape_cast %17 : vector<16x16x128xbf16> to vector<1x16x16x128xbf16>
    tpu.vector_store %arg4[%c0_12, %c1, %c1_13, %c0_14], %20 {strides = array<i32>} : memref<1x18x18x128xbf16, #tpu.memory_space<vmem>>, vector<1x16x16x128xbf16>,
    return
  }
  func.func @transform_0(%arg0: i32) -> (i32, i32, i32, i32) {
    %c0_i32 = arith.constant 0 : i32
    %c0_i32_0 = arith.constant 0 : i32
    %c0_i32_1 = arith.constant 0 : i32
    %c0_i32_2 = arith.constant 0 : i32
    return %arg0, %c0_i32, %c0_i32_0, %c0_i32_1 : i32, i32, i32, i32
  }
  func.func @transform_1(%arg0: i32) -> (i32, i32) {
    %c0_i32 = arith.constant 0 : i32
    %c0_i32_0 = arith.constant 0 : i32
    %c0_i32_1 = arith.constant 0 : i32
    return %c0_i32, %c0_i32_0 : i32, i32
  }
  func.func @transform_2(%arg0: i32) -> (i32, i32) {
    %c0_i32 = arith.constant 0 : i32
    %c0_i32_0 = arith.constant 0 : i32
    %c0_i32_1 = arith.constant 0 : i32
    return %c0_i32, %c0_i32_0 : i32, i32
  }
  func.func @transform_3(%arg0: i32) -> (i32, i32, i32, i32) {
    %c0_i32 = arith.constant 0 : i32
    %c0_i32_0 = arith.constant 0 : i32
    %c0_i32_1 = arith.constant 0 : i32
    %c0_i32_2 = arith.constant 0 : i32
    return %arg0, %c0_i32, %c0_i32_0, %c0_i32_1 : i32, i32, i32, i32
  }
}

module attributes {stable_mosaic.version = 11 : i64} {
  func.func @_conv2_kernel(%arg0: i32, %arg1: memref<1x36x9x128xbf16, #tpu.memory_space<vmem>>, %arg2: memref<9x128x128xbf16, #tpu.memory_space<vmem>>, %arg3: memref<1x64x128xbf16, #tpu.memory_space<vmem>>, %arg4: memref<1x1x128xf32, #tpu.memory_space<vmem>>, %arg5: memref<1x1x128xf32, #tpu.memory_space<vmem>>) attributes {dimension_semantics = [#tpu.dimension_semantics<parallel>], iteration_bounds = array<i64: 2>, scalar_prefetch = 0 : i64, scratch_operands = 0 : i64, tpu.core_type = #tpu.core_type<tc>, window_params = [{transform_indices = @transform_0, window_bounds = array<i64: 1, 36, 9, 128>}, {pipeline_mode = #tpu.pipeline_mode<synchronous>, transform_indices = @transform_1, window_bounds = array<i64: 9, 128, 128>}, {transform_indices = @transform_2, window_bounds = array<i64: 1, 64, 128>}, {transform_indices = @transform_3, window_bounds = array<i64: 1, 1, 128>}, {transform_indices = @transform_4, window_bounds = array<i64: 1, 1, 128>}]} {
    %cst = arith.constant 0.000000e+00 : f32
    %0 = vector.broadcast %cst : f32 to vector<64x128xf32>
    %c0 = arith.constant 0 : index
    %c0_0 = arith.constant 0 : index
    %c0_1 = arith.constant 0 : index
    %c0_2 = arith.constant 0 : index
    %1 = vector.load %arg1[%c0, %c0_0, %c0_1, %c0_2] : memref<1x36x9x128xbf16, #tpu.memory_space<vmem>>, vector<1x8x8x128xbf16>
    %2 = vector.shape_cast %1 : vector<1x8x8x128xbf16> to vector<8x8x128xbf16>
    %3 = vector.shape_cast %2 : vector<8x8x128xbf16> to vector<64x128xbf16>
    %c0_3 = arith.constant 0 : index
    %c0_4 = arith.constant 0 : index
    %c0_5 = arith.constant 0 : index
    %4 = vector.load %arg2[%c0_3, %c0_4, %c0_5] : memref<9x128x128xbf16, #tpu.memory_space<vmem>>, vector<1x128x128xbf16>
    %5 = vector.shape_cast %4 : vector<1x128x128xbf16> to vector<128x128xbf16>
    %cst_6 = arith.constant dense<0.000000e+00> : vector<64x128xf32>
    %6 = tpu.matmul %3, %5, %cst_6 {dimension_numbers = #tpu.dot_dimension_numbers<[1], [0], [0], [1], [0, 0, 1, 1], [], []>} : vector<64x128xbf16>, vector<128x128xbf16>, vector<64x128xf32> -> vector<64x128xf32>
    %7 = arith.addf %0, %6 : vector<64x128xf32>
    %c0_7 = arith.constant 0 : index
    %c9 = arith.constant 9 : index
    %c0_8 = arith.constant 0 : index
    %c0_9 = arith.constant 0 : index
    %8 = vector.load %arg1[%c0_7, %c9, %c0_8, %c0_9] : memref<1x36x9x128xbf16, #tpu.memory_space<vmem>>, vector<1x8x8x128xbf16>
    %9 = vector.shape_cast %8 : vector<1x8x8x128xbf16> to vector<8x8x128xbf16>
    %10 = vector.shape_cast %9 : vector<8x8x128xbf16> to vector<64x128xbf16>
    %c1 = arith.constant 1 : index
    %c0_10 = arith.constant 0 : index
    %c0_11 = arith.constant 0 : index
    %11 = vector.load %arg2[%c1, %c0_10, %c0_11] : memref<9x128x128xbf16, #tpu.memory_space<vmem>>, vector<1x128x128xbf16>
    %12 = vector.shape_cast %11 : vector<1x128x128xbf16> to vector<128x128xbf16>
    %cst_12 = arith.constant dense<0.000000e+00> : vector<64x128xf32>
    %13 = tpu.matmul %10, %12, %cst_12 {dimension_numbers = #tpu.dot_dimension_numbers<[1], [0], [0], [1], [0, 0, 1, 1], [], []>} : vector<64x128xbf16>, vector<128x128xbf16>, vector<64x128xf32> -> vector<64x128xf32>
    %14 = arith.addf %7, %13 : vector<64x128xf32>
    %c0_13 = arith.constant 0 : index
    %c0_14 = arith.constant 0 : index
    %c1_15 = arith.constant 1 : index
    %c0_16 = arith.constant 0 : index
    %15 = vector.load %arg1[%c0_13, %c0_14, %c1_15, %c0_16] : memref<1x36x9x128xbf16, #tpu.memory_space<vmem>>, vector<1x8x8x128xbf16>
    %16 = vector.shape_cast %15 : vector<1x8x8x128xbf16> to vector<8x8x128xbf16>
    %17 = vector.shape_cast %16 : vector<8x8x128xbf16> to vector<64x128xbf16>
    %c2 = arith.constant 2 : index
    %c0_17 = arith.constant 0 : index
    %c0_18 = arith.constant 0 : index
    %18 = vector.load %arg2[%c2, %c0_17, %c0_18] : memref<9x128x128xbf16, #tpu.memory_space<vmem>>, vector<1x128x128xbf16>
    %19 = vector.shape_cast %18 : vector<1x128x128xbf16> to vector<128x128xbf16>
    %cst_19 = arith.constant dense<0.000000e+00> : vector<64x128xf32>
    %20 = tpu.matmul %17, %19, %cst_19 {dimension_numbers = #tpu.dot_dimension_numbers<[1], [0], [0], [1], [0, 0, 1, 1], [], []>} : vector<64x128xbf16>, vector<128x128xbf16>, vector<64x128xf32> -> vector<64x128xf32>
    %21 = arith.addf %14, %20 : vector<64x128xf32>
    %c0_20 = arith.constant 0 : index
    %c18 = arith.constant 18 : index
    %c0_21 = arith.constant 0 : index
    %c0_22 = arith.constant 0 : index
    %22 = vector.load %arg1[%c0_20, %c18, %c0_21, %c0_22] : memref<1x36x9x128xbf16, #tpu.memory_space<vmem>>, vector<1x8x8x128xbf16>
    %23 = vector.shape_cast %22 : vector<1x8x8x128xbf16> to vector<8x8x128xbf16>
    %24 = vector.shape_cast %23 : vector<8x8x128xbf16> to vector<64x128xbf16>
    %c3 = arith.constant 3 : index
    %c0_23 = arith.constant 0 : index
    %c0_24 = arith.constant 0 : index
    %25 = vector.load %arg2[%c3, %c0_23, %c0_24] : memref<9x128x128xbf16, #tpu.memory_space<vmem>>, vector<1x128x128xbf16>
    %26 = vector.shape_cast %25 : vector<1x128x128xbf16> to vector<128x128xbf16>
    %cst_25 = arith.constant dense<0.000000e+00> : vector<64x128xf32>
    %27 = tpu.matmul %24, %26, %cst_25 {dimension_numbers = #tpu.dot_dimension_numbers<[1], [0], [0], [1], [0, 0, 1, 1], [], []>} : vector<64x128xbf16>, vector<128x128xbf16>, vector<64x128xf32> -> vector<64x128xf32>
    %28 = arith.addf %21, %27 : vector<64x128xf32>
    %c0_26 = arith.constant 0 : index
    %c27 = arith.constant 27 : index
    %c0_27 = arith.constant 0 : index
    %c0_28 = arith.constant 0 : index
    %29 = vector.load %arg1[%c0_26, %c27, %c0_27, %c0_28] : memref<1x36x9x128xbf16, #tpu.memory_space<vmem>>, vector<1x8x8x128xbf16>
    %30 = vector.shape_cast %29 : vector<1x8x8x128xbf16> to vector<8x8x128xbf16>
    %31 = vector.shape_cast %30 : vector<8x8x128xbf16> to vector<64x128xbf16>
    %c4 = arith.constant 4 : index
    %c0_29 = arith.constant 0 : index
    %c0_30 = arith.constant 0 : index
    %32 = vector.load %arg2[%c4, %c0_29, %c0_30] : memref<9x128x128xbf16, #tpu.memory_space<vmem>>, vector<1x128x128xbf16>
    %33 = vector.shape_cast %32 : vector<1x128x128xbf16> to vector<128x128xbf16>
    %cst_31 = arith.constant dense<0.000000e+00> : vector<64x128xf32>
    %34 = tpu.matmul %31, %33, %cst_31 {dimension_numbers = #tpu.dot_dimension_numbers<[1], [0], [0], [1], [0, 0, 1, 1], [], []>} : vector<64x128xbf16>, vector<128x128xbf16>, vector<64x128xf32> -> vector<64x128xf32>
    %35 = arith.addf %28, %34 : vector<64x128xf32>
    %c0_32 = arith.constant 0 : index
    %c18_33 = arith.constant 18 : index
    %c1_34 = arith.constant 1 : index
    %c0_35 = arith.constant 0 : index
    %36 = vector.load %arg1[%c0_32, %c18_33, %c1_34, %c0_35] : memref<1x36x9x128xbf16, #tpu.memory_space<vmem>>, vector<1x8x8x128xbf16>
    %37 = vector.shape_cast %36 : vector<1x8x8x128xbf16> to vector<8x8x128xbf16>
    %38 = vector.shape_cast %37 : vector<8x8x128xbf16> to vector<64x128xbf16>
    %c5 = arith.constant 5 : index
    %c0_36 = arith.constant 0 : index
    %c0_37 = arith.constant 0 : index
    %39 = vector.load %arg2[%c5, %c0_36, %c0_37] : memref<9x128x128xbf16, #tpu.memory_space<vmem>>, vector<1x128x128xbf16>
    %40 = vector.shape_cast %39 : vector<1x128x128xbf16> to vector<128x128xbf16>
    %cst_38 = arith.constant dense<0.000000e+00> : vector<64x128xf32>
    %41 = tpu.matmul %38, %40, %cst_38 {dimension_numbers = #tpu.dot_dimension_numbers<[1], [0], [0], [1], [0, 0, 1, 1], [], []>} : vector<64x128xbf16>, vector<128x128xbf16>, vector<64x128xf32> -> vector<64x128xf32>
    %42 = arith.addf %35, %41 : vector<64x128xf32>
    %c0_39 = arith.constant 0 : index
    %c1_40 = arith.constant 1 : index
    %c0_41 = arith.constant 0 : index
    %c0_42 = arith.constant 0 : index
    %43 = vector.load %arg1[%c0_39, %c1_40, %c0_41, %c0_42] : memref<1x36x9x128xbf16, #tpu.memory_space<vmem>>, vector<1x8x8x128xbf16>
    %44 = vector.shape_cast %43 : vector<1x8x8x128xbf16> to vector<8x8x128xbf16>
    %45 = vector.shape_cast %44 : vector<8x8x128xbf16> to vector<64x128xbf16>
    %c6 = arith.constant 6 : index
    %c0_43 = arith.constant 0 : index
    %c0_44 = arith.constant 0 : index
    %46 = vector.load %arg2[%c6, %c0_43, %c0_44] : memref<9x128x128xbf16, #tpu.memory_space<vmem>>, vector<1x128x128xbf16>
    %47 = vector.shape_cast %46 : vector<1x128x128xbf16> to vector<128x128xbf16>
    %cst_45 = arith.constant dense<0.000000e+00> : vector<64x128xf32>
    %48 = tpu.matmul %45, %47, %cst_45 {dimension_numbers = #tpu.dot_dimension_numbers<[1], [0], [0], [1], [0, 0, 1, 1], [], []>} : vector<64x128xbf16>, vector<128x128xbf16>, vector<64x128xf32> -> vector<64x128xf32>
    %49 = arith.addf %42, %48 : vector<64x128xf32>
    %c0_46 = arith.constant 0 : index
    %c10 = arith.constant 10 : index
    %c0_47 = arith.constant 0 : index
    %c0_48 = arith.constant 0 : index
    %50 = vector.load %arg1[%c0_46, %c10, %c0_47, %c0_48] : memref<1x36x9x128xbf16, #tpu.memory_space<vmem>>, vector<1x8x8x128xbf16>
    %51 = vector.shape_cast %50 : vector<1x8x8x128xbf16> to vector<8x8x128xbf16>
    %52 = vector.shape_cast %51 : vector<8x8x128xbf16> to vector<64x128xbf16>
    %c7 = arith.constant 7 : index
    %c0_49 = arith.constant 0 : index
    %c0_50 = arith.constant 0 : index
    %53 = vector.load %arg2[%c7, %c0_49, %c0_50] : memref<9x128x128xbf16, #tpu.memory_space<vmem>>, vector<1x128x128xbf16>
    %54 = vector.shape_cast %53 : vector<1x128x128xbf16> to vector<128x128xbf16>
    %cst_51 = arith.constant dense<0.000000e+00> : vector<64x128xf32>
    %55 = tpu.matmul %52, %54, %cst_51 {dimension_numbers = #tpu.dot_dimension_numbers<[1], [0], [0], [1], [0, 0, 1, 1], [], []>} : vector<64x128xbf16>, vector<128x128xbf16>, vector<64x128xf32> -> vector<64x128xf32>
    %56 = arith.addf %49, %55 : vector<64x128xf32>
    %c0_52 = arith.constant 0 : index
    %c1_53 = arith.constant 1 : index
    %c1_54 = arith.constant 1 : index
    %c0_55 = arith.constant 0 : index
    %57 = vector.load %arg1[%c0_52, %c1_53, %c1_54, %c0_55] : memref<1x36x9x128xbf16, #tpu.memory_space<vmem>>, vector<1x8x8x128xbf16>
    %58 = vector.shape_cast %57 : vector<1x8x8x128xbf16> to vector<8x8x128xbf16>
    %59 = vector.shape_cast %58 : vector<8x8x128xbf16> to vector<64x128xbf16>
    %c8 = arith.constant 8 : index
    %c0_56 = arith.constant 0 : index
    %c0_57 = arith.constant 0 : index
    %60 = vector.load %arg2[%c8, %c0_56, %c0_57] : memref<9x128x128xbf16, #tpu.memory_space<vmem>>, vector<1x128x128xbf16>
    %61 = vector.shape_cast %60 : vector<1x128x128xbf16> to vector<128x128xbf16>
    %cst_58 = arith.constant dense<0.000000e+00> : vector<64x128xf32>
    %62 = tpu.matmul %59, %61, %cst_58 {dimension_numbers = #tpu.dot_dimension_numbers<[1], [0], [0], [1], [0, 0, 1, 1], [], []>} : vector<64x128xbf16>, vector<128x128xbf16>, vector<64x128xf32> -> vector<64x128xf32>
    %63 = arith.addf %56, %62 : vector<64x128xf32>
    %64 = arith.truncf %63 : vector<64x128xf32> to vector<64x128xbf16>
    %c0_59 = arith.constant 0 : index
    %c0_60 = arith.constant 0 : index
    %c0_61 = arith.constant 0 : index
    %65 = vector.load %arg3[%c0_59, %c0_60, %c0_61] : memref<1x64x128xbf16, #tpu.memory_space<vmem>>, vector<1x64x128xbf16>
    %66 = vector.shape_cast %65 : vector<1x64x128xbf16> to vector<64x128xbf16>
    %67 = vector.shape_cast %64 : vector<64x128xbf16> to vector<1x64x128xbf16>
    tpu.vector_store %arg3[%c0_59, %c0_60, %c0_61], %67 {strides = array<i32>} : memref<1x64x128xbf16, #tpu.memory_space<vmem>>, vector<1x64x128xbf16>,
    %cst_62 = arith.constant dense<0.000000e+00> : vector<128xf32>
    %68 = vector.multi_reduction <add>, %63, %cst_62 [0] : vector<64x128xf32> to vector<128xf32>
    %69 = vector.shape_cast %68 : vector<128xf32> to vector<1x128xf32>
    %c0_63 = arith.constant 0 : index
    %c0_64 = arith.constant 0 : index
    %c0_65 = arith.constant 0 : index
    %70 = vector.load %arg4[%c0_63, %c0_64, %c0_65] : memref<1x1x128xf32, #tpu.memory_space<vmem>>, vector<1x1x128xf32>
    %71 = vector.shape_cast %70 : vector<1x1x128xf32> to vector<1x128xf32>
    %72 = vector.shape_cast %69 : vector<1x128xf32> to vector<1x1x128xf32>
    tpu.vector_store %arg4[%c0_63, %c0_64, %c0_65], %72 {strides = array<i32>} : memref<1x1x128xf32, #tpu.memory_space<vmem>>, vector<1x1x128xf32>,
    %73 = arith.mulf %63, %63 : vector<64x128xf32>
    %cst_66 = arith.constant dense<0.000000e+00> : vector<128xf32>
    %74 = vector.multi_reduction <add>, %73, %cst_66 [0] : vector<64x128xf32> to vector<128xf32>
    %75 = vector.shape_cast %74 : vector<128xf32> to vector<1x128xf32>
    %c0_67 = arith.constant 0 : index
    %c0_68 = arith.constant 0 : index
    %c0_69 = arith.constant 0 : index
    %76 = vector.load %arg5[%c0_67, %c0_68, %c0_69] : memref<1x1x128xf32, #tpu.memory_space<vmem>>, vector<1x1x128xf32>
    %77 = vector.shape_cast %76 : vector<1x1x128xf32> to vector<1x128xf32>
    %78 = vector.shape_cast %75 : vector<1x128xf32> to vector<1x1x128xf32>
    tpu.vector_store %arg5[%c0_67, %c0_68, %c0_69], %78 {strides = array<i32>} : memref<1x1x128xf32, #tpu.memory_space<vmem>>, vector<1x1x128xf32>,
    return
  }
  func.func @transform_0(%arg0: i32) -> (i32, i32, i32, i32) {
    %c0_i32 = arith.constant 0 : i32
    %c0_i32_0 = arith.constant 0 : i32
    %c0_i32_1 = arith.constant 0 : i32
    %c0_i32_2 = arith.constant 0 : i32
    return %arg0, %c0_i32, %c0_i32_0, %c0_i32_1 : i32, i32, i32, i32
  }
  func.func @transform_1(%arg0: i32) -> (i32, i32, i32) {
    %c0_i32 = arith.constant 0 : i32
    %c0_i32_0 = arith.constant 0 : i32
    %c0_i32_1 = arith.constant 0 : i32
    %c0_i32_2 = arith.constant 0 : i32
    return %c0_i32, %c0_i32_0, %c0_i32_1 : i32, i32, i32
  }
  func.func @transform_2(%arg0: i32) -> (i32, i32, i32) {
    %c0_i32 = arith.constant 0 : i32
    %c0_i32_0 = arith.constant 0 : i32
    %c0_i32_1 = arith.constant 0 : i32
    return %arg0, %c0_i32, %c0_i32_0 : i32, i32, i32
  }
  func.func @transform_3(%arg0: i32) -> (i32, i32, i32) {
    %c0_i32 = arith.constant 0 : i32
    %c0_i32_0 = arith.constant 0 : i32
    %c0_i32_1 = arith.constant 0 : i32
    return %arg0, %c0_i32, %c0_i32_0 : i32, i32, i32
  }
  func.func @transform_4(%arg0: i32) -> (i32, i32, i32) {
    %c0_i32 = arith.constant 0 : i32
    %c0_i32_0 = arith.constant 0 : i32
    %c0_i32_1 = arith.constant 0 : i32
    return %arg0, %c0_i32, %c0_i32_0 : i32, i32, i32
  }
}

module attributes {stable_mosaic.version = 11 : i64} {
  func.func @_mm_stats_kernel(%arg0: i32, %arg1: memref<128x128xbf16, #tpu.memory_space<vmem>>, %arg2: memref<128x128xbf16, #tpu.memory_space<vmem>>, %arg3: memref<1x128xf32, #tpu.memory_space<vmem>>, %arg4: memref<1x128xf32, #tpu.memory_space<vmem>>, %arg5: memref<128x128xbf16, #tpu.memory_space<vmem>>, %arg6: memref<1x1x128xf32, #tpu.memory_space<vmem>>, %arg7: memref<1x1x128xf32, #tpu.memory_space<vmem>>) attributes {dimension_semantics = [#tpu.dimension_semantics<parallel>], iteration_bounds = array<i64: 1>, scalar_prefetch = 0 : i64, scratch_operands = 0 : i64, tpu.core_type = #tpu.core_type<tc>, window_params = [{transform_indices = @transform_0, window_bounds = array<i64: 128, 128>}, {pipeline_mode = #tpu.pipeline_mode<synchronous>, transform_indices = @transform_1, window_bounds = array<i64: 128, 128>}, {pipeline_mode = #tpu.pipeline_mode<synchronous>, transform_indices = @transform_2, window_bounds = array<i64: 1, 128>}, {pipeline_mode = #tpu.pipeline_mode<synchronous>, transform_indices = @transform_3, window_bounds = array<i64: 1, 128>}, {transform_indices = @transform_4, window_bounds = array<i64: 128, 128>}, {transform_indices = @transform_5, window_bounds = array<i64: 1, 1, 128>}, {transform_indices = @transform_6, window_bounds = array<i64: 1, 1, 128>}]} {
    %c0 = arith.constant 0 : index
    %c0_0 = arith.constant 0 : index
    %0 = vector.load %arg1[%c0, %c0_0] : memref<128x128xbf16, #tpu.memory_space<vmem>>, vector<128x128xbf16>
    %1 = arith.extf %0 : vector<128x128xbf16> to vector<128x128xf32>
    %c0_1 = arith.constant 0 : index
    %c0_2 = arith.constant 0 : index
    %2 = vector.load %arg3[%c0_1, %c0_2] : memref<1x128xf32, #tpu.memory_space<vmem>>, vector<1x128xf32>
    %3 = vector.broadcast %2 : vector<1x128xf32> to vector<128x128xf32>
    %4 = arith.mulf %1, %3 : vector<128x128xf32>
    %c0_3 = arith.constant 0 : index
    %c0_4 = arith.constant 0 : index
    %5 = vector.load %arg4[%c0_3, %c0_4] : memref<1x128xf32, #tpu.memory_space<vmem>>, vector<1x128xf32>
    %6 = vector.broadcast %5 : vector<1x128xf32> to vector<128x128xf32>
    %7 = arith.addf %4, %6 : vector<128x128xf32>
    %cst = arith.constant 0.000000e+00 : f32
    %8 = vector.broadcast %cst : f32 to vector<128x128xf32>
    %9 = arith.maximumf %7, %8 : vector<128x128xf32>
    %10 = arith.truncf %9 : vector<128x128xf32> to vector<128x128xbf16>
    %c0_5 = arith.constant 0 : index
    %c0_6 = arith.constant 0 : index
    %11 = vector.load %arg2[%c0_5, %c0_6] : memref<128x128xbf16, #tpu.memory_space<vmem>>, vector<128x128xbf16>
    %cst_7 = arith.constant dense<0.000000e+00> : vector<128x128xf32>
    %12 = tpu.matmul %10, %11, %cst_7 {dimension_numbers = #tpu.dot_dimension_numbers<[1], [0], [0], [1], [0, 0, 1, 1], [], []>} : vector<128x128xbf16>, vector<128x128xbf16>, vector<128x128xf32> -> vector<128x128xf32>
    %13 = arith.truncf %12 : vector<128x128xf32> to vector<128x128xbf16>
    %c0_8 = arith.constant 0 : index
    %c0_9 = arith.constant 0 : index
    %14 = vector.load %arg5[%c0_8, %c0_9] : memref<128x128xbf16, #tpu.memory_space<vmem>>, vector<128x128xbf16>
    tpu.vector_store %arg5[%c0_8, %c0_9], %13 {strides = array<i32>} : memref<128x128xbf16, #tpu.memory_space<vmem>>, vector<128x128xbf16>,
    %cst_10 = arith.constant dense<0.000000e+00> : vector<128xf32>
    %15 = vector.multi_reduction <add>, %12, %cst_10 [0] : vector<128x128xf32> to vector<128xf32>
    %16 = vector.shape_cast %15 : vector<128xf32> to vector<1x128xf32>
    %c0_11 = arith.constant 0 : index
    %c0_12 = arith.constant 0 : index
    %c0_13 = arith.constant 0 : index
    %17 = vector.load %arg6[%c0_11, %c0_12, %c0_13] : memref<1x1x128xf32, #tpu.memory_space<vmem>>, vector<1x1x128xf32>
    %18 = vector.shape_cast %17 : vector<1x1x128xf32> to vector<1x128xf32>
    %19 = vector.shape_cast %16 : vector<1x128xf32> to vector<1x1x128xf32>
    tpu.vector_store %arg6[%c0_11, %c0_12, %c0_13], %19 {strides = array<i32>} : memref<1x1x128xf32, #tpu.memory_space<vmem>>, vector<1x1x128xf32>,
    %20 = arith.mulf %12, %12 : vector<128x128xf32>
    %cst_14 = arith.constant dense<0.000000e+00> : vector<128xf32>
    %21 = vector.multi_reduction <add>, %20, %cst_14 [0] : vector<128x128xf32> to vector<128xf32>
    %22 = vector.shape_cast %21 : vector<128xf32> to vector<1x128xf32>
    %c0_15 = arith.constant 0 : index
    %c0_16 = arith.constant 0 : index
    %c0_17 = arith.constant 0 : index
    %23 = vector.load %arg7[%c0_15, %c0_16, %c0_17] : memref<1x1x128xf32, #tpu.memory_space<vmem>>, vector<1x1x128xf32>
    %24 = vector.shape_cast %23 : vector<1x1x128xf32> to vector<1x128xf32>
    %25 = vector.shape_cast %22 : vector<1x128xf32> to vector<1x1x128xf32>
    tpu.vector_store %arg7[%c0_15, %c0_16, %c0_17], %25 {strides = array<i32>} : memref<1x1x128xf32, #tpu.memory_space<vmem>>, vector<1x1x128xf32>,
    return
  }
  func.func @transform_0(%arg0: i32) -> (i32, i32) {
    %c0_i32 = arith.constant 0 : i32
    %c0_i32_0 = arith.constant 0 : i32
    return %arg0, %c0_i32 : i32, i32
  }
  func.func @transform_1(%arg0: i32) -> (i32, i32) {
    %c0_i32 = arith.constant 0 : i32
    %c0_i32_0 = arith.constant 0 : i32
    %c0_i32_1 = arith.constant 0 : i32
    return %c0_i32, %c0_i32_0 : i32, i32
  }
  func.func @transform_2(%arg0: i32) -> (i32, i32) {
    %c0_i32 = arith.constant 0 : i32
    %c0_i32_0 = arith.constant 0 : i32
    %c0_i32_1 = arith.constant 0 : i32
    return %c0_i32, %c0_i32_0 : i32, i32
  }
  func.func @transform_3(%arg0: i32) -> (i32, i32) {
    %c0_i32 = arith.constant 0 : i32
    %c0_i32_0 = arith.constant 0 : i32
    %c0_i32_1 = arith.constant 0 : i32
    return %c0_i32, %c0_i32_0 : i32, i32
  }
  func.func @transform_4(%arg0: i32) -> (i32, i32) {
    %c0_i32 = arith.constant 0 : i32
    %c0_i32_0 = arith.constant 0 : i32
    return %arg0, %c0_i32 : i32, i32
  }
  func.func @transform_5(%arg0: i32) -> (i32, i32, i32) {
    %c0_i32 = arith.constant 0 : i32
    %c0_i32_0 = arith.constant 0 : i32
    %c0_i32_1 = arith.constant 0 : i32
    return %arg0, %c0_i32, %c0_i32_0 : i32, i32, i32
  }
  func.func @transform_6(%arg0: i32) -> (i32, i32, i32) {
    %c0_i32 = arith.constant 0 : i32
    %c0_i32_0 = arith.constant 0 : i32
    %c0_i32_1 = arith.constant 0 : i32
    return %arg0, %c0_i32, %c0_i32_0 : i32, i32, i32
  }
}

module attributes {stable_mosaic.version = 11 : i64} {
  func.func @_mm_stats_kernel(%arg0: i32, %arg1: memref<128x128xbf16, #tpu.memory_space<vmem>>, %arg2: memref<128x128xbf16, #tpu.memory_space<vmem>>, %arg3: memref<128x128xbf16, #tpu.memory_space<vmem>>, %arg4: memref<1x1x128xf32, #tpu.memory_space<vmem>>, %arg5: memref<1x1x128xf32, #tpu.memory_space<vmem>>) attributes {dimension_semantics = [#tpu.dimension_semantics<parallel>], iteration_bounds = array<i64: 1>, scalar_prefetch = 0 : i64, scratch_operands = 0 : i64, tpu.core_type = #tpu.core_type<tc>, window_params = [{transform_indices = @transform_0, window_bounds = array<i64: 128, 128>}, {pipeline_mode = #tpu.pipeline_mode<synchronous>, transform_indices = @transform_1, window_bounds = array<i64: 128, 128>}, {transform_indices = @transform_2, window_bounds = array<i64: 128, 128>}, {transform_indices = @transform_3, window_bounds = array<i64: 1, 1, 128>}, {transform_indices = @transform_4, window_bounds = array<i64: 1, 1, 128>}]} {
    %c0 = arith.constant 0 : index
    %c0_0 = arith.constant 0 : index
    %0 = vector.load %arg1[%c0, %c0_0] : memref<128x128xbf16, #tpu.memory_space<vmem>>, vector<128x128xbf16>
    %c0_1 = arith.constant 0 : index
    %c0_2 = arith.constant 0 : index
    %1 = vector.load %arg2[%c0_1, %c0_2] : memref<128x128xbf16, #tpu.memory_space<vmem>>, vector<128x128xbf16>
    %cst = arith.constant dense<0.000000e+00> : vector<128x128xf32>
    %2 = tpu.matmul %0, %1, %cst {dimension_numbers = #tpu.dot_dimension_numbers<[1], [0], [0], [1], [0, 0, 1, 1], [], []>} : vector<128x128xbf16>, vector<128x128xbf16>, vector<128x128xf32> -> vector<128x128xf32>
    %3 = arith.truncf %2 : vector<128x128xf32> to vector<128x128xbf16>
    %c0_3 = arith.constant 0 : index
    %c0_4 = arith.constant 0 : index
    %4 = vector.load %arg3[%c0_3, %c0_4] : memref<128x128xbf16, #tpu.memory_space<vmem>>, vector<128x128xbf16>
    tpu.vector_store %arg3[%c0_3, %c0_4], %3 {strides = array<i32>} : memref<128x128xbf16, #tpu.memory_space<vmem>>, vector<128x128xbf16>,
    %cst_5 = arith.constant dense<0.000000e+00> : vector<128xf32>
    %5 = vector.multi_reduction <add>, %2, %cst_5 [0] : vector<128x128xf32> to vector<128xf32>
    %6 = vector.shape_cast %5 : vector<128xf32> to vector<1x128xf32>
    %c0_6 = arith.constant 0 : index
    %c0_7 = arith.constant 0 : index
    %c0_8 = arith.constant 0 : index
    %7 = vector.load %arg4[%c0_6, %c0_7, %c0_8] : memref<1x1x128xf32, #tpu.memory_space<vmem>>, vector<1x1x128xf32>
    %8 = vector.shape_cast %7 : vector<1x1x128xf32> to vector<1x128xf32>
    %9 = vector.shape_cast %6 : vector<1x128xf32> to vector<1x1x128xf32>
    tpu.vector_store %arg4[%c0_6, %c0_7, %c0_8], %9 {strides = array<i32>} : memref<1x1x128xf32, #tpu.memory_space<vmem>>, vector<1x1x128xf32>,
    %10 = arith.mulf %2, %2 : vector<128x128xf32>
    %cst_9 = arith.constant dense<0.000000e+00> : vector<128xf32>
    %11 = vector.multi_reduction <add>, %10, %cst_9 [0] : vector<128x128xf32> to vector<128xf32>
    %12 = vector.shape_cast %11 : vector<128xf32> to vector<1x128xf32>
    %c0_10 = arith.constant 0 : index
    %c0_11 = arith.constant 0 : index
    %c0_12 = arith.constant 0 : index
    %13 = vector.load %arg5[%c0_10, %c0_11, %c0_12] : memref<1x1x128xf32, #tpu.memory_space<vmem>>, vector<1x1x128xf32>
    %14 = vector.shape_cast %13 : vector<1x1x128xf32> to vector<1x128xf32>
    %15 = vector.shape_cast %12 : vector<1x128xf32> to vector<1x1x128xf32>
    tpu.vector_store %arg5[%c0_10, %c0_11, %c0_12], %15 {strides = array<i32>} : memref<1x1x128xf32, #tpu.memory_space<vmem>>, vector<1x1x128xf32>,
    return
  }
  func.func @transform_0(%arg0: i32) -> (i32, i32) {
    %c0_i32 = arith.constant 0 : i32
    %c0_i32_0 = arith.constant 0 : i32
    return %arg0, %c0_i32 : i32, i32
  }
  func.func @transform_1(%arg0: i32) -> (i32, i32) {
    %c0_i32 = arith.constant 0 : i32
    %c0_i32_0 = arith.constant 0 : i32
    %c0_i32_1 = arith.constant 0 : i32
    return %c0_i32, %c0_i32_0 : i32, i32
  }
  func.func @transform_2(%arg0: i32) -> (i32, i32) {
    %c0_i32 = arith.constant 0 : i32
    %c0_i32_0 = arith.constant 0 : i32
    return %arg0, %c0_i32 : i32, i32
  }
  func.func @transform_3(%arg0: i32) -> (i32, i32, i32) {
    %c0_i32 = arith.constant 0 : i32
    %c0_i32_0 = arith.constant 0 : i32
    %c0_i32_1 = arith.constant 0 : i32
    return %arg0, %c0_i32, %c0_i32_0 : i32, i32, i32
  }
  func.func @transform_4(%arg0: i32) -> (i32, i32, i32) {
    %c0_i32 = arith.constant 0 : i32
    %c0_i32_0 = arith.constant 0 : i32
    %c0_i32_1 = arith.constant 0 : i32
    return %arg0, %c0_i32, %c0_i32_0 : i32, i32, i32
  }
}

module attributes {stable_mosaic.version = 11 : i64} {
  func.func @_dual_bn_add_relu_kernel(%arg0: i32, %arg1: memref<128x128xbf16, #tpu.memory_space<vmem>>, %arg2: memref<128x128xbf16, #tpu.memory_space<vmem>>, %arg3: memref<1x128xf32, #tpu.memory_space<vmem>>, %arg4: memref<1x128xf32, #tpu.memory_space<vmem>>, %arg5: memref<1x128xf32, #tpu.memory_space<vmem>>, %arg6: memref<1x128xf32, #tpu.memory_space<vmem>>, %arg7: memref<128x128xbf16, #tpu.memory_space<vmem>>) attributes {dimension_semantics = [#tpu.dimension_semantics<parallel>], iteration_bounds = array<i64: 1>, scalar_prefetch = 0 : i64, scratch_operands = 0 : i64, tpu.core_type = #tpu.core_type<tc>, window_params = [{transform_indices = @transform_0, window_bounds = array<i64: 128, 128>}, {transform_indices = @transform_1, window_bounds = array<i64: 128, 128>}, {pipeline_mode = #tpu.pipeline_mode<synchronous>, transform_indices = @transform_2, window_bounds = array<i64: 1, 128>}, {pipeline_mode = #tpu.pipeline_mode<synchronous>, transform_indices = @transform_3, window_bounds = array<i64: 1, 128>}, {pipeline_mode = #tpu.pipeline_mode<synchronous>, transform_indices = @transform_4, window_bounds = array<i64: 1, 128>}, {pipeline_mode = #tpu.pipeline_mode<synchronous>, transform_indices = @transform_5, window_bounds = array<i64: 1, 128>}, {transform_indices = @transform_6, window_bounds = array<i64: 128, 128>}]} {
    %c0 = arith.constant 0 : index
    %c0_0 = arith.constant 0 : index
    %0 = vector.load %arg1[%c0, %c0_0] : memref<128x128xbf16, #tpu.memory_space<vmem>>, vector<128x128xbf16>
    %1 = arith.extf %0 : vector<128x128xbf16> to vector<128x128xf32>
    %c0_1 = arith.constant 0 : index
    %c0_2 = arith.constant 0 : index
    %2 = vector.load %arg3[%c0_1, %c0_2] : memref<1x128xf32, #tpu.memory_space<vmem>>, vector<1x128xf32>
    %3 = vector.broadcast %2 : vector<1x128xf32> to vector<128x128xf32>
    %4 = arith.mulf %1, %3 : vector<128x128xf32>
    %c0_3 = arith.constant 0 : index
    %c0_4 = arith.constant 0 : index
    %5 = vector.load %arg4[%c0_3, %c0_4] : memref<1x128xf32, #tpu.memory_space<vmem>>, vector<1x128xf32>
    %6 = vector.broadcast %5 : vector<1x128xf32> to vector<128x128xf32>
    %7 = arith.addf %4, %6 : vector<128x128xf32>
    %c0_5 = arith.constant 0 : index
    %c0_6 = arith.constant 0 : index
    %8 = vector.load %arg2[%c0_5, %c0_6] : memref<128x128xbf16, #tpu.memory_space<vmem>>, vector<128x128xbf16>
    %9 = arith.extf %8 : vector<128x128xbf16> to vector<128x128xf32>
    %c0_7 = arith.constant 0 : index
    %c0_8 = arith.constant 0 : index
    %10 = vector.load %arg5[%c0_7, %c0_8] : memref<1x128xf32, #tpu.memory_space<vmem>>, vector<1x128xf32>
    %11 = vector.broadcast %10 : vector<1x128xf32> to vector<128x128xf32>
    %12 = arith.mulf %9, %11 : vector<128x128xf32>
    %c0_9 = arith.constant 0 : index
    %c0_10 = arith.constant 0 : index
    %13 = vector.load %arg6[%c0_9, %c0_10] : memref<1x128xf32, #tpu.memory_space<vmem>>, vector<1x128xf32>
    %14 = vector.broadcast %13 : vector<1x128xf32> to vector<128x128xf32>
    %15 = arith.addf %12, %14 : vector<128x128xf32>
    %16 = arith.addf %7, %15 : vector<128x128xf32>
    %cst = arith.constant 0.000000e+00 : f32
    %17 = vector.broadcast %cst : f32 to vector<128x128xf32>
    %18 = arith.maximumf %16, %17 : vector<128x128xf32>
    %19 = arith.truncf %18 : vector<128x128xf32> to vector<128x128xbf16>
    %c0_11 = arith.constant 0 : index
    %c0_12 = arith.constant 0 : index
    %20 = vector.load %arg7[%c0_11, %c0_12] : memref<128x128xbf16, #tpu.memory_space<vmem>>, vector<128x128xbf16>
    tpu.vector_store %arg7[%c0_11, %c0_12], %19 {strides = array<i32>} : memref<128x128xbf16, #tpu.memory_space<vmem>>, vector<128x128xbf16>,
    return
  }
  func.func @transform_0(%arg0: i32) -> (i32, i32) {
    %c0_i32 = arith.constant 0 : i32
    %c0_i32_0 = arith.constant 0 : i32
    return %arg0, %c0_i32 : i32, i32
  }
  func.func @transform_1(%arg0: i32) -> (i32, i32) {
    %c0_i32 = arith.constant 0 : i32
    %c0_i32_0 = arith.constant 0 : i32
    return %arg0, %c0_i32 : i32, i32
  }
  func.func @transform_2(%arg0: i32) -> (i32, i32) {
    %c0_i32 = arith.constant 0 : i32
    %c0_i32_0 = arith.constant 0 : i32
    %c0_i32_1 = arith.constant 0 : i32
    return %c0_i32, %c0_i32_0 : i32, i32
  }
  func.func @transform_3(%arg0: i32) -> (i32, i32) {
    %c0_i32 = arith.constant 0 : i32
    %c0_i32_0 = arith.constant 0 : i32
    %c0_i32_1 = arith.constant 0 : i32
    return %c0_i32, %c0_i32_0 : i32, i32
  }
  func.func @transform_4(%arg0: i32) -> (i32, i32) {
    %c0_i32 = arith.constant 0 : i32
    %c0_i32_0 = arith.constant 0 : i32
    %c0_i32_1 = arith.constant 0 : i32
    return %c0_i32, %c0_i32_0 : i32, i32
  }
  func.func @transform_5(%arg0: i32) -> (i32, i32) {
    %c0_i32 = arith.constant 0 : i32
    %c0_i32_0 = arith.constant 0 : i32
    %c0_i32_1 = arith.constant 0 : i32
    return %c0_i32, %c0_i32_0 : i32, i32
  }
  func.func @transform_6(%arg0: i32) -> (i32, i32) {
    %c0_i32 = arith.constant 0 : i32
    %c0_i32_0 = arith.constant 0 : i32
    return %arg0, %c0_i32 : i32, i32
  }
}

</mosaic_0001>

<llo_original>
// kernel: bottleneck_forward.6
$region0: #{bottleneck_forward.6}
  #allocation0 [shape = 'u32[]', space=smem, size = 0x4, offset = 0x4, fixed_abs, tag = 'smem constant byte address 0x4 - core index']
  #allocation1 [shape = 'u32[144,128]{1,0:T(1,128)}', space=vmem, size = 0x12000, scoped, tag = 'internal scratch']
  %s0 = inlined_call_operand.vmem [shape: bf16[512,128], index: 0, kind: input, shape index: {}]
  %s1 = inlined_call_operand.vmem [shape: bf16[128,128], index: 1, kind: input, shape index: {}]
  %s2 = inlined_call_operand.vmem [shape: bf16[512,128], index: 2, kind: output, shape index: {0}]
  %s3 = inlined_call_operand.vmem [shape: f32[2,1,128], index: 3, kind: output, shape index: {1}]
  %s4 = inlined_call_operand.vmem [shape: f32[2,1,128], index: 4, kind: output, shape index: {2}]
  %5 = xla_tuple %s2, %s3, %s4
  %s6 = sld [smem:[#allocation0]]
  $region57: #{bottleneck_forward.6} parent=0
    _
  %s8 = ssub.s32 1, %s6
  %s9 = scalar_select 0, %s8, %s6
  loop: start=0, step=1, limit=4
  $region2: #{bottleneck_forward.6} parent=0 // loop_pre_header
    _
  $region3: #{bottleneck_forward.6} parent=0 // loop_header
    %s11 = sphi 0, %s15
    %p12 = scmp.ge.s32.totalorder %s11, 4
    %s21 = sphi 0, %s23
    %s24 = sphi 0, %s21
    %s25 = sphi 0, %s24
    %s41 = sphi 0, %s25
    %s45 = sphi 0, %s45
    %s47 = sphi 0, %s45
    %s48 = sphi 0, %s47
    %s62 = sphi 0, %s48
    %s68 = sphi 0, %s70
    %s71 = sphi 0, %s68
    %s72 = sphi 0, %s71
    %s88 = sphi 0, %s72
    %s94 = sphi 0, %s96
    %s97 = sphi 0, %s94
    %s98 = sphi 0, %s97
    %s114 = sphi 0, %s98
    %s120 = sphi 0, %s122
    %s123 = sphi 0, %s120
    %s124 = sphi 0, %s123
    %s140 = sphi 0, %s124
  $region4: #{bottleneck_forward.6} parent=0 // loop_header_branch
    %14 = sbr.rel (%p12) target = $region8
  $region5: #{bottleneck_forward.6} parent=0 // loop_body
    %s16 = ssub.s32 %s11, 1
    %s17 = ssub.s32 %s11, 2
    %s18 = sadd.s32 %s11, 1
    %s19 = ssub.s32 %s11, %s18
    %p20 = scmp.eq.s32.totalorder %s19, 0
    %s22 = sadd.s32 %s21, 1
    %s23 = scalar_select %p20, %s21, %s22
    %p26 = pneg %p20
    %p27 = scmp.eq.s32.totalorder %s11, 1
    %p28 = por %p26, %p27
    %p29 = scmp.ne.s32.totalorder %s21, %s24
    %p30 = scmp.eq.s32.totalorder %s11, 0
    %p31 = por %p29, %p30
    %p32 = scmp.ne.s32.totalorder %s21, %s24
    %p33 = scmp.eq.s32.totalorder %s16, 1
    %p34 = por %p32, %p33
    %p35 = scmp.ne.s32.totalorder %s24, %s25
    %p36 = scmp.eq.s32.totalorder %s16, 0
    %p37 = por %p35, %p36
    %p38 = scmp.ne.s32.totalorder %s24, %s25
    %p39 = scmp.eq.s32.totalorder %s17, 1
    %p40 = por %p38, %p39
    %p42 = scmp.ne.s32.totalorder %s25, %s41
    %p43 = scmp.eq.s32.totalorder %s17, 0
    %p44 = por %p42, %p43
    %s46 = sadd.s32 %s45, 1
    %p49 = scmp.eq.s32.totalorder %s11, 1
    %p50 = scmp.ne.s32.totalorder %s45, %s47
    %p51 = scmp.eq.s32.totalorder %s11, 0
    %p52 = por %p50, %p51
    %p53 = scmp.ne.s32.totalorder %s45, %s47
    %p54 = scmp.eq.s32.totalorder %s16, 1
    %p55 = por %p53, %p54
    %p56 = scmp.ne.s32.totalorder %s47, %s48
    %p57 = scmp.eq.s32.totalorder %s16, 0
    %p58 = por %p56, %p57
    %p59 = scmp.ne.s32.totalorder %s47, %s48
    %p60 = scmp.eq.s32.totalorder %s17, 1
    %p61 = por %p59, %p60
    %p63 = scmp.ne.s32.totalorder %s48, %s62
    %p64 = scmp.eq.s32.totalorder %s17, 0
    %p65 = por %p63, %p64
    %s66 = ssub.s32 %s11, %s18
    %p67 = scmp.eq.s32.totalorder %s66, 0
    %s69 = sadd.s32 %s68, 1
    %s70 = scalar_select %p67, %s68, %s69
    %p73 = pneg %p67
    %p74 = scmp.eq.s32.totalorder %s11, 1
    %p75 = por %p73, %p74
    %p76 = scmp.ne.s32.totalorder %s68, %s71
    %p77 = scmp.eq.s32.totalorder %s11, 0
    %p78 = por %p76, %p77
    %p79 = scmp.ne.s32.totalorder %s68, %s71
    %p80 = scmp.eq.s32.totalorder %s16, 1
    %p81 = por %p79, %p80
    %p82 = scmp.ne.s32.totalorder %s71, %s72
    %p83 = scmp.eq.s32.totalorder %s16, 0
    %p84 = por %p82, %p83
    %p85 = scmp.ne.s32.totalorder %s71, %s72
    %p86 = scmp.eq.s32.totalorder %s17, 1
    %p87 = por %p85, %p86
    %p89 = scmp.ne.s32.totalorder %s72, %s88
    %p90 = scmp.eq.s32.totalorder %s17, 0
    %p91 = por %p89, %p90
    %s92 = ssub.s32 %s11, %s18
    %p93 = scmp.eq.s32.totalorder %s92, 0
    %s95 = sadd.s32 %s94, 1
    %s96 = scalar_select %p93, %s94, %s95
    %p99 = pneg %p93
    %p100 = scmp.eq.s32.totalorder %s11, 1
    %p101 = por %p99, %p100
    %p102 = scmp.ne.s32.totalorder %s94, %s97
    %p103 = scmp.eq.s32.totalorder %s11, 0
    %p104 = por %p102, %p103
    %p105 = scmp.ne.s32.totalorder %s94, %s97
    %p106 = scmp.eq.s32.totalorder %s16, 1
    %p107 = por %p105, %p106
    %p108 = scmp.ne.s32.totalorder %s97, %s98
    %p109 = scmp.eq.s32.totalorder %s16, 0
    %p110 = por %p108, %p109
    %p111 = scmp.ne.s32.totalorder %s97, %s98
    %p112 = scmp.eq.s32.totalorder %s17, 1
    %p113 = por %p111, %p112
    %p115 = scmp.ne.s32.totalorder %s98, %s114
    %p116 = scmp.eq.s32.totalorder %s17, 0
    %p117 = por %p115, %p116
    %s118 = ssub.s32 %s11, %s18
    %p119 = scmp.eq.s32.totalorder %s118, 0
    %s121 = sadd.s32 %s120, 1
    %s122 = scalar_select %p119, %s120, %s121
    %p125 = pneg %p119
    %p126 = scmp.eq.s32.totalorder %s11, 1
    %p127 = por %p125, %p126
    %p128 = scmp.ne.s32.totalorder %s120, %s123
    %p129 = scmp.eq.s32.totalorder %s11, 0
    %p130 = por %p128, %p129
    %p131 = scmp.ne.s32.totalorder %s120, %s123
    %p132 = scmp.eq.s32.totalorder %s16, 1
    %p133 = por %p131, %p132
    %p134 = scmp.ne.s32.totalorder %s123, %s124
    %p135 = scmp.eq.s32.totalorder %s16, 0
    %p136 = por %p134, %p135
    %p137 = scmp.ne.s32.totalorder %s123, %s124
    %p138 = scmp.eq.s32.totalorder %s17, 1
    %p139 = por %p137, %p138
    %p141 = scmp.ne.s32.totalorder %s124, %s140
    %p142 = scmp.eq.s32.totalorder %s17, 0
    %p143 = por %p141, %p142
    %p144 = scmp.le.s32.totalorder 1, %s11
    %p145 = scmp.lt.s32.totalorder %s11, 3
    %p146 = pnand %p144, %p145
    %p147 = pneg %p146
    // Predicated region
    $region9: #{bottleneck_forward.6} parent=5 // pred_check
      _
    $region10: #{bottleneck_forward.6} parent=5 // pred_check_branch
      %149 = sbr.rel (%p146) target = $region12
    $region11: #{bottleneck_forward.6} parent=5 // pred_region
      %s150 = ssub.s32 %s11, 1
      // Predicated region
      $region13: #{bottleneck_forward.6} parent=11 // pred_check
        %p151 = pneg %p58
      $region14: #{bottleneck_forward.6} parent=11 // pred_check_branch
        %153 = sbr.rel (%p151) target = $region16
      $region15: #{bottleneck_forward.6} parent=11 // pred_region
        _
      $region16: #{bottleneck_forward.6} parent=11 // pred_fallthru
        _
    $region12: #{bottleneck_forward.6} parent=5 // pred_fallthru
      _
    %p154 = scmp.lt.s32.totalorder %s11, 2
    // Predicated region
    $region17: #{bottleneck_forward.6} parent=5 // pred_check
      %p155 = pneg %p154
    $region18: #{bottleneck_forward.6} parent=5 // pred_check_branch
      %157 = sbr.rel (%p155) target = $region20
    $region19: #{bottleneck_forward.6} parent=5 // pred_region
      // Predicated region
      $region21: #{bottleneck_forward.6} parent=19 // pred_check
        %p158 = pneg %p31
      $region22: #{bottleneck_forward.6} parent=19 // pred_check_branch
        %160 = sbr.rel (%p158) target = $region24
      $region23: #{bottleneck_forward.6} parent=19 // pred_region
        %s161 = smul.u32 32, %s11
        %p162 = scmp.lt.s32.totalorder %s161, 63
        %s163 = scalar_select %p162, %s161, 63
        %s164 = smul.addr %s163, 4
        %s165 = scalar_lea.vmem %s0, %s164
        %s166 = smul.u32 32, %s11
      $region24: #{bottleneck_forward.6} parent=19 // pred_fallthru
        _
    $region20: #{bottleneck_forward.6} parent=5 // pred_fallthru
      _
    %p167 = scmp.le.s32.totalorder 1, %s11
    %p168 = scmp.lt.s32.totalorder %s11, 3
    %p169 = pnand %p167, %p168
    %p170 = pneg %p169
    // Predicated region
    $region25: #{bottleneck_forward.6} parent=5 // pred_check
      _
    $region26: #{bottleneck_forward.6} parent=5 // pred_check_branch
      %172 = sbr.rel (%p169) target = $region28
    $region27: #{bottleneck_forward.6} parent=5 // pred_region
      %s173 = ssub.s32 %s11, 1
      %s174 = smul.u32 32, %s16
      %p175 = scmp.lt.s32.totalorder %s174, 63
      %s176 = scalar_select %p175, %s174, 63
      %s177 = smul.addr %s176, 4
      %s178 = scalar_lea.vmem %s0, %s177
      %p179 = pneg %p37
      %p180 = pneg %p34
      %p181 = pneg %p58
      %p182 = pneg %p55
      %p183 = pneg %p84
      %p184 = pneg %p81
      %s185 = smul.u32 32, %s16
      %p186 = scmp.lt.s32.totalorder %s185, 63
      %s187 = scalar_select %p186, %s185, 63
      %s188 = smul.addr %s187, 4
      %s189 = scalar_lea.vmem %s2, %s188
      %p190 = pneg %p110
      %p191 = pneg %p107
      %p192 = scmp.lt.s32.totalorder %s16, 1
      %s193 = scalar_select %p192, %s16, 1
      %s194 = scalar_lea.vmem %s3, %s193
      %p195 = pneg %p136
      %p196 = pneg %p133
      %p197 = scmp.lt.s32.totalorder %s16, 1
      %s198 = scalar_select %p197, %s16, 1
      %s199 = scalar_lea.vmem %s4, %s198
      %s200 = smul.u32 32, %s16
      %p201 = scmp.lt.s32.totalorder %s200, 63
      %s202 = scalar_select %p201, %s200, 63
      %s203 = smul.addr %s202, 4
      %s204 = scalar_lea.vmem %s0, %s203
      %s205 = smul.u32 32, %s16
      %s206 = smul.u32 32, %s16
      %p207 = scmp.lt.s32.totalorder %s206, 63
      %s208 = scalar_select %p207, %s206, 63
      %s209 = smul.addr %s208, 4
      %s210 = scalar_lea.vmem %s2, %s209
      %s211 = smul.u32 32, %s16
      %p212 = scmp.lt.s32.totalorder %s16, 1
      %s213 = scalar_select %p212, %s16, 1
      %s214 = scalar_lea.vmem %s3, %s213
      %p215 = scmp.lt.s32.totalorder %s16, 1
      %s216 = scalar_select %p215, %s16, 1
      %s217 = scalar_lea.vmem %s4, %s216
      %v219 = vld [vmem:[%s204] sm:$0xf]
      %v220 = vld [vmem:[%s204 + $0x4] sm:$0xf]
      %v221 = vld [vmem:[%s204 + $0x8] sm:$0xf]
      %v222 = vld [vmem:[%s204 + $0xc] sm:$0xf]
      %v223 = vld [vmem:[%s204 + $0x10] sm:$0xf]
      %v224 = vld [vmem:[%s204 + $0x14] sm:$0xf]
      %v225 = vld [vmem:[%s204 + $0x18] sm:$0xf]
      %v226 = vld [vmem:[%s204 + $0x1c] sm:$0xf]
      %v227 = vld [vmem:[%s204 + $0x20] sm:$0xf]
      %v228 = vld [vmem:[%s204 + $0x24] sm:$0xf]
      %v229 = vld [vmem:[%s204 + $0x28] sm:$0xf]
      %v230 = vld [vmem:[%s204 + $0x2c] sm:$0xf]
      %v231 = vld [vmem:[%s204 + $0x30] sm:$0xf]
      %v232 = vld [vmem:[%s204 + $0x34] sm:$0xf]
      %v233 = vld [vmem:[%s204 + $0x38] sm:$0xf]
      %v234 = vld [vmem:[%s204 + $0x3c] sm:$0xf]
      %v235 = vld [vmem:[%s204 + $0x40] sm:$0xf]
      %v236 = vld [vmem:[%s204 + $0x44] sm:$0xf]
      %v237 = vld [vmem:[%s204 + $0x48] sm:$0xf]
      %v238 = vld [vmem:[%s204 + $0x4c] sm:$0xf]
      %v239 = vld [vmem:[%s204 + $0x50] sm:$0xf]
      %v240 = vld [vmem:[%s204 + $0x54] sm:$0xf]
      %v241 = vld [vmem:[%s204 + $0x58] sm:$0xf]
      %v242 = vld [vmem:[%s204 + $0x5c] sm:$0xf]
      %v243 = vld [vmem:[%s204 + $0x60] sm:$0xf]
      %v244 = vld [vmem:[%s204 + $0x64] sm:$0xf]
      %v245 = vld [vmem:[%s204 + $0x68] sm:$0xf]
      %v246 = vld [vmem:[%s204 + $0x6c] sm:$0xf]
      %v247 = vld [vmem:[%s204 + $0x70] sm:$0xf]
      %v248 = vld [vmem:[%s204 + $0x74] sm:$0xf]
      %v249 = vld [vmem:[%s204 + $0x78] sm:$0xf]
      %v250 = vld [vmem:[%s204 + $0x7c] sm:$0xf]
      %v251 = vld [vmem:[%s1] sm:$0xf]
      %v252 = vld [vmem:[%s1 + $0x4] sm:$0xf]
      %v253 = vld [vmem:[%s1 + $0x8] sm:$0xf]
      %v254 = vld [vmem:[%s1 + $0xc] sm:$0xf]
      %v255 = vld [vmem:[%s1 + $0x10] sm:$0xf]
      %v256 = vld [vmem:[%s1 + $0x14] sm:$0xf]
      %v257 = vld [vmem:[%s1 + $0x18] sm:$0xf]
      %v258 = vld [vmem:[%s1 + $0x1c] sm:$0xf]
      %v259 = vld [vmem:[%s1 + $0x20] sm:$0xf]
      %v260 = vld [vmem:[%s1 + $0x24] sm:$0xf]
      %v261 = vld [vmem:[%s1 + $0x28] sm:$0xf]
      %v262 = vld [vmem:[%s1 + $0x2c] sm:$0xf]
      %v263 = vld [vmem:[%s1 + $0x30] sm:$0xf]
      %v264 = vld [vmem:[%s1 + $0x34] sm:$0xf]
      %v265 = vld [vmem:[%s1 + $0x38] sm:$0xf]
      %v266 = vld [vmem:[%s1 + $0x3c] sm:$0xf]
      %v299 = vunpack.c.l.b16 %v219
      %v300 = vunpack.c.l.b16 %v220
      %v301 = vunpack.c.l.b16 %v221
      %v302 = vunpack.c.l.b16 %v222
      %v303 = vunpack.c.l.b16 %v223
      %v304 = vunpack.c.l.b16 %v224
      %v305 = vunpack.c.l.b16 %v225
      %v306 = vunpack.c.l.b16 %v226
      %v307 = vunpack.c.l.b16 %v227
      %v308 = vunpack.c.l.b16 %v228
      %v309 = vunpack.c.l.b16 %v229
      %v310 = vunpack.c.l.b16 %v230
      %v311 = vunpack.c.l.b16 %v231
      %v312 = vunpack.c.l.b16 %v232
      %v313 = vunpack.c.l.b16 %v233
      %v314 = vunpack.c.l.b16 %v234
      %v315 = vunpack.c.l.b16 %v235
      %v316 = vunpack.c.l.b16 %v236
      %v317 = vunpack.c.l.b16 %v237
      %v318 = vunpack.c.l.b16 %v238
      %v319 = vunpack.c.l.b16 %v239
      %v320 = vunpack.c.l.b16 %v240
      %v321 = vunpack.c.l.b16 %v241
      %v322 = vunpack.c.l.b16 %v242
      %v323 = vunpack.c.l.b16 %v243
      %v324 = vunpack.c.l.b16 %v244
      %v325 = vunpack.c.l.b16 %v245
      %v326 = vunpack.c.l.b16 %v246
      %v327 = vunpack.c.l.b16 %v247
      %v328 = vunpack.c.l.b16 %v248
      %v329 = vunpack.c.l.b16 %v249
      %v330 = vunpack.c.l.b16 %v250
      %v331 = vpack.c.b16 %v300, %v299
      %v332 = vpack.c.b16 %v302, %v301
      %v333 = vpack.c.b16 %v304, %v303
      %v334 = vpack.c.b16 %v306, %v305
      %v335 = vpack.c.b16 %v308, %v307
      %v336 = vpack.c.b16 %v310, %v309
      %v337 = vpack.c.b16 %v312, %v311
      %v338 = vpack.c.b16 %v314, %v313
      %v339 = vpack.c.b16 %v316, %v315
      %v340 = vpack.c.b16 %v318, %v317
      %v341 = vpack.c.b16 %v320, %v319
      %v342 = vpack.c.b16 %v322, %v321
      %v343 = vpack.c.b16 %v324, %v323
      %v344 = vpack.c.b16 %v326, %v325
      %v345 = vpack.c.b16 %v328, %v327
      %v346 = vpack.c.b16 %v330, %v329
      %v379 = vunpack.c.l.b16 %v251
      %v380 = vunpack.c.l.b16 %v252
      %v381 = vunpack.c.l.b16 %v253
      %v382 = vunpack.c.l.b16 %v254
      %v383 = vunpack.c.l.b16 %v255
      %v384 = vunpack.c.l.b16 %v256
      %v385 = vunpack.c.l.b16 %v257
      %v386 = vunpack.c.l.b16 %v258
      %v387 = vunpack.c.l.b16 %v259
      %v388 = vunpack.c.l.b16 %v260
      %v389 = vunpack.c.l.b16 %v261
      %v390 = vunpack.c.l.b16 %v262
      %v391 = vunpack.c.l.b16 %v263
      %v392 = vunpack.c.l.b16 %v264
      %v393 = vunpack.c.l.b16 %v265
      %v394 = vunpack.c.l.b16 %v266
      %v395 = vpack.c.b16 %v380, %v379
      %v396 = vpack.c.b16 %v382, %v381
      %v397 = vpack.c.b16 %v384, %v383
      %v398 = vpack.c.b16 %v386, %v385
      %v399 = vpack.c.b16 %v388, %v387
      %v400 = vpack.c.b16 %v390, %v389
      %v401 = vpack.c.b16 %v392, %v391
      %v402 = vpack.c.b16 %v394, %v393
      %411 = vmatprep.subr.bf16.mxu0 0
      %412 = vmatpush1.bf16.msra.mxu0 %v395
      %413 = vmatprep.subr.bf16.mxu0 0
      %414 = vmatpush1.bf16.msra.mxu0 %v396
      %415 = vmatprep.subr.bf16.mxu0 0
      %416 = vmatpush1.bf16.msra.mxu0 %v397
      %417 = vmatprep.subr.bf16.mxu0 0
      %418 = vmatpush1.bf16.msra.mxu0 %v398
      %419 = vmatprep.subr.bf16.mxu0 0
      %420 = vmatpush1.bf16.msra.mxu0 %v399
      %421 = vmatprep.subr.bf16.mxu0 0
      %422 = vmatpush1.bf16.msra.mxu0 %v400
      %423 = vmatprep.subr.bf16.mxu0 0
      %424 = vmatpush1.bf16.msra.mxu0 %v401
      %425 = vmatprep.subr.bf16.mxu0 0
      %426 = vmatpush1.bf16.msra.mxu0 %v402
      %427 = vmatprep.subr.bf16.mxu0 0
      %428 = vmatpush1.bf16.msra.mxu0 0
      %429 = vmatprep.subr.bf16.mxu0 0
      %430 = vmatpush1.bf16.msra.mxu0 0
      %431 = vmatprep.subr.bf16.mxu0 0
      %432 = vmatpush1.bf16.msra.mxu0 0
      %433 = vmatprep.subr.bf16.mxu0 0
      %434 = vmatpush1.bf16.msra.mxu0 0
      %435 = vmatprep.subr.bf16.mxu0 0
      %436 = vmatpush1.bf16.msra.mxu0 0
      %437 = vmatprep.subr.bf16.mxu0 0
      %438 = vmatpush1.bf16.msra.mxu0 0
      %439 = vmatprep.subr.bf16.mxu0 0
      %440 = vmatpush1.bf16.msra.mxu0 0
      %441 = vmatprep.subr.bf16.mxu0 0
      %442 = vmatpush1.bf16.msra.mxu0 0
      %443 = vmatprep.mubr.bf16.mxu0 0
      %444 = vmatmul.mubr.bf16.gmra.mrb[0].mxu0 %v331
      %v445 = vpop.f32.mrb[0].mxu0
      %v446 = vadd.f32 0.0, %v445
      %v447 = vpop.f32.mrb[0].mxu0
      %v448 = vpop.f32.mrb[0].mxu0
      %v449 = vadd.f32 0.0, %v448
      %v450 = vpop.f32.mrb[0].mxu0
      %451 = vmatprep.mubr.bf16.mxu0 0
      %452 = vmatmul.mubr.bf16.gmra.mrb[0].mxu0 %v332
      %v453 = vpop.f32.mrb[0].mxu0
      %v454 = vadd.f32 0.0, %v453
      %v455 = vpop.f32.mrb[0].mxu0
      %v456 = vpop.f32.mrb[0].mxu0
      %v457 = vadd.f32 0.0, %v456
      %v458 = vpop.f32.mrb[0].mxu0
      %459 = vmatprep.mubr.bf16.mxu0 0
      %460 = vmatmul.mubr.bf16.gmra.mrb[0].mxu0 %v333
      %v461 = vpop.f32.mrb[0].mxu0
      %v462 = vadd.f32 0.0, %v461
      %v463 = vpop.f32.mrb[0].mxu0
      %v464 = vpop.f32.mrb[0].mxu0
      %v465 = vadd.f32 0.0, %v464
      %v466 = vpop.f32.mrb[0].mxu0
      %467 = vmatprep.mubr.bf16.mxu0 0
      %468 = vmatmul.mubr.bf16.gmra.mrb[0].mxu0 %v334
      %v469 = vpop.f32.mrb[0].mxu0
      %v470 = vadd.f32 0.0, %v469
      %v471 = vpop.f32.mrb[0].mxu0
      %v472 = vpop.f32.mrb[0].mxu0
      %v473 = vadd.f32 0.0, %v472
      %v474 = vpop.f32.mrb[0].mxu0
      %475 = vmatprep.mubr.bf16.mxu0 0
      %476 = vmatmul.mubr.bf16.gmra.mrb[0].mxu0 %v335
      %v477 = vpop.f32.mrb[0].mxu0
      %v478 = vadd.f32 0.0, %v477
      %v479 = vpop.f32.mrb[0].mxu0
      %v480 = vpop.f32.mrb[0].mxu0
      %v481 = vadd.f32 0.0, %v480
      %v482 = vpop.f32.mrb[0].mxu0
      %483 = vmatprep.mubr.bf16.mxu0 0
      %484 = vmatmul.mubr.bf16.gmra.mrb[0].mxu0 %v336
      %v485 = vpop.f32.mrb[0].mxu0
      %v486 = vadd.f32 0.0, %v485
      %v487 = vpop.f32.mrb[0].mxu0
      %v488 = vpop.f32.mrb[0].mxu0
      %v489 = vadd.f32 0.0, %v488
      %v490 = vpop.f32.mrb[0].mxu0
      %491 = vmatprep.mubr.bf16.mxu0 0
      %492 = vmatmul.mubr.bf16.gmra.mrb[0].mxu0 %v337
      %v493 = vpop.f32.mrb[0].mxu0
      %v494 = vadd.f32 0.0, %v493
      %v495 = vpop.f32.mrb[0].mxu0
      %v496 = vpop.f32.mrb[0].mxu0
      %v497 = vadd.f32 0.0, %v496
      %v498 = vpop.f32.mrb[0].mxu0
      %499 = vmatprep.mubr.bf16.mxu0 0
      %500 = vmatmul.mubr.bf16.gmra.mrb[0].mxu0 %v338
      %v501 = vpop.f32.mrb[0].mxu0
      %v502 = vadd.f32 0.0, %v501
      %v503 = vpop.f32.mrb[0].mxu0
      %v504 = vpop.f32.mrb[0].mxu0
      %v505 = vadd.f32 0.0, %v504
      %v506 = vpop.f32.mrb[0].mxu0
      %507 = vmatprep.mubr.bf16.mxu0 0
      %508 = vmatmul.mubr.bf16.gmra.mrb[0].mxu0 %v339
      %v509 = vpop.f32.mrb[0].mxu0
      %v510 = vadd.f32 0.0, %v509
      %v511 = vpop.f32.mrb[0].mxu0
      %v512 = vpop.f32.mrb[0].mxu0
      %v513 = vadd.f32 0.0, %v512
      %v514 = vpop.f32.mrb[0].mxu0
      %515 = vmatprep.mubr.bf16.mxu0 0
      %516 = vmatmul.mubr.bf16.gmra.mrb[0].mxu0 %v340
      %v517 = vpop.f32.mrb[0].mxu0
      %v518 = vadd.f32 0.0, %v517
      %v519 = vpop.f32.mrb[0].mxu0
      %v520 = vpop.f32.mrb[0].mxu0
      %v521 = vadd.f32 0.0, %v520
      %v522 = vpop.f32.mrb[0].mxu0
      %523 = vmatprep.mubr.bf16.mxu0 0
      %524 = vmatmul.mubr.bf16.gmra.mrb[0].mxu0 %v341
      %v525 = vpop.f32.mrb[0].mxu0
      %v526 = vadd.f32 0.0, %v525
      %v527 = vpop.f32.mrb[0].mxu0
      %v528 = vpop.f32.mrb[0].mxu0
      %v529 = vadd.f32 0.0, %v528
      %v530 = vpop.f32.mrb[0].mxu0
      %531 = vmatprep.mubr.bf16.mxu0 0
      %532 = vmatmul.mubr.bf16.gmra.mrb[0].mxu0 %v342
      %v533 = vpop.f32.mrb[0].mxu0
      %v534 = vadd.f32 0.0, %v533
      %v535 = vpop.f32.mrb[0].mxu0
      %v536 = vpop.f32.mrb[0].mxu0
      %v537 = vadd.f32 0.0, %v536
      %v538 = vpop.f32.mrb[0].mxu0
      %539 = vmatprep.mubr.bf16.mxu0 0
      %540 = vmatmul.mubr.bf16.gmra.mrb[0].mxu0 %v343
      %v541 = vpop.f32.mrb[0].mxu0
      %v542 = vadd.f32 0.0, %v541
      %v543 = vpop.f32.mrb[0].mxu0
      %v544 = vpop.f32.mrb[0].mxu0
      %v545 = vadd.f32 0.0, %v544
      %v546 = vpop.f32.mrb[0].mxu0
      %547 = vmatprep.mubr.bf16.mxu0 0
      %548 = vmatmul.mubr.bf16.gmra.mrb[0].mxu0 %v344
      %v549 = vpop.f32.mrb[0].mxu0
      %v550 = vadd.f32 0.0, %v549
      %v551 = vpop.f32.mrb[0].mxu0
      %v552 = vpop.f32.mrb[0].mxu0
      %v553 = vadd.f32 0.0, %v552
      %v554 = vpop.f32.mrb[0].mxu0
      %555 = vmatprep.mubr.bf16.mxu0 0
      %556 = vmatmul.mubr.bf16.gmra.mrb[0].mxu0 %v345
      %v557 = vpop.f32.mrb[0].mxu0
      %v558 = vadd.f32 0.0, %v557
      %v559 = vpop.f32.mrb[0].mxu0
      %v560 = vpop.f32.mrb[0].mxu0
      %v561 = vadd.f32 0.0, %v560
      %v562 = vpop.f32.mrb[0].mxu0
      %563 = vmatprep.mubr.bf16.mxu0 0
      %564 = vmatmul.mubr.bf16.gmra.mrb[0].mxu0 %v346
      %v565 = vpop.f32.mrb[0].mxu0
      %v566 = vadd.f32 0.0, %v565
      %v567 = vpop.f32.mrb[0].mxu0
      %v568 = vpop.f32.mrb[0].mxu0
      %v569 = vadd.f32 0.0, %v568
      %v570 = vpop.f32.mrb[0].mxu0
      %571 = vdwg.mxu0
      %v572 = vpack.c.bf16 %v449, %v446
      %v573 = vpack.c.bf16 %v457, %v454
      %v574 = vpack.c.bf16 %v465, %v462
      %v575 = vpack.c.bf16 %v473, %v470
      %v576 = vpack.c.bf16 %v481, %v478
      %v577 = vpack.c.bf16 %v489, %v486
      %v578 = vpack.c.bf16 %v497, %v494
      %v579 = vpack.c.bf16 %v505, %v502
      %v580 = vpack.c.bf16 %v513, %v510
      %v581 = vpack.c.bf16 %v521, %v518
      %v582 = vpack.c.bf16 %v529, %v526
      %v583 = vpack.c.bf16 %v537, %v534
      %v584 = vpack.c.bf16 %v545, %v542
      %v585 = vpack.c.bf16 %v553, %v550
      %v586 = vpack.c.bf16 %v561, %v558
      %v587 = vpack.c.bf16 %v569, %v566
      %v604 = vunpack.c.l.b16 %v572
      %v605 = vunpack.c.h.b16 %v572
      %v606 = vunpack.c.l.b16 %v573
      %v607 = vunpack.c.h.b16 %v573
      %v608 = vunpack.c.l.b16 %v574
      %v609 = vunpack.c.h.b16 %v574
      %v610 = vunpack.c.l.b16 %v575
      %v611 = vunpack.c.h.b16 %v575
      %v612 = vunpack.c.l.b16 %v576
      %v613 = vunpack.c.h.b16 %v576
      %v614 = vunpack.c.l.b16 %v577
      %v615 = vunpack.c.h.b16 %v577
      %v616 = vunpack.c.l.b16 %v578
      %v617 = vunpack.c.h.b16 %v578
      %v618 = vunpack.c.l.b16 %v579
      %v619 = vunpack.c.h.b16 %v579
      %v620 = vunpack.c.l.b16 %v580
      %v621 = vunpack.c.h.b16 %v580
      %v622 = vunpack.c.l.b16 %v581
      %v623 = vunpack.c.h.b16 %v581
      %v624 = vunpack.c.l.b16 %v582
      %v625 = vunpack.c.h.b16 %v582
      %v626 = vunpack.c.l.b16 %v583
      %v627 = vunpack.c.h.b16 %v583
      %v628 = vunpack.c.l.b16 %v584
      %v629 = vunpack.c.h.b16 %v584
      %v630 = vunpack.c.l.b16 %v585
      %v631 = vunpack.c.h.b16 %v585
      %v632 = vunpack.c.l.b16 %v586
      %v633 = vunpack.c.h.b16 %v586
      %v634 = vunpack.c.l.b16 %v587
      %v635 = vunpack.c.h.b16 %v587
      %v636 = vpack.c.b16 %v604, %v604
      %v637 = vpack.c.b16 %v605, %v605
      %v638 = vpack.c.b16 %v606, %v606
      %v639 = vpack.c.b16 %v607, %v607
      %v640 = vpack.c.b16 %v608, %v608
      %v641 = vpack.c.b16 %v609, %v609
      %v642 = vpack.c.b16 %v610, %v610
      %v643 = vpack.c.b16 %v611, %v611
      %v644 = vpack.c.b16 %v612, %v612
      %v645 = vpack.c.b16 %v613, %v613
      %v646 = vpack.c.b16 %v614, %v614
      %v647 = vpack.c.b16 %v615, %v615
      %v648 = vpack.c.b16 %v616, %v616
      %v649 = vpack.c.b16 %v617, %v617
      %v650 = vpack.c.b16 %v618, %v618
      %v651 = vpack.c.b16 %v619, %v619
      %v652 = vpack.c.b16 %v620, %v620
      %v653 = vpack.c.b16 %v621, %v621
      %v654 = vpack.c.b16 %v622, %v622
      %v655 = vpack.c.b16 %v623, %v623
      %v656 = vpack.c.b16 %v624, %v624
      %v657 = vpack.c.b16 %v625, %v625
      %v658 = vpack.c.b16 %v626, %v626
      %v659 = vpack.c.b16 %v627, %v627
      %v660 = vpack.c.b16 %v628, %v628
      %v661 = vpack.c.b16 %v629, %v629
      %v662 = vpack.c.b16 %v630, %v630
      %v663 = vpack.c.b16 %v631, %v631
      %v664 = vpack.c.b16 %v632, %v632
      %v665 = vpack.c.b16 %v633, %v633
      %v666 = vpack.c.b16 %v634, %v634
      %v667 = vpack.c.b16 %v635, %v635
      %700 = vst [vmem:[%s210] sm:$0xf] %v636
      %701 = vst [vmem:[%s210 + $0x4] sm:$0xf] %v637
      %702 = vst [vmem:[%s210 + $0x8] sm:$0xf] %v638
      %703 = vst [vmem:[%s210 + $0xc] sm:$0xf] %v639
      %704 = vst [vmem:[%s210 + $0x10] sm:$0xf] %v640
      %705 = vst [vmem:[%s210 + $0x14] sm:$0xf] %v641
      %706 = vst [vmem:[%s210 + $0x18] sm:$0xf] %v642
      %707 = vst [vmem:[%s210 + $0x1c] sm:$0xf] %v643
      %708 = vst [vmem:[%s210 + $0x20] sm:$0xf] %v644
      %709 = vst [vmem:[%s210 + $0x24] sm:$0xf] %v645
      %710 = vst [vmem:[%s210 + $0x28] sm:$0xf] %v646
      %711 = vst [vmem:[%s210 + $0x2c] sm:$0xf] %v647
      %712 = vst [vmem:[%s210 + $0x30] sm:$0xf] %v648
      %713 = vst [vmem:[%s210 + $0x34] sm:$0xf] %v649
      %714 = vst [vmem:[%s210 + $0x38] sm:$0xf] %v650
      %715 = vst [vmem:[%s210 + $0x3c] sm:$0xf] %v651
      %716 = vst [vmem:[%s210 + $0x40] sm:$0xf] %v652
      %717 = vst [vmem:[%s210 + $0x44] sm:$0xf] %v653
      %718 = vst [vmem:[%s210 + $0x48] sm:$0xf] %v654
      %719 = vst [vmem:[%s210 + $0x4c] sm:$0xf] %v655
      %720 = vst [vmem:[%s210 + $0x50] sm:$0xf] %v656
      %721 = vst [vmem:[%s210 + $0x54] sm:$0xf] %v657
      %722 = vst [vmem:[%s210 + $0x58] sm:$0xf] %v658
      %723 = vst [vmem:[%s210 + $0x5c] sm:$0xf] %v659
      %724 = vst [vmem:[%s210 + $0x60] sm:$0xf] %v660
      %725 = vst [vmem:[%s210 + $0x64] sm:$0xf] %v661
      %726 = vst [vmem:[%s210 + $0x68] sm:$0xf] %v662
      %727 = vst [vmem:[%s210 + $0x6c] sm:$0xf] %v663
      %728 = vst [vmem:[%s210 + $0x70] sm:$0xf] %v664
      %729 = vst [vmem:[%s210 + $0x74] sm:$0xf] %v665
      %730 = vst [vmem:[%s210 + $0x78] sm:$0xf] %v666
      %731 = vst [vmem:[%s210 + $0x7c] sm:$0xf] %v667
      %v732 = vadd.f32 %v446, %v449
      %v733 = vadd.f32 %v732, %v454
      %v734 = vadd.f32 %v733, %v457
      %v735 = vadd.f32 %v734, %v462
      %v736 = vadd.f32 %v735, %v465
      %v737 = vadd.f32 %v736, %v470
      %v738 = vadd.f32 %v737, %v473
      %v739 = vadd.f32 %v738, %v478
      %v740 = vadd.f32 %v739, %v481
      %v741 = vadd.f32 %v740, %v486
      %v742 = vadd.f32 %v741, %v489
      %v743 = vadd.f32 %v742, %v494
      %v744 = vadd.f32 %v743, %v497
      %v745 = vadd.f32 %v744, %v502
      %v746 = vadd.f32 %v745, %v505
      %v747 = vadd.f32 %v746, %v510
      %v748 = vadd.f32 %v747, %v513
      %v749 = vadd.f32 %v748, %v518
      %v750 = vadd.f32 %v749, %v521
      %v751 = vadd.f32 %v750, %v526
      %v752 = vadd.f32 %v751, %v529
      %v753 = vadd.f32 %v752, %v534
      %v754 = vadd.f32 %v753, %v537
      %v755 = vadd.f32 %v754, %v542
      %v756 = vadd.f32 %v755, %v545
      %v757 = vadd.f32 %v756, %v550
      %v758 = vadd.f32 %v757, %v553
      %v759 = vadd.f32 %v758, %v558
      %v760 = vadd.f32 %v759, %v561
      %v761 = vadd.f32 %v760, %v566
      %v762 = vadd.f32 %v761, %v569
      %v763 = vrot.slane %v762, 4
      %v764 = vadd.f32 %v762, %v763
      %v765 = vrot.slane %v764, 2
      %v766 = vadd.f32 %v764, %v765
      %v767 = vrot.slane %v766, 1
      %v768 = vadd.f32 %v766, %v767
      %769 = vst [vmem:[%s214] sm:$0x1] %v768
      %v770 = vmul.f32 %v446, %v446
      %v771 = vmul.f32 %v449, %v449
      %v772 = vmul.f32 %v454, %v454
      %v773 = vmul.f32 %v457, %v457
      %v774 = vmul.f32 %v462, %v462
      %v775 = vmul.f32 %v465, %v465
      %v776 = vmul.f32 %v470, %v470
      %v777 = vmul.f32 %v473, %v473
      %v778 = vmul.f32 %v478, %v478
      %v779 = vmul.f32 %v481, %v481
      %v780 = vmul.f32 %v486, %v486
      %v781 = vmul.f32 %v489, %v489
      %v782 = vmul.f32 %v494, %v494
      %v783 = vmul.f32 %v497, %v497
      %v784 = vmul.f32 %v502, %v502
      %v785 = vmul.f32 %v505, %v505
      %v786 = vmul.f32 %v510, %v510
      %v787 = vmul.f32 %v513, %v513
      %v788 = vmul.f32 %v518, %v518
      %v789 = vmul.f32 %v521, %v521
      %v790 = vmul.f32 %v526, %v526
      %v791 = vmul.f32 %v529, %v529
      %v792 = vmul.f32 %v534, %v534
      %v793 = vmul.f32 %v537, %v537
      %v794 = vmul.f32 %v542, %v542
      %v795 = vmul.f32 %v545, %v545
      %v796 = vmul.f32 %v550, %v550
      %v797 = vmul.f32 %v553, %v553
      %v798 = vmul.f32 %v558, %v558
      %v799 = vmul.f32 %v561, %v561
      %v800 = vmul.f32 %v566, %v566
      %v801 = vmul.f32 %v569, %v569
      %v802 = vadd.f32 %v770, %v771
      %v803 = vadd.f32 %v802, %v772
      %v804 = vadd.f32 %v803, %v773
      %v805 = vadd.f32 %v804, %v774
      %v806 = vadd.f32 %v805, %v775
      %v807 = vadd.f32 %v806, %v776
      %v808 = vadd.f32 %v807, %v777
      %v809 = vadd.f32 %v808, %v778
      %v810 = vadd.f32 %v809, %v779
      %v811 = vadd.f32 %v810, %v780
      %v812 = vadd.f32 %v811, %v781
      %v813 = vadd.f32 %v812, %v782
      %v814 = vadd.f32 %v813, %v783
      %v815 = vadd.f32 %v814, %v784
      %v816 = vadd.f32 %v815, %v785
      %v817 = vadd.f32 %v816, %v786
      %v818 = vadd.f32 %v817, %v787
      %v819 = vadd.f32 %v818, %v788
      %v820 = vadd.f32 %v819, %v789
      %v821 = vadd.f32 %v820, %v790
      %v822 = vadd.f32 %v821, %v791
      %v823 = vadd.f32 %v822, %v792
      %v824 = vadd.f32 %v823, %v793
      %v825 = vadd.f32 %v824, %v794
      %v826 = vadd.f32 %v825, %v795
      %v827 = vadd.f32 %v826, %v796
      %v828 = vadd.f32 %v827, %v797
      %v829 = vadd.f32 %v828, %v798
      %v830 = vadd.f32 %v829, %v799
      %v831 = vadd.f32 %v830, %v800
      %v832 = vadd.f32 %v831, %v801
      %v833 = vrot.slane %v832, 4
      %v834 = vadd.f32 %v832, %v833
      %v835 = vrot.slane %v834, 2
      %v836 = vadd.f32 %v834, %v835
      %v837 = vrot.slane %v836, 1
      %v838 = vadd.f32 %v836, %v837
      %839 = vst [vmem:[%s217] sm:$0x1] %v838
      %s840 = smul.u32 32, %s16
      %p841 = scmp.lt.s32.totalorder %s840, 63
      %s842 = scalar_select %p841, %s840, 63
      %s843 = smul.addr %s842, 4
      %s844 = scalar_lea.vmem %s2, %s843
      %p845 = scmp.lt.s32.totalorder %s16, 1
      %s846 = scalar_select %p845, %s16, 1
      %s847 = scalar_lea.vmem %s3, %s846
      %p848 = scmp.lt.s32.totalorder %s16, 1
      %s849 = scalar_select %p848, %s16, 1
      %s850 = scalar_lea.vmem %s4, %s849
      // Predicated region
      $region29: #{bottleneck_forward.6} parent=27 // pred_check
        %p851 = pneg %p81
      $region30: #{bottleneck_forward.6} parent=27 // pred_check_branch
        %853 = sbr.rel (%p851) target = $region32
      $region31: #{bottleneck_forward.6} parent=27 // pred_region
        %s854 = smul.u32 32, %s16
      $region32: #{bottleneck_forward.6} parent=27 // pred_fallthru
        _
      // Predicated region
      $region33: #{bottleneck_forward.6} parent=27 // pred_check
        %p855 = pneg %p107
      $region34: #{bottleneck_forward.6} parent=27 // pred_check_branch
        %857 = sbr.rel (%p855) target = $region36
      $region35: #{bottleneck_forward.6} parent=27 // pred_region
        _
      $region36: #{bottleneck_forward.6} parent=27 // pred_fallthru
        _
      // Predicated region
      $region37: #{bottleneck_forward.6} parent=27 // pred_check
        %p858 = pneg %p133
      $region38: #{bottleneck_forward.6} parent=27 // pred_check_branch
        %860 = sbr.rel (%p858) target = $region40
      $region39: #{bottleneck_forward.6} parent=27 // pred_region
        _
      $region40: #{bottleneck_forward.6} parent=27 // pred_fallthru
        _
    $region28: #{bottleneck_forward.6} parent=5 // pred_fallthru
      _
    %p861 = scmp.le.s32.totalorder 2, %s11
    // Predicated region
    $region41: #{bottleneck_forward.6} parent=5 // pred_check
      %p862 = pneg %p861
    $region42: #{bottleneck_forward.6} parent=5 // pred_check_branch
      %864 = sbr.rel (%p862) target = $region44
    $region43: #{bottleneck_forward.6} parent=5 // pred_region
      %s865 = ssub.s32 %s11, 2
      // Predicated region
      $region45: #{bottleneck_forward.6} parent=43 // pred_check
        %p866 = pneg %p87
      $region46: #{bottleneck_forward.6} parent=43 // pred_check_branch
        %868 = sbr.rel (%p866) target = $region48
      $region47: #{bottleneck_forward.6} parent=43 // pred_region
        %s869 = smul.u32 32, %s17
        %p870 = scmp.lt.s32.totalorder %s869, 63
        %s871 = scalar_select %p870, %s869, 63
        %s872 = smul.addr %s871, 4
        %s873 = scalar_lea.vmem %s2, %s872
      $region48: #{bottleneck_forward.6} parent=43 // pred_fallthru
        _
      // Predicated region
      $region49: #{bottleneck_forward.6} parent=43 // pred_check
        %p874 = pneg %p113
      $region50: #{bottleneck_forward.6} parent=43 // pred_check_branch
        %876 = sbr.rel (%p874) target = $region52
      $region51: #{bottleneck_forward.6} parent=43 // pred_region
        %p877 = scmp.lt.s32.totalorder %s17, 1
        %s878 = scalar_select %p877, %s17, 1
        %s879 = scalar_lea.vmem %s3, %s878
      $region52: #{bottleneck_forward.6} parent=43 // pred_fallthru
        _
      // Predicated region
      $region53: #{bottleneck_forward.6} parent=43 // pred_check
        %p880 = pneg %p139
      $region54: #{bottleneck_forward.6} parent=43 // pred_check_branch
        %882 = sbr.rel (%p880) target = $region56
      $region55: #{bottleneck_forward.6} parent=43 // pred_region
        %p883 = scmp.lt.s32.totalorder %s17, 1
        %s884 = scalar_select %p883, %s17, 1
        %s885 = scalar_lea.vmem %s4, %s884
      $region56: #{bottleneck_forward.6} parent=43 // pred_fallthru
        _
    $region44: #{bottleneck_forward.6} parent=5 // pred_fallthru
      _
  $region6: #{bottleneck_forward.6} parent=0 // loop_footer
    %s15 = sadd.s32 1, %s11
  $region7: #{bottleneck_forward.6} parent=0 // loop_footer_branch
    %10 = sbr.rel target = $region3
  $region8: #{bottleneck_forward.6} parent=0 // loop_exit
    _

// kernel: bottleneck_forward.7
$region0: #{bottleneck_forward.7}
  #allocation0 [shape = 'u32[]', space=smem, size = 0x4, offset = 0x4, fixed_abs, tag = 'smem constant byte address 0x4 - core index']
  #allocation1 [shape = 'u32[144,128]{1,0:T(1,128)}', space=vmem, size = 0x12000, scoped, tag = 'internal scratch']
  %s0 = inlined_call_operand.vmem [shape: bf16[2,16,16,128], index: 0, kind: input, shape index: {}]
  %s1 = inlined_call_operand.vmem [shape: f32[1,128], index: 1, kind: input, shape index: {}]
  %s2 = inlined_call_operand.vmem [shape: f32[1,128], index: 2, kind: input, shape index: {}]
  %s3 = inlined_call_operand.vmem [shape: bf16[2,18,18,128], index: 3, kind: output, shape index: {}]
  %s4 = sld [smem:[#allocation0]]
  $region45: #{bottleneck_forward.7} parent=0
    _
  %s6 = ssub.s32 1, %s4
  %s7 = scalar_select 0, %s6, %s4
  loop: start=0, step=1, limit=4
  $region2: #{bottleneck_forward.7} parent=0 // loop_pre_header
    _
  $region3: #{bottleneck_forward.7} parent=0 // loop_header
    %s9 = sphi 0, %s13
    %p10 = scmp.ge.s32.totalorder %s9, 4
    %s19 = sphi 0, %s21
    %s22 = sphi 0, %s19
    %s23 = sphi 0, %s22
    %s39 = sphi 0, %s23
    %s43 = sphi 0, %s43
    %s45 = sphi 0, %s43
    %s46 = sphi 0, %s45
    %s60 = sphi 0, %s46
    %s64 = sphi 0, %s64
    %s66 = sphi 0, %s64
    %s67 = sphi 0, %s66
    %s81 = sphi 0, %s67
    %s87 = sphi 0, %s89
    %s90 = sphi 0, %s87
    %s91 = sphi 0, %s90
    %s107 = sphi 0, %s91
  $region4: #{bottleneck_forward.7} parent=0 // loop_header_branch
    %12 = sbr.rel (%p10) target = $region8
  $region5: #{bottleneck_forward.7} parent=0 // loop_body
    %s14 = ssub.s32 %s9, 1
    %s15 = ssub.s32 %s9, 2
    %s16 = sadd.s32 %s9, 1
    %s17 = ssub.s32 %s9, %s16
    %p18 = scmp.eq.s32.totalorder %s17, 0
    %s20 = sadd.s32 %s19, 1
    %s21 = scalar_select %p18, %s19, %s20
    %p24 = pneg %p18
    %p25 = scmp.eq.s32.totalorder %s9, 1
    %p26 = por %p24, %p25
    %p27 = scmp.ne.s32.totalorder %s19, %s22
    %p28 = scmp.eq.s32.totalorder %s9, 0
    %p29 = por %p27, %p28
    %p30 = scmp.ne.s32.totalorder %s19, %s22
    %p31 = scmp.eq.s32.totalorder %s14, 1
    %p32 = por %p30, %p31
    %p33 = scmp.ne.s32.totalorder %s22, %s23
    %p34 = scmp.eq.s32.totalorder %s14, 0
    %p35 = por %p33, %p34
    %p36 = scmp.ne.s32.totalorder %s22, %s23
    %p37 = scmp.eq.s32.totalorder %s15, 1
    %p38 = por %p36, %p37
    %p40 = scmp.ne.s32.totalorder %s23, %s39
    %p41 = scmp.eq.s32.totalorder %s15, 0
    %p42 = por %p40, %p41
    %s44 = sadd.s32 %s43, 1
    %p47 = scmp.eq.s32.totalorder %s9, 1
    %p48 = scmp.ne.s32.totalorder %s43, %s45
    %p49 = scmp.eq.s32.totalorder %s9, 0
    %p50 = por %p48, %p49
    %p51 = scmp.ne.s32.totalorder %s43, %s45
    %p52 = scmp.eq.s32.totalorder %s14, 1
    %p53 = por %p51, %p52
    %p54 = scmp.ne.s32.totalorder %s45, %s46
    %p55 = scmp.eq.s32.totalorder %s14, 0
    %p56 = por %p54, %p55
    %p57 = scmp.ne.s32.totalorder %s45, %s46
    %p58 = scmp.eq.s32.totalorder %s15, 1
    %p59 = por %p57, %p58
    %p61 = scmp.ne.s32.totalorder %s46, %s60
    %p62 = scmp.eq.s32.totalorder %s15, 0
    %p63 = por %p61, %p62
    %s65 = sadd.s32 %s64, 1
    %p68 = scmp.eq.s32.totalorder %s9, 1
    %p69 = scmp.ne.s32.totalorder %s64, %s66
    %p70 = scmp.eq.s32.totalorder %s9, 0
    %p71 = por %p69, %p70
    %p72 = scmp.ne.s32.totalorder %s64, %s66
    %p73 = scmp.eq.s32.totalorder %s14, 1
    %p74 = por %p72, %p73
    %p75 = scmp.ne.s32.totalorder %s66, %s67
    %p76 = scmp.eq.s32.totalorder %s14, 0
    %p77 = por %p75, %p76
    %p78 = scmp.ne.s32.totalorder %s66, %s67
    %p79 = scmp.eq.s32.totalorder %s15, 1
    %p80 = por %p78, %p79
    %p82 = scmp.ne.s32.totalorder %s67, %s81
    %p83 = scmp.eq.s32.totalorder %s15, 0
    %p84 = por %p82, %p83
    %s85 = ssub.s32 %s9, %s16
    %p86 = scmp.eq.s32.totalorder %s85, 0
    %s88 = sadd.s32 %s87, 1
    %s89 = scalar_select %p86, %s87, %s88
    %p92 = pneg %p86
    %p93 = scmp.eq.s32.totalorder %s9, 1
    %p94 = por %p92, %p93
    %p95 = scmp.ne.s32.totalorder %s87, %s90
    %p96 = scmp.eq.s32.totalorder %s9, 0
    %p97 = por %p95, %p96
    %p98 = scmp.ne.s32.totalorder %s87, %s90
    %p99 = scmp.eq.s32.totalorder %s14, 1
    %p100 = por %p98, %p99
    %p101 = scmp.ne.s32.totalorder %s90, %s91
    %p102 = scmp.eq.s32.totalorder %s14, 0
    %p103 = por %p101, %p102
    %p104 = scmp.ne.s32.totalorder %s90, %s91
    %p105 = scmp.eq.s32.totalorder %s15, 1
    %p106 = por %p104, %p105
    %p108 = scmp.ne.s32.totalorder %s91, %s107
    %p109 = scmp.eq.s32.totalorder %s15, 0
    %p110 = por %p108, %p109
    %p111 = scmp.le.s32.totalorder 1, %s9
    %p112 = scmp.lt.s32.totalorder %s9, 3
    %p113 = pnand %p111, %p112
    %p114 = pneg %p113
    // Predicated region
    $region9: #{bottleneck_forward.7} parent=5 // pred_check
      _
    $region10: #{bottleneck_forward.7} parent=5 // pred_check_branch
      %116 = sbr.rel (%p113) target = $region12
    $region11: #{bottleneck_forward.7} parent=5 // pred_region
      %s117 = ssub.s32 %s9, 1
      // Predicated region
      $region13: #{bottleneck_forward.7} parent=11 // pred_check
        %p118 = pneg %p56
      $region14: #{bottleneck_forward.7} parent=11 // pred_check_branch
        %120 = sbr.rel (%p118) target = $region16
      $region15: #{bottleneck_forward.7} parent=11 // pred_region
        _
      $region16: #{bottleneck_forward.7} parent=11 // pred_fallthru
        _
      // Predicated region
      $region17: #{bottleneck_forward.7} parent=11 // pred_check
        %p121 = pneg %p77
      $region18: #{bottleneck_forward.7} parent=11 // pred_check_branch
        %123 = sbr.rel (%p121) target = $region20
      $region19: #{bottleneck_forward.7} parent=11 // pred_region
        _
      $region20: #{bottleneck_forward.7} parent=11 // pred_fallthru
        _
    $region12: #{bottleneck_forward.7} parent=5 // pred_fallthru
      _
    %p124 = scmp.lt.s32.totalorder %s9, 2
    // Predicated region
    $region21: #{bottleneck_forward.7} parent=5 // pred_check
      %p125 = pneg %p124
    $region22: #{bottleneck_forward.7} parent=5 // pred_check_branch
      %127 = sbr.rel (%p125) target = $region24
    $region23: #{bottleneck_forward.7} parent=5 // pred_region
      // Predicated region
      $region25: #{bottleneck_forward.7} parent=23 // pred_check
        %p128 = pneg %p29
      $region26: #{bottleneck_forward.7} parent=23 // pred_check_branch
        %130 = sbr.rel (%p128) target = $region28
      $region27: #{bottleneck_forward.7} parent=23 // pred_region
        %p131 = scmp.lt.s32.totalorder %s9, 1
        %s132 = scalar_select %p131, %s9, 1
        %s133 = smul.addr %s132, 32
        %s134 = smul.addr %s133, 4
        %s135 = scalar_lea.vmem %s0, %s134
      $region28: #{bottleneck_forward.7} parent=23 // pred_fallthru
        _
    $region24: #{bottleneck_forward.7} parent=5 // pred_fallthru
      _
    %p136 = scmp.le.s32.totalorder 1, %s9
    %p137 = scmp.lt.s32.totalorder %s9, 3
    %p138 = pnand %p136, %p137
    %p139 = pneg %p138
    // Predicated region
    $region29: #{bottleneck_forward.7} parent=5 // pred_check
      _
    $region30: #{bottleneck_forward.7} parent=5 // pred_check_branch
      %141 = sbr.rel (%p138) target = $region32
    $region31: #{bottleneck_forward.7} parent=5 // pred_region
      %s142 = ssub.s32 %s9, 1
      %p143 = scmp.lt.s32.totalorder %s14, 1
      %s144 = scalar_select %p143, %s14, 1
      %s145 = smul.addr %s144, 32
      %s146 = smul.addr %s145, 4
      %s147 = scalar_lea.vmem %s0, %s146
      %p148 = pneg %p35
      %p149 = pneg %p32
      %p150 = pneg %p56
      %p151 = pneg %p53
      %p152 = pneg %p77
      %p153 = pneg %p74
      %p154 = pneg %p103
      %p155 = pneg %p100
      %p156 = scmp.lt.s32.totalorder %s14, 1
      %s157 = scalar_select %p156, %s14, 1
      %s158 = smul.addr %s157, 54
      %s159 = smul.addr %s158, 4
      %s160 = scalar_lea.vmem %s3, %s159
      %p161 = scmp.lt.s32.totalorder %s14, 1
      %s162 = scalar_select %p161, %s14, 1
      %s163 = smul.addr %s162, 32
      %s164 = smul.addr %s163, 4
      %s165 = scalar_lea.vmem %s0, %s164
      %p166 = scmp.lt.s32.totalorder %s14, 1
      %s167 = scalar_select %p166, %s14, 1
      %s168 = smul.addr %s167, 54
      %s169 = smul.addr %s168, 4
      %s170 = scalar_lea.vmem %s3, %s169
      %v172 = vld [vmem:[%s165] sm:$0xf]
      %v173 = vld [vmem:[%s165 + $0x4] sm:$0xf]
      %v174 = vld [vmem:[%s165 + $0x8] sm:$0xf]
      %v175 = vld [vmem:[%s165 + $0xc] sm:$0xf]
      %v176 = vld [vmem:[%s165 + $0x10] sm:$0xf]
      %v177 = vld [vmem:[%s165 + $0x14] sm:$0xf]
      %v178 = vld [vmem:[%s165 + $0x18] sm:$0xf]
      %v179 = vld [vmem:[%s165 + $0x1c] sm:$0xf]
      %v180 = vld [vmem:[%s165 + $0x20] sm:$0xf]
      %v181 = vld [vmem:[%s165 + $0x24] sm:$0xf]
      %v182 = vld [vmem:[%s165 + $0x28] sm:$0xf]
      %v183 = vld [vmem:[%s165 + $0x2c] sm:$0xf]
      %v184 = vld [vmem:[%s165 + $0x30] sm:$0xf]
      %v185 = vld [vmem:[%s165 + $0x34] sm:$0xf]
      %v186 = vld [vmem:[%s165 + $0x38] sm:$0xf]
      %v187 = vld [vmem:[%s165 + $0x3c] sm:$0xf]
      %v188 = vld [vmem:[%s165 + $0x40] sm:$0xf]
      %v189 = vld [vmem:[%s165 + $0x44] sm:$0xf]
      %v190 = vld [vmem:[%s165 + $0x48] sm:$0xf]
      %v191 = vld [vmem:[%s165 + $0x4c] sm:$0xf]
      %v192 = vld [vmem:[%s165 + $0x50] sm:$0xf]
      %v193 = vld [vmem:[%s165 + $0x54] sm:$0xf]
      %v194 = vld [vmem:[%s165 + $0x58] sm:$0xf]
      %v195 = vld [vmem:[%s165 + $0x5c] sm:$0xf]
      %v196 = vld [vmem:[%s165 + $0x60] sm:$0xf]
      %v197 = vld [vmem:[%s165 + $0x64] sm:$0xf]
      %v198 = vld [vmem:[%s165 + $0x68] sm:$0xf]
      %v199 = vld [vmem:[%s165 + $0x6c] sm:$0xf]
      %v200 = vld [vmem:[%s165 + $0x70] sm:$0xf]
      %v201 = vld [vmem:[%s165 + $0x74] sm:$0xf]
      %v202 = vld [vmem:[%s165 + $0x78] sm:$0xf]
      %v203 = vld [vmem:[%s165 + $0x7c] sm:$0xf]
      %v204 = vunpack.c.l.bf16 %v172
      %v205 = vunpack.c.l.bf16 %v173
      %v206 = vunpack.c.l.bf16 %v174
      %v207 = vunpack.c.l.bf16 %v175
      %v208 = vunpack.c.l.bf16 %v176
      %v209 = vunpack.c.l.bf16 %v177
      %v210 = vunpack.c.l.bf16 %v178
      %v211 = vunpack.c.l.bf16 %v179
      %v212 = vunpack.c.l.bf16 %v180
      %v213 = vunpack.c.l.bf16 %v181
      %v214 = vunpack.c.l.bf16 %v182
      %v215 = vunpack.c.l.bf16 %v183
      %v216 = vunpack.c.l.bf16 %v184
      %v217 = vunpack.c.l.bf16 %v185
      %v218 = vunpack.c.l.bf16 %v186
      %v219 = vunpack.c.l.bf16 %v187
      %v220 = vunpack.c.l.bf16 %v188
      %v221 = vunpack.c.l.bf16 %v189
      %v222 = vunpack.c.l.bf16 %v190
      %v223 = vunpack.c.l.bf16 %v191
      %v224 = vunpack.c.l.bf16 %v192
      %v225 = vunpack.c.l.bf16 %v193
      %v226 = vunpack.c.l.bf16 %v194
      %v227 = vunpack.c.l.bf16 %v195
      %v228 = vunpack.c.l.bf16 %v196
      %v229 = vunpack.c.l.bf16 %v197
      %v230 = vunpack.c.l.bf16 %v198
      %v231 = vunpack.c.l.bf16 %v199
      %v232 = vunpack.c.l.bf16 %v200
      %v233 = vunpack.c.l.bf16 %v201
      %v234 = vunpack.c.l.bf16 %v202
      %v235 = vunpack.c.l.bf16 %v203
      %v236 = vld [vmem:[%s1] sm:$0x1]
      %v238 = vlaneseq
      %v239 = vshrl.u32 %v238, 7
      %v240 = vsub.s32 0, %v239
      %v241 = vrot.slane %v236, %v240
      %v243 = vmul.f32 %v204, %v241
      %v244 = vmul.f32 %v205, %v241
      %v245 = vmul.f32 %v206, %v241
      %v246 = vmul.f32 %v207, %v241
      %v247 = vmul.f32 %v208, %v241
      %v248 = vmul.f32 %v209, %v241
      %v249 = vmul.f32 %v210, %v241
      %v250 = vmul.f32 %v211, %v241
      %v251 = vmul.f32 %v212, %v241
      %v252 = vmul.f32 %v213, %v241
      %v253 = vmul.f32 %v214, %v241
      %v254 = vmul.f32 %v215, %v241
      %v255 = vmul.f32 %v216, %v241
      %v256 = vmul.f32 %v217, %v241
      %v257 = vmul.f32 %v218, %v241
      %v258 = vmul.f32 %v219, %v241
      %v259 = vmul.f32 %v220, %v241
      %v260 = vmul.f32 %v221, %v241
      %v261 = vmul.f32 %v222, %v241
      %v262 = vmul.f32 %v223, %v241
      %v263 = vmul.f32 %v224, %v241
      %v264 = vmul.f32 %v225, %v241
      %v265 = vmul.f32 %v226, %v241
      %v266 = vmul.f32 %v227, %v241
      %v267 = vmul.f32 %v228, %v241
      %v268 = vmul.f32 %v229, %v241
      %v269 = vmul.f32 %v230, %v241
      %v270 = vmul.f32 %v231, %v241
      %v271 = vmul.f32 %v232, %v241
      %v272 = vmul.f32 %v233, %v241
      %v273 = vmul.f32 %v234, %v241
      %v274 = vmul.f32 %v235, %v241
      %v275 = vld [vmem:[%s2] sm:$0x1]
      %v277 = vlaneseq
      %v278 = vshrl.u32 %v277, 7
      %v279 = vsub.s32 0, %v278
      %v280 = vrot.slane %v275, %v279
      %v282 = vadd.f32 %v243, %v280
      %v283 = vadd.f32 %v244, %v280
      %v284 = vadd.f32 %v245, %v280
      %v285 = vadd.f32 %v246, %v280
      %v286 = vadd.f32 %v247, %v280
      %v287 = vadd.f32 %v248, %v280
      %v288 = vadd.f32 %v249, %v280
      %v289 = vadd.f32 %v250, %v280
      %v290 = vadd.f32 %v251, %v280
      %v291 = vadd.f32 %v252, %v280
      %v292 = vadd.f32 %v253, %v280
      %v293 = vadd.f32 %v254, %v280
      %v294 = vadd.f32 %v255, %v280
      %v295 = vadd.f32 %v256, %v280
      %v296 = vadd.f32 %v257, %v280
      %v297 = vadd.f32 %v258, %v280
      %v298 = vadd.f32 %v259, %v280
      %v299 = vadd.f32 %v260, %v280
      %v300 = vadd.f32 %v261, %v280
      %v301 = vadd.f32 %v262, %v280
      %v302 = vadd.f32 %v263, %v280
      %v303 = vadd.f32 %v264, %v280
      %v304 = vadd.f32 %v265, %v280
      %v305 = vadd.f32 %v266, %v280
      %v306 = vadd.f32 %v267, %v280
      %v307 = vadd.f32 %v268, %v280
      %v308 = vadd.f32 %v269, %v280
      %v309 = vadd.f32 %v270, %v280
      %v310 = vadd.f32 %v271, %v280
      %v311 = vadd.f32 %v272, %v280
      %v312 = vadd.f32 %v273, %v280
      %v313 = vadd.f32 %v274, %v280
      %v314 = vmax.f32 %v282, 0.0
      %v315 = vmax.f32 %v283, 0.0
      %v316 = vmax.f32 %v284, 0.0
      %v317 = vmax.f32 %v285, 0.0
      %v318 = vmax.f32 %v286, 0.0
      %v319 = vmax.f32 %v287, 0.0
      %v320 = vmax.f32 %v288, 0.0
      %v321 = vmax.f32 %v289, 0.0
      %v322 = vmax.f32 %v290, 0.0
      %v323 = vmax.f32 %v291, 0.0
      %v324 = vmax.f32 %v292, 0.0
      %v325 = vmax.f32 %v293, 0.0
      %v326 = vmax.f32 %v294, 0.0
      %v327 = vmax.f32 %v295, 0.0
      %v328 = vmax.f32 %v296, 0.0
      %v329 = vmax.f32 %v297, 0.0
      %v330 = vmax.f32 %v298, 0.0
      %v331 = vmax.f32 %v299, 0.0
      %v332 = vmax.f32 %v300, 0.0
      %v333 = vmax.f32 %v301, 0.0
      %v334 = vmax.f32 %v302, 0.0
      %v335 = vmax.f32 %v303, 0.0
      %v336 = vmax.f32 %v304, 0.0
      %v337 = vmax.f32 %v305, 0.0
      %v338 = vmax.f32 %v306, 0.0
      %v339 = vmax.f32 %v307, 0.0
      %v340 = vmax.f32 %v308, 0.0
      %v341 = vmax.f32 %v309, 0.0
      %v342 = vmax.f32 %v310, 0.0
      %v343 = vmax.f32 %v311, 0.0
      %v344 = vmax.f32 %v312, 0.0
      %v345 = vmax.f32 %v313, 0.0
      %346 = vst [vmem:[%s170] sm:$0xf] 0
      %347 = vst [vmem:[%s170 + $0x4] sm:$0xf] 0
      %348 = vst [vmem:[%s170 + $0x8] sm:$0x1] 0
      %349 = vst [vmem:[%s170 + $0xc] sm:$0xf] 0
      %350 = vst [vmem:[%s170 + $0x10] sm:$0xf] 0
      %351 = vst [vmem:[%s170 + $0x14] sm:$0x1] 0
      %352 = vst [vmem:[%s170 + $0x18] sm:$0xf] 0
      %353 = vst [vmem:[%s170 + $0x1c] sm:$0xf] 0
      %354 = vst [vmem:[%s170 + $0x20] sm:$0x1] 0
      %355 = vst [vmem:[%s170 + $0x24] sm:$0xf] 0
      %356 = vst [vmem:[%s170 + $0x28] sm:$0xf] 0
      %357 = vst [vmem:[%s170 + $0x2c] sm:$0x1] 0
      %358 = vst [vmem:[%s170 + $0x30] sm:$0xf] 0
      %359 = vst [vmem:[%s170 + $0x34] sm:$0xf] 0
      %360 = vst [vmem:[%s170 + $0x38] sm:$0x1] 0
      %361 = vst [vmem:[%s170 + $0x3c] sm:$0xf] 0
      %362 = vst [vmem:[%s170 + $0x40] sm:$0xf] 0
      %363 = vst [vmem:[%s170 + $0x44] sm:$0x1] 0
      %364 = vst [vmem:[%s170 + $0x48] sm:$0xf] 0
      %365 = vst [vmem:[%s170 + $0x4c] sm:$0xf] 0
      %366 = vst [vmem:[%s170 + $0x50] sm:$0x1] 0
      %367 = vst [vmem:[%s170 + $0x54] sm:$0xf] 0
      %368 = vst [vmem:[%s170 + $0x58] sm:$0xf] 0
      %369 = vst [vmem:[%s170 + $0x5c] sm:$0x1] 0
      %370 = vst [vmem:[%s170 + $0x60] sm:$0xf] 0
      %371 = vst [vmem:[%s170 + $0x64] sm:$0xf] 0
      %372 = vst [vmem:[%s170 + $0x68] sm:$0x1] 0
      %373 = vst [vmem:[%s170 + $0x6c] sm:$0xf] 0
      %374 = vst [vmem:[%s170 + $0x70] sm:$0xf] 0
      %375 = vst [vmem:[%s170 + $0x74] sm:$0x1] 0
      %376 = vst [vmem:[%s170 + $0x78] sm:$0xf] 0
      %377 = vst [vmem:[%s170 + $0x7c] sm:$0xf] 0
      %378 = vst [vmem:[%s170 + $0x80] sm:$0x1] 0
      %379 = vst [vmem:[%s170 + $0x84] sm:$0xf] 0
      %380 = vst [vmem:[%s170 + $0x88] sm:$0xf] 0
      %381 = vst [vmem:[%s170 + $0x8c] sm:$0x1] 0
      %382 = vst [vmem:[%s170 + $0x90] sm:$0xf] 0
      %383 = vst [vmem:[%s170 + $0x94] sm:$0xf] 0
      %384 = vst [vmem:[%s170 + $0x98] sm:$0x1] 0
      %385 = vst [vmem:[%s170 + $0x9c] sm:$0xf] 0
      %386 = vst [vmem:[%s170 + $0xa0] sm:$0xf] 0
      %387 = vst [vmem:[%s170 + $0xa4] sm:$0x1] 0
      %388 = vst [vmem:[%s170 + $0xa8] sm:$0xf] 0
      %389 = vst [vmem:[%s170 + $0xac] sm:$0xf] 0
      %390 = vst [vmem:[%s170 + $0xb0] sm:$0x1] 0
      %391 = vst [vmem:[%s170 + $0xb4] sm:$0xf] 0
      %392 = vst [vmem:[%s170 + $0xb8] sm:$0xf] 0
      %393 = vst [vmem:[%s170 + $0xbc] sm:$0x1] 0
      %394 = vst [vmem:[%s170 + $0xc0] sm:$0xf] 0
      %395 = vst [vmem:[%s170 + $0xc4] sm:$0xf] 0
      %396 = vst [vmem:[%s170 + $0xc8] sm:$0x1] 0
      %397 = vst [vmem:[%s170 + $0xcc] sm:$0xf] 0
      %398 = vst [vmem:[%s170 + $0xd0] sm:$0xf] 0
      %399 = vst [vmem:[%s170 + $0xd4] sm:$0x1] 0
      %v400 = vpack.c.bf16 %v315, %v314
      %v401 = vpack.c.bf16 %v317, %v316
      %v402 = vpack.c.bf16 %v319, %v318
      %v403 = vpack.c.bf16 %v321, %v320
      %v404 = vpack.c.bf16 %v323, %v322
      %v405 = vpack.c.bf16 %v325, %v324
      %v406 = vpack.c.bf16 %v327, %v326
      %v407 = vpack.c.bf16 %v329, %v328
      %v408 = vpack.c.bf16 %v331, %v330
      %v409 = vpack.c.bf16 %v333, %v332
      %v410 = vpack.c.bf16 %v335, %v334
      %v411 = vpack.c.bf16 %v337, %v336
      %v412 = vpack.c.bf16 %v339, %v338
      %v413 = vpack.c.bf16 %v341, %v340
      %v414 = vpack.c.bf16 %v343, %v342
      %v415 = vpack.c.bf16 %v345, %v344
      %v432 = vunpack.c.l.b16 %v400
      %v433 = vunpack.c.h.b16 %v400
      %v434 = vunpack.c.l.b16 %v401
      %v435 = vunpack.c.h.b16 %v401
      %v436 = vunpack.c.l.b16 %v402
      %v437 = vunpack.c.h.b16 %v402
      %v438 = vunpack.c.l.b16 %v403
      %v439 = vunpack.c.h.b16 %v403
      %v440 = vunpack.c.l.b16 %v404
      %v441 = vunpack.c.h.b16 %v404
      %v442 = vunpack.c.l.b16 %v405
      %v443 = vunpack.c.h.b16 %v405
      %v444 = vunpack.c.l.b16 %v406
      %v445 = vunpack.c.h.b16 %v406
      %v446 = vunpack.c.l.b16 %v407
      %v447 = vunpack.c.h.b16 %v407
      %v448 = vunpack.c.l.b16 %v408
      %v449 = vunpack.c.h.b16 %v408
      %v450 = vunpack.c.l.b16 %v409
      %v451 = vunpack.c.h.b16 %v409
      %v452 = vunpack.c.l.b16 %v410
      %v453 = vunpack.c.h.b16 %v410
      %v454 = vunpack.c.l.b16 %v411
      %v455 = vunpack.c.h.b16 %v411
      %v456 = vunpack.c.l.b16 %v412
      %v457 = vunpack.c.h.b16 %v412
      %v458 = vunpack.c.l.b16 %v413
      %v459 = vunpack.c.h.b16 %v413
      %v460 = vunpack.c.l.b16 %v414
      %v461 = vunpack.c.h.b16 %v414
      %v462 = vunpack.c.l.b16 %v415
      %v463 = vunpack.c.h.b16 %v415
      %v464 = vpack.c.b16 %v432, %v432
      %v465 = vpack.c.b16 %v433, %v433
      %v466 = vpack.c.b16 %v434, %v434
      %v467 = vpack.c.b16 %v435, %v435
      %v468 = vpack.c.b16 %v436, %v436
      %v469 = vpack.c.b16 %v437, %v437
      %v470 = vpack.c.b16 %v438, %v438
      %v471 = vpack.c.b16 %v439, %v439
      %v472 = vpack.c.b16 %v440, %v440
      %v473 = vpack.c.b16 %v441, %v441
      %v474 = vpack.c.b16 %v442, %v442
      %v475 = vpack.c.b16 %v443, %v443
      %v476 = vpack.c.b16 %v444, %v444
      %v477 = vpack.c.b16 %v445, %v445
      %v478 = vpack.c.b16 %v446, %v446
      %v479 = vpack.c.b16 %v447, %v447
      %v480 = vpack.c.b16 %v448, %v448
      %v481 = vpack.c.b16 %v449, %v449
      %v482 = vpack.c.b16 %v450, %v450
      %v483 = vpack.c.b16 %v451, %v451
      %v484 = vpack.c.b16 %v452, %v452
      %v485 = vpack.c.b16 %v453, %v453
      %v486 = vpack.c.b16 %v454, %v454
      %v487 = vpack.c.b16 %v455, %v455
      %v488 = vpack.c.b16 %v456, %v456
      %v489 = vpack.c.b16 %v457, %v457
      %v490 = vpack.c.b16 %v458, %v458
      %v491 = vpack.c.b16 %v459, %v459
      %v492 = vpack.c.b16 %v460, %v460
      %v493 = vpack.c.b16 %v461, %v461
      %v494 = vpack.c.b16 %v462, %v462
      %v495 = vpack.c.b16 %v463, %v463
      %vm496 = vsmask.f32 256
      %vm497 = vsmask.f32 4368
      %vm498 = vmor %vm496, %vm497
      %v500 = vshrl.u32 %v464, 16
      %v502 = vrot.slane %v500, 7
      %v503 = vshll.u32 %v464, 16
      %v505 = vor.u32 %v502, %v503
      %v506 = vrot.slane %v502, 4
      %v508 = vshrl.u32 %v465, 16
      %v510 = vrot.slane %v508, 7
      %v511 = vshll.u32 %v465, 16
      %v513 = vor.u32 %v510, %v511
      %v514 = vsel %vm498, %v506, %v513
      %v515 = vrot.slane %v510, 4
      %v517 = vshrl.u32 %v466, 16
      %v519 = vrot.slane %v517, 7
      %v520 = vshll.u32 %v466, 16
      %v522 = vor.u32 %v519, %v520
      %v523 = vrot.slane %v519, 4
      %v525 = vshrl.u32 %v467, 16
      %v527 = vrot.slane %v525, 7
      %v528 = vshll.u32 %v467, 16
      %v530 = vor.u32 %v527, %v528
      %v531 = vsel %vm498, %v523, %v530
      %v532 = vrot.slane %v527, 4
      %v534 = vshrl.u32 %v468, 16
      %v536 = vrot.slane %v534, 7
      %v537 = vshll.u32 %v468, 16
      %v539 = vor.u32 %v536, %v537
      %v540 = vrot.slane %v536, 4
      %v542 = vshrl.u32 %v469, 16
      %v544 = vrot.slane %v542, 7
      %v545 = vshll.u32 %v469, 16
      %v547 = vor.u32 %v544, %v545
      %v548 = vsel %vm498, %v540, %v547
      %v549 = vrot.slane %v544, 4
      %v551 = vshrl.u32 %v470, 16
      %v553 = vrot.slane %v551, 7
      %v554 = vshll.u32 %v470, 16
      %v556 = vor.u32 %v553, %v554
      %v557 = vrot.slane %v553, 4
      %v559 = vshrl.u32 %v471, 16
      %v561 = vrot.slane %v559, 7
      %v562 = vshll.u32 %v471, 16
      %v564 = vor.u32 %v561, %v562
      %v565 = vsel %vm498, %v557, %v564
      %v566 = vrot.slane %v561, 4
      %v568 = vshrl.u32 %v472, 16
      %v570 = vrot.slane %v568, 7
      %v571 = vshll.u32 %v472, 16
      %v573 = vor.u32 %v570, %v571
      %v574 = vrot.slane %v570, 4
      %v576 = vshrl.u32 %v473, 16
      %v578 = vrot.slane %v576, 7
      %v579 = vshll.u32 %v473, 16
      %v581 = vor.u32 %v578, %v579
      %v582 = vsel %vm498, %v574, %v581
      %v583 = vrot.slane %v578, 4
      %v585 = vshrl.u32 %v474, 16
      %v587 = vrot.slane %v585, 7
      %v588 = vshll.u32 %v474, 16
      %v590 = vor.u32 %v587, %v588
      %v591 = vrot.slane %v587, 4
      %v593 = vshrl.u32 %v475, 16
      %v595 = vrot.slane %v593, 7
      %v596 = vshll.u32 %v475, 16
      %v598 = vor.u32 %v595, %v596
      %v599 = vsel %vm498, %v591, %v598
      %v600 = vrot.slane %v595, 4
      %v602 = vshrl.u32 %v476, 16
      %v604 = vrot.slane %v602, 7
      %v605 = vshll.u32 %v476, 16
      %v607 = vor.u32 %v604, %v605
      %v608 = vrot.slane %v604, 4
      %v610 = vshrl.u32 %v477, 16
      %v612 = vrot.slane %v610, 7
      %v613 = vshll.u32 %v477, 16
      %v615 = vor.u32 %v612, %v613
      %v616 = vsel %vm498, %v608, %v615
      %v617 = vrot.slane %v612, 4
      %v619 = vshrl.u32 %v478, 16
      %v621 = vrot.slane %v619, 7
      %v622 = vshll.u32 %v478, 16
      %v624 = vor.u32 %v621, %v622
      %v625 = vrot.slane %v621, 4
      %v627 = vshrl.u32 %v479, 16
      %v629 = vrot.slane %v627, 7
      %v630 = vshll.u32 %v479, 16
      %v632 = vor.u32 %v629, %v630
      %v633 = vsel %vm498, %v625, %v632
      %v634 = vrot.slane %v629, 4
      %v636 = vshrl.u32 %v480, 16
      %v638 = vrot.slane %v636, 7
      %v639 = vshll.u32 %v480, 16
      %v641 = vor.u32 %v638, %v639
      %v642 = vrot.slane %v638, 4
      %v644 = vshrl.u32 %v481, 16
      %v646 = vrot.slane %v644, 7
      %v647 = vshll.u32 %v481, 16
      %v649 = vor.u32 %v646, %v647
      %v650 = vsel %vm498, %v642, %v649
      %v651 = vrot.slane %v646, 4
      %v653 = vshrl.u32 %v482, 16
      %v655 = vrot.slane %v653, 7
      %v656 = vshll.u32 %v482, 16
      %v658 = vor.u32 %v655, %v656
      %v659 = vrot.slane %v655, 4
      %v661 = vshrl.u32 %v483, 16
      %v663 = vrot.slane %v661, 7
      %v664 = vshll.u32 %v483, 16
      %v666 = vor.u32 %v663, %v664
      %v667 = vsel %vm498, %v659, %v666
      %v668 = vrot.slane %v663, 4
      %v670 = vshrl.u32 %v484, 16
      %v672 = vrot.slane %v670, 7
      %v673 = vshll.u32 %v484, 16
      %v675 = vor.u32 %v672, %v673
      %v676 = vrot.slane %v672, 4
      %v678 = vshrl.u32 %v485, 16
      %v680 = vrot.slane %v678, 7
      %v681 = vshll.u32 %v485, 16
      %v683 = vor.u32 %v680, %v681
      %v684 = vsel %vm498, %v676, %v683
      %v685 = vrot.slane %v680, 4
      %v687 = vshrl.u32 %v486, 16
      %v689 = vrot.slane %v687, 7
      %v690 = vshll.u32 %v486, 16
      %v692 = vor.u32 %v689, %v690
      %v693 = vrot.slane %v689, 4
      %v695 = vshrl.u32 %v487, 16
      %v697 = vrot.slane %v695, 7
      %v698 = vshll.u32 %v487, 16
      %v700 = vor.u32 %v697, %v698
      %v701 = vsel %vm498, %v693, %v700
      %v702 = vrot.slane %v697, 4
      %v704 = vshrl.u32 %v488, 16
      %v706 = vrot.slane %v704, 7
      %v707 = vshll.u32 %v488, 16
      %v709 = vor.u32 %v706, %v707
      %v710 = vrot.slane %v706, 4
      %v712 = vshrl.u32 %v489, 16
      %v714 = vrot.slane %v712, 7
      %v715 = vshll.u32 %v489, 16
      %v717 = vor.u32 %v714, %v715
      %v718 = vsel %vm498, %v710, %v717
      %v719 = vrot.slane %v714, 4
      %v721 = vshrl.u32 %v490, 16
      %v723 = vrot.slane %v721, 7
      %v724 = vshll.u32 %v490, 16
      %v726 = vor.u32 %v723, %v724
      %v727 = vrot.slane %v723, 4
      %v729 = vshrl.u32 %v491, 16
      %v731 = vrot.slane %v729, 7
      %v732 = vshll.u32 %v491, 16
      %v734 = vor.u32 %v731, %v732
      %v735 = vsel %vm498, %v727, %v734
      %v736 = vrot.slane %v731, 4
      %v738 = vshrl.u32 %v492, 16
      %v740 = vrot.slane %v738, 7
      %v741 = vshll.u32 %v492, 16
      %v743 = vor.u32 %v740, %v741
      %v744 = vrot.slane %v740, 4
      %v746 = vshrl.u32 %v493, 16
      %v748 = vrot.slane %v746, 7
      %v749 = vshll.u32 %v493, 16
      %v751 = vor.u32 %v748, %v749
      %v752 = vsel %vm498, %v744, %v751
      %v753 = vrot.slane %v748, 4
      %v755 = vshrl.u32 %v494, 16
      %v757 = vrot.slane %v755, 7
      %v758 = vshll.u32 %v494, 16
      %v760 = vor.u32 %v757, %v758
      %v761 = vrot.slane %v757, 4
      %v763 = vshrl.u32 %v495, 16
      %v765 = vrot.slane %v763, 7
      %v766 = vshll.u32 %v495, 16
      %v768 = vor.u32 %v765, %v766
      %v769 = vsel %vm498, %v761, %v768
      %v770 = vrot.slane %v765, 4
      %s819 = scalar_lea.vmem %s170, 12
      %vm820 = vcmask 1043456
      %vm821 = vsmask.f32 7938
      %vm822 = vmand %vm820, %vm821
      %v823 = vld [vmem:[%s819] sm:$0xf]
      %v824 = vsel %vm822, %v505, %v823
      %825 = vst [vmem:[%s819] sm:$0xf] %v824
      %826 = vst [vmem:[%s819 + $0x4] sm:$0xf] %v514
      %vm827 = vcmask 1040384
      %vm828 = vmand %vm827, %vm496
      %v829 = vld [vmem:[%s819 + $0x8] sm:$0x1]
      %v830 = vsel %vm828, %v515, %v829
      %831 = vst [vmem:[%s819 + $0x8] sm:$0x1] %v830
      %v832 = vld [vmem:[%s819 + $0xc] sm:$0xf]
      %v833 = vsel %vm822, %v522, %v832
      %834 = vst [vmem:[%s819 + $0xc] sm:$0xf] %v833
      %835 = vst [vmem:[%s819 + $0x10] sm:$0xf] %v531
      %v836 = vld [vmem:[%s819 + $0x14] sm:$0x1]
      %v837 = vsel %vm828, %v532, %v836
      %838 = vst [vmem:[%s819 + $0x14] sm:$0x1] %v837
      %v839 = vld [vmem:[%s819 + $0x18] sm:$0xf]
      %v840 = vsel %vm822, %v539, %v839
      %841 = vst [vmem:[%s819 + $0x18] sm:$0xf] %v840
      %842 = vst [vmem:[%s819 + $0x1c] sm:$0xf] %v548
      %v843 = vld [vmem:[%s819 + $0x20] sm:$0x1]
      %v844 = vsel %vm828, %v549, %v843
      %845 = vst [vmem:[%s819 + $0x20] sm:$0x1] %v844
      %v846 = vld [vmem:[%s819 + $0x24] sm:$0xf]
      %v847 = vsel %vm822, %v556, %v846
      %848 = vst [vmem:[%s819 + $0x24] sm:$0xf] %v847
      %849 = vst [vmem:[%s819 + $0x28] sm:$0xf] %v565
      %v850 = vld [vmem:[%s819 + $0x2c] sm:$0x1]
      %v851 = vsel %vm828, %v566, %v850
      %852 = vst [vmem:[%s819 + $0x2c] sm:$0x1] %v851
      %v853 = vld [vmem:[%s819 + $0x30] sm:$0xf]
      %v854 = vsel %vm822, %v573, %v853
      %855 = vst [vmem:[%s819 + $0x30] sm:$0xf] %v854
      %856 = vst [vmem:[%s819 + $0x34] sm:$0xf] %v582
      %v857 = vld [vmem:[%s819 + $0x38] sm:$0x1]
      %v858 = vsel %vm828, %v583, %v857
      %859 = vst [vmem:[%s819 + $0x38] sm:$0x1] %v858
      %v860 = vld [vmem:[%s819 + $0x3c] sm:$0xf]
      %v861 = vsel %vm822, %v590, %v860
      %862 = vst [vmem:[%s819 + $0x3c] sm:$0xf] %v861
      %863 = vst [vmem:[%s819 + $0x40] sm:$0xf] %v599
      %v864 = vld [vmem:[%s819 + $0x44] sm:$0x1]
      %v865 = vsel %vm828, %v600, %v864
      %866 = vst [vmem:[%s819 + $0x44] sm:$0x1] %v865
      %v867 = vld [vmem:[%s819 + $0x48] sm:$0xf]
      %v868 = vsel %vm822, %v607, %v867
      %869 = vst [vmem:[%s819 + $0x48] sm:$0xf] %v868
      %870 = vst [vmem:[%s819 + $0x4c] sm:$0xf] %v616
      %v871 = vld [vmem:[%s819 + $0x50] sm:$0x1]
      %v872 = vsel %vm828, %v617, %v871
      %873 = vst [vmem:[%s819 + $0x50] sm:$0x1] %v872
      %v874 = vld [vmem:[%s819 + $0x54] sm:$0xf]
      %v875 = vsel %vm822, %v624, %v874
      %876 = vst [vmem:[%s819 + $0x54] sm:$0xf] %v875
      %877 = vst [vmem:[%s819 + $0x58] sm:$0xf] %v633
      %v878 = vld [vmem:[%s819 + $0x5c] sm:$0x1]
      %v879 = vsel %vm828, %v634, %v878
      %880 = vst [vmem:[%s819 + $0x5c] sm:$0x1] %v879
      %v881 = vld [vmem:[%s819 + $0x60] sm:$0xf]
      %v882 = vsel %vm822, %v641, %v881
      %883 = vst [vmem:[%s819 + $0x60] sm:$0xf] %v882
      %884 = vst [vmem:[%s819 + $0x64] sm:$0xf] %v650
      %v885 = vld [vmem:[%s819 + $0x68] sm:$0x1]
      %v886 = vsel %vm828, %v651, %v885
      %887 = vst [vmem:[%s819 + $0x68] sm:$0x1] %v886
      %v888 = vld [vmem:[%s819 + $0x6c] sm:$0xf]
      %v889 = vsel %vm822, %v658, %v888
      %890 = vst [vmem:[%s819 + $0x6c] sm:$0xf] %v889
      %891 = vst [vmem:[%s819 + $0x70] sm:$0xf] %v667
      %v892 = vld [vmem:[%s819 + $0x74] sm:$0x1]
      %v893 = vsel %vm828, %v668, %v892
      %894 = vst [vmem:[%s819 + $0x74] sm:$0x1] %v893
      %v895 = vld [vmem:[%s819 + $0x78] sm:$0xf]
      %v896 = vsel %vm822, %v675, %v895
      %897 = vst [vmem:[%s819 + $0x78] sm:$0xf] %v896
      %898 = vst [vmem:[%s819 + $0x7c] sm:$0xf] %v684
      %v899 = vld [vmem:[%s819 + $0x80] sm:$0x1]
      %v900 = vsel %vm828, %v685, %v899
      %901 = vst [vmem:[%s819 + $0x80] sm:$0x1] %v900
      %v902 = vld [vmem:[%s819 + $0x84] sm:$0xf]
      %v903 = vsel %vm822, %v692, %v902
      %904 = vst [vmem:[%s819 + $0x84] sm:$0xf] %v903
      %905 = vst [vmem:[%s819 + $0x88] sm:$0xf] %v701
      %v906 = vld [vmem:[%s819 + $0x8c] sm:$0x1]
      %v907 = vsel %vm828, %v702, %v906
      %908 = vst [vmem:[%s819 + $0x8c] sm:$0x1] %v907
      %v909 = vld [vmem:[%s819 + $0x90] sm:$0xf]
      %v910 = vsel %vm822, %v709, %v909
      %911 = vst [vmem:[%s819 + $0x90] sm:$0xf] %v910
      %912 = vst [vmem:[%s819 + $0x94] sm:$0xf] %v718
      %v913 = vld [vmem:[%s819 + $0x98] sm:$0x1]
      %v914 = vsel %vm828, %v719, %v913
      %915 = vst [vmem:[%s819 + $0x98] sm:$0x1] %v914
      %v916 = vld [vmem:[%s819 + $0x9c] sm:$0xf]
      %v917 = vsel %vm822, %v726, %v916
      %918 = vst [vmem:[%s819 + $0x9c] sm:$0xf] %v917
      %919 = vst [vmem:[%s819 + $0xa0] sm:$0xf] %v735
      %v920 = vld [vmem:[%s819 + $0xa4] sm:$0x1]
      %v921 = vsel %vm828, %v736, %v920
      %922 = vst [vmem:[%s819 + $0xa4] sm:$0x1] %v921
      %v923 = vld [vmem:[%s819 + $0xa8] sm:$0xf]
      %v924 = vsel %vm822, %v743, %v923
      %925 = vst [vmem:[%s819 + $0xa8] sm:$0xf] %v924
      %926 = vst [vmem:[%s819 + $0xac] sm:$0xf] %v752
      %v927 = vld [vmem:[%s819 + $0xb0] sm:$0x1]
      %v928 = vsel %vm828, %v753, %v927
      %929 = vst [vmem:[%s819 + $0xb0] sm:$0x1] %v928
      %v930 = vld [vmem:[%s819 + $0xb4] sm:$0xf]
      %v931 = vsel %vm822, %v760, %v930
      %932 = vst [vmem:[%s819 + $0xb4] sm:$0xf] %v931
      %933 = vst [vmem:[%s819 + $0xb8] sm:$0xf] %v769
      %v934 = vld [vmem:[%s819 + $0xbc] sm:$0x1]
      %v935 = vsel %vm828, %v770, %v934
      %936 = vst [vmem:[%s819 + $0xbc] sm:$0x1] %v935
      %p937 = scmp.lt.s32.totalorder %s14, 1
      %s938 = scalar_select %p937, %s14, 1
      %s939 = smul.addr %s938, 54
      %s940 = smul.addr %s939, 4
      %s941 = scalar_lea.vmem %s3, %s940
      // Predicated region
      $region33: #{bottleneck_forward.7} parent=31 // pred_check
        %p942 = pneg %p100
      $region34: #{bottleneck_forward.7} parent=31 // pred_check_branch
        %944 = sbr.rel (%p942) target = $region36
      $region35: #{bottleneck_forward.7} parent=31 // pred_region
        _
      $region36: #{bottleneck_forward.7} parent=31 // pred_fallthru
        _
    $region32: #{bottleneck_forward.7} parent=5 // pred_fallthru
      _
    %p945 = scmp.le.s32.totalorder 2, %s9
    // Predicated region
    $region37: #{bottleneck_forward.7} parent=5 // pred_check
      %p946 = pneg %p945
    $region38: #{bottleneck_forward.7} parent=5 // pred_check_branch
      %948 = sbr.rel (%p946) target = $region40
    $region39: #{bottleneck_forward.7} parent=5 // pred_region
      %s949 = ssub.s32 %s9, 2
      // Predicated region
      $region41: #{bottleneck_forward.7} parent=39 // pred_check
        %p950 = pneg %p106
      $region42: #{bottleneck_forward.7} parent=39 // pred_check_branch
        %952 = sbr.rel (%p950) target = $region44
      $region43: #{bottleneck_forward.7} parent=39 // pred_region
        %p953 = scmp.lt.s32.totalorder %s15, 1
        %s954 = scalar_select %p953, %s15, 1
        %s955 = smul.addr %s954, 54
        %s956 = smul.addr %s955, 4
        %s957 = scalar_lea.vmem %s3, %s956
      $region44: #{bottleneck_forward.7} parent=39 // pred_fallthru
        _
    $region40: #{bottleneck_forward.7} parent=5 // pred_fallthru
      _
  $region6: #{bottleneck_forward.7} parent=0 // loop_footer
    %s13 = sadd.s32 1, %s9
  $region7: #{bottleneck_forward.7} parent=0 // loop_footer_branch
    %8 = sbr.rel target = $region3
  $region8: #{bottleneck_forward.7} parent=0 // loop_exit
    _

// kernel: bottleneck_forward.9
$region0: #{bottleneck_forward.9}
  #allocation0 [shape = 'u32[]', space=smem, size = 0x4, offset = 0x4, fixed_abs, tag = 'smem constant byte address 0x4 - core index']
  #allocation1 [shape = 'u32[144,128]{1,0:T(1,128)}', space=vmem, size = 0x12000, scoped, tag = 'internal scratch']
  %s0 = inlined_call_operand.vmem [shape: bf16[128,128], index: 0, kind: input, shape index: {}]
  %s1 = inlined_call_operand.vmem [shape: bf16[128,128], index: 1, kind: input, shape index: {}]
  %s2 = inlined_call_operand.vmem [shape: f32[1,128], index: 2, kind: input, shape index: {}]
  %s3 = inlined_call_operand.vmem [shape: f32[1,128], index: 3, kind: input, shape index: {}]
  %s4 = inlined_call_operand.vmem [shape: bf16[128,128], index: 4, kind: output, shape index: {0}]
  %s5 = inlined_call_operand.vmem [shape: f32[1,1,128], index: 5, kind: output, shape index: {1}]
  %s6 = inlined_call_operand.vmem [shape: f32[1,1,128], index: 6, kind: output, shape index: {2}]
  %7 = xla_tuple %s4, %s5, %s6
  %s8 = sld [smem:[#allocation0]]
  $region42: #{bottleneck_forward.9} parent=0
    _
  %s10 = ssub.s32 1, %s8
  %s11 = scalar_select 0, %s10, %s8
  // Predicated region
  $region2: #{bottleneck_forward.9} parent=0 // pred_check
    _
  $region3: #{bottleneck_forward.9} parent=0 // pred_check_branch
    %13 = sbr.rel (0) target = $region5
  $region4: #{bottleneck_forward.9} parent=0 // pred_region
    _
  $region5: #{bottleneck_forward.9} parent=0 // pred_fallthru
    _
  // Predicated region
  $region6: #{bottleneck_forward.9} parent=0 // pred_check
    _
  $region7: #{bottleneck_forward.9} parent=0 // pred_check_branch
    %15 = sbr.rel (0) target = $region9
  $region8: #{bottleneck_forward.9} parent=0 // pred_region
    _
  $region9: #{bottleneck_forward.9} parent=0 // pred_fallthru
    _
  // Predicated region
  $region10: #{bottleneck_forward.9} parent=0 // pred_check
    _
  $region11: #{bottleneck_forward.9} parent=0 // pred_check_branch
    %17 = sbr.rel (0) target = $region13
  $region12: #{bottleneck_forward.9} parent=0 // pred_region
    _
  $region13: #{bottleneck_forward.9} parent=0 // pred_fallthru
    _
  // Predicated region
  $region14: #{bottleneck_forward.9} parent=0 // pred_check
    _
  $region15: #{bottleneck_forward.9} parent=0 // pred_check_branch
    %19 = sbr.rel (0) target = $region17
  $region16: #{bottleneck_forward.9} parent=0 // pred_region
    _
  $region17: #{bottleneck_forward.9} parent=0 // pred_fallthru
    _
  %v21 = vld [vmem:[%s0] sm:$0xf]
  %v22 = vld [vmem:[%s0 + $0x4] sm:$0xf]
  %v23 = vld [vmem:[%s0 + $0x8] sm:$0xf]
  %v24 = vld [vmem:[%s0 + $0xc] sm:$0xf]
  %v25 = vld [vmem:[%s0 + $0x10] sm:$0xf]
  %v26 = vld [vmem:[%s0 + $0x14] sm:$0xf]
  %v27 = vld [vmem:[%s0 + $0x18] sm:$0xf]
  %v28 = vld [vmem:[%s0 + $0x1c] sm:$0xf]
  %v29 = vld [vmem:[%s0 + $0x20] sm:$0xf]
  %v30 = vld [vmem:[%s0 + $0x24] sm:$0xf]
  %v31 = vld [vmem:[%s0 + $0x28] sm:$0xf]
  %v32 = vld [vmem:[%s0 + $0x2c] sm:$0xf]
  %v33 = vld [vmem:[%s0 + $0x30] sm:$0xf]
  %v34 = vld [vmem:[%s0 + $0x34] sm:$0xf]
  %v35 = vld [vmem:[%s0 + $0x38] sm:$0xf]
  %v36 = vld [vmem:[%s0 + $0x3c] sm:$0xf]
  %v37 = vunpack.c.l.bf16 %v21
  %v38 = vunpack.c.l.bf16 %v22
  %v39 = vunpack.c.l.bf16 %v23
  %v40 = vunpack.c.l.bf16 %v24
  %v41 = vunpack.c.l.bf16 %v25
  %v42 = vunpack.c.l.bf16 %v26
  %v43 = vunpack.c.l.bf16 %v27
  %v44 = vunpack.c.l.bf16 %v28
  %v45 = vunpack.c.l.bf16 %v29
  %v46 = vunpack.c.l.bf16 %v30
  %v47 = vunpack.c.l.bf16 %v31
  %v48 = vunpack.c.l.bf16 %v32
  %v49 = vunpack.c.l.bf16 %v33
  %v50 = vunpack.c.l.bf16 %v34
  %v51 = vunpack.c.l.bf16 %v35
  %v52 = vunpack.c.l.bf16 %v36
  %v53 = vld [vmem:[%s2] sm:$0x1]
  %v55 = vlaneseq
  %v56 = vshrl.u32 %v55, 7
  %v57 = vsub.s32 0, %v56
  %v58 = vrot.slane %v53, %v57
  %v60 = vmul.f32 %v37, %v58
  %v61 = vmul.f32 %v38, %v58
  %v62 = vmul.f32 %v39, %v58
  %v63 = vmul.f32 %v40, %v58
  %v64 = vmul.f32 %v41, %v58
  %v65 = vmul.f32 %v42, %v58
  %v66 = vmul.f32 %v43, %v58
  %v67 = vmul.f32 %v44, %v58
  %v68 = vmul.f32 %v45, %v58
  %v69 = vmul.f32 %v46, %v58
  %v70 = vmul.f32 %v47, %v58
  %v71 = vmul.f32 %v48, %v58
  %v72 = vmul.f32 %v49, %v58
  %v73 = vmul.f32 %v50, %v58
  %v74 = vmul.f32 %v51, %v58
  %v75 = vmul.f32 %v52, %v58
  %v76 = vld [vmem:[%s3] sm:$0x1]
  %v78 = vlaneseq
  %v79 = vshrl.u32 %v78, 7
  %v80 = vsub.s32 0, %v79
  %v81 = vrot.slane %v76, %v80
  %v83 = vadd.f32 %v60, %v81
  %v84 = vadd.f32 %v61, %v81
  %v85 = vadd.f32 %v62, %v81
  %v86 = vadd.f32 %v63, %v81
  %v87 = vadd.f32 %v64, %v81
  %v88 = vadd.f32 %v65, %v81
  %v89 = vadd.f32 %v66, %v81
  %v90 = vadd.f32 %v67, %v81
  %v91 = vadd.f32 %v68, %v81
  %v92 = vadd.f32 %v69, %v81
  %v93 = vadd.f32 %v70, %v81
  %v94 = vadd.f32 %v71, %v81
  %v95 = vadd.f32 %v72, %v81
  %v96 = vadd.f32 %v73, %v81
  %v97 = vadd.f32 %v74, %v81
  %v98 = vadd.f32 %v75, %v81
  %v99 = vmax.f32 %v83, 0.0
  %v100 = vmax.f32 %v84, 0.0
  %v101 = vmax.f32 %v85, 0.0
  %v102 = vmax.f32 %v86, 0.0
  %v103 = vmax.f32 %v87, 0.0
  %v104 = vmax.f32 %v88, 0.0
  %v105 = vmax.f32 %v89, 0.0
  %v106 = vmax.f32 %v90, 0.0
  %v107 = vmax.f32 %v91, 0.0
  %v108 = vmax.f32 %v92, 0.0
  %v109 = vmax.f32 %v93, 0.0
  %v110 = vmax.f32 %v94, 0.0
  %v111 = vmax.f32 %v95, 0.0
  %v112 = vmax.f32 %v96, 0.0
  %v113 = vmax.f32 %v97, 0.0
  %v114 = vmax.f32 %v98, 0.0
  %v115 = vpack.c.bf16 %v100, %v99
  %v116 = vpack.c.bf16 %v102, %v101
  %v117 = vpack.c.bf16 %v104, %v103
  %v118 = vpack.c.bf16 %v106, %v105
  %v119 = vpack.c.bf16 %v108, %v107
  %v120 = vpack.c.bf16 %v110, %v109
  %v121 = vpack.c.bf16 %v112, %v111
  %v122 = vpack.c.bf16 %v114, %v113
  %v123 = vld [vmem:[%s1] sm:$0xf]
  %v124 = vld [vmem:[%s1 + $0x4] sm:$0xf]
  %v125 = vld [vmem:[%s1 + $0x8] sm:$0xf]
  %v126 = vld [vmem:[%s1 + $0xc] sm:$0xf]
  %v127 = vld [vmem:[%s1 + $0x10] sm:$0xf]
  %v128 = vld [vmem:[%s1 + $0x14] sm:$0xf]
  %v129 = vld [vmem:[%s1 + $0x18] sm:$0xf]
  %v130 = vld [vmem:[%s1 + $0x1c] sm:$0xf]
  %v131 = vld [vmem:[%s1 + $0x20] sm:$0xf]
  %v132 = vld [vmem:[%s1 + $0x24] sm:$0xf]
  %v133 = vld [vmem:[%s1 + $0x28] sm:$0xf]
  %v134 = vld [vmem:[%s1 + $0x2c] sm:$0xf]
  %v135 = vld [vmem:[%s1 + $0x30] sm:$0xf]
  %v136 = vld [vmem:[%s1 + $0x34] sm:$0xf]
  %v137 = vld [vmem:[%s1 + $0x38] sm:$0xf]
  %v138 = vld [vmem:[%s1 + $0x3c] sm:$0xf]
  %v155 = vunpack.c.l.b16 %v123
  %v156 = vunpack.c.l.b16 %v124
  %v157 = vunpack.c.l.b16 %v125
  %v158 = vunpack.c.l.b16 %v126
  %v159 = vunpack.c.l.b16 %v127
  %v160 = vunpack.c.l.b16 %v128
  %v161 = vunpack.c.l.b16 %v129
  %v162 = vunpack.c.l.b16 %v130
  %v163 = vunpack.c.l.b16 %v131
  %v164 = vunpack.c.l.b16 %v132
  %v165 = vunpack.c.l.b16 %v133
  %v166 = vunpack.c.l.b16 %v134
  %v167 = vunpack.c.l.b16 %v135
  %v168 = vunpack.c.l.b16 %v136
  %v169 = vunpack.c.l.b16 %v137
  %v170 = vunpack.c.l.b16 %v138
  %v171 = vpack.c.b16 %v156, %v155
  %v172 = vpack.c.b16 %v158, %v157
  %v173 = vpack.c.b16 %v160, %v159
  %v174 = vpack.c.b16 %v162, %v161
  %v175 = vpack.c.b16 %v164, %v163
  %v176 = vpack.c.b16 %v166, %v165
  %v177 = vpack.c.b16 %v168, %v167
  %v178 = vpack.c.b16 %v170, %v169
  %187 = vmatprep.subr.bf16.mxu0 0
  %188 = vmatpush1.bf16.msra.mxu0 %v171
  %189 = vmatprep.subr.bf16.mxu0 0
  %190 = vmatpush1.bf16.msra.mxu0 %v172
  %191 = vmatprep.subr.bf16.mxu0 0
  %192 = vmatpush1.bf16.msra.mxu0 %v173
  %193 = vmatprep.subr.bf16.mxu0 0
  %194 = vmatpush1.bf16.msra.mxu0 %v174
  %195 = vmatprep.subr.bf16.mxu0 0
  %196 = vmatpush1.bf16.msra.mxu0 %v175
  %197 = vmatprep.subr.bf16.mxu0 0
  %198 = vmatpush1.bf16.msra.mxu0 %v176
  %199 = vmatprep.subr.bf16.mxu0 0
  %200 = vmatpush1.bf16.msra.mxu0 %v177
  %201 = vmatprep.subr.bf16.mxu0 0
  %202 = vmatpush1.bf16.msra.mxu0 %v178
  %203 = vmatprep.subr.bf16.mxu0 0
  %204 = vmatpush1.bf16.msra.mxu0 0
  %205 = vmatprep.subr.bf16.mxu0 0
  %206 = vmatpush1.bf16.msra.mxu0 0
  %207 = vmatprep.subr.bf16.mxu0 0
  %208 = vmatpush1.bf16.msra.mxu0 0
  %209 = vmatprep.subr.bf16.mxu0 0
  %210 = vmatpush1.bf16.msra.mxu0 0
  %211 = vmatprep.subr.bf16.mxu0 0
  %212 = vmatpush1.bf16.msra.mxu0 0
  %213 = vmatprep.subr.bf16.mxu0 0
  %214 = vmatpush1.bf16.msra.mxu0 0
  %215 = vmatprep.subr.bf16.mxu0 0
  %216 = vmatpush1.bf16.msra.mxu0 0
  %217 = vmatprep.subr.bf16.mxu0 0
  %218 = vmatpush1.bf16.msra.mxu0 0
  %219 = vmatprep.mubr.bf16.mxu0 0
  %220 = vmatmul.mubr.bf16.gmra.mrb[0].mxu0 %v115
  %v221 = vpop.f32.mrb[0].mxu0
  %v222 = vadd.f32 0.0, %v221
  %v223 = vpop.f32.mrb[0].mxu0
  %v224 = vpop.f32.mrb[0].mxu0
  %v225 = vadd.f32 0.0, %v224
  %v226 = vpop.f32.mrb[0].mxu0
  %227 = vmatprep.mubr.bf16.mxu0 0
  %228 = vmatmul.mubr.bf16.gmra.mrb[0].mxu0 %v116
  %v229 = vpop.f32.mrb[0].mxu0
  %v230 = vadd.f32 0.0, %v229
  %v231 = vpop.f32.mrb[0].mxu0
  %v232 = vpop.f32.mrb[0].mxu0
  %v233 = vadd.f32 0.0, %v232
  %v234 = vpop.f32.mrb[0].mxu0
  %235 = vmatprep.mubr.bf16.mxu0 0
  %236 = vmatmul.mubr.bf16.gmra.mrb[0].mxu0 %v117
  %v237 = vpop.f32.mrb[0].mxu0
  %v238 = vadd.f32 0.0, %v237
  %v239 = vpop.f32.mrb[0].mxu0
  %v240 = vpop.f32.mrb[0].mxu0
  %v241 = vadd.f32 0.0, %v240
  %v242 = vpop.f32.mrb[0].mxu0
  %243 = vmatprep.mubr.bf16.mxu0 0
  %244 = vmatmul.mubr.bf16.gmra.mrb[0].mxu0 %v118
  %v245 = vpop.f32.mrb[0].mxu0
  %v246 = vadd.f32 0.0, %v245
  %v247 = vpop.f32.mrb[0].mxu0
  %v248 = vpop.f32.mrb[0].mxu0
  %v249 = vadd.f32 0.0, %v248
  %v250 = vpop.f32.mrb[0].mxu0
  %251 = vmatprep.mubr.bf16.mxu0 0
  %252 = vmatmul.mubr.bf16.gmra.mrb[0].mxu0 %v119
  %v253 = vpop.f32.mrb[0].mxu0
  %v254 = vadd.f32 0.0, %v253
  %v255 = vpop.f32.mrb[0].mxu0
  %v256 = vpop.f32.mrb[0].mxu0
  %v257 = vadd.f32 0.0, %v256
  %v258 = vpop.f32.mrb[0].mxu0
  %259 = vmatprep.mubr.bf16.mxu0 0
  %260 = vmatmul.mubr.bf16.gmra.mrb[0].mxu0 %v120
  %v261 = vpop.f32.mrb[0].mxu0
  %v262 = vadd.f32 0.0, %v261
  %v263 = vpop.f32.mrb[0].mxu0
  %v264 = vpop.f32.mrb[0].mxu0
  %v265 = vadd.f32 0.0, %v264
  %v266 = vpop.f32.mrb[0].mxu0
  %267 = vmatprep.mubr.bf16.mxu0 0
  %268 = vmatmul.mubr.bf16.gmra.mrb[0].mxu0 %v121
  %v269 = vpop.f32.mrb[0].mxu0
  %v270 = vadd.f32 0.0, %v269
  %v271 = vpop.f32.mrb[0].mxu0
  %v272 = vpop.f32.mrb[0].mxu0
  %v273 = vadd.f32 0.0, %v272
  %v274 = vpop.f32.mrb[0].mxu0
  %275 = vmatprep.mubr.bf16.mxu0 0
  %276 = vmatmul.mubr.bf16.gmra.mrb[0].mxu0 %v122
  %v277 = vpop.f32.mrb[0].mxu0
  %v278 = vadd.f32 0.0, %v277
  %v279 = vpop.f32.mrb[0].mxu0
  %v280 = vpop.f32.mrb[0].mxu0
  %v281 = vadd.f32 0.0, %v280
  %v282 = vpop.f32.mrb[0].mxu0
  %283 = vdwg.mxu0
  %v284 = vpack.c.bf16 %v225, %v222
  %v285 = vpack.c.bf16 %v233, %v230
  %v286 = vpack.c.bf16 %v241, %v238
  %v287 = vpack.c.bf16 %v249, %v246
  %v288 = vpack.c.bf16 %v257, %v254
  %v289 = vpack.c.bf16 %v265, %v262
  %v290 = vpack.c.bf16 %v273, %v270
  %v291 = vpack.c.bf16 %v281, %v278
  %v300 = vunpack.c.l.b16 %v284
  %v301 = vunpack.c.h.b16 %v284
  %v302 = vunpack.c.l.b16 %v285
  %v303 = vunpack.c.h.b16 %v285
  %v304 = vunpack.c.l.b16 %v286
  %v305 = vunpack.c.h.b16 %v286
  %v306 = vunpack.c.l.b16 %v287
  %v307 = vunpack.c.h.b16 %v287
  %v308 = vunpack.c.l.b16 %v288
  %v309 = vunpack.c.h.b16 %v288
  %v310 = vunpack.c.l.b16 %v289
  %v311 = vunpack.c.h.b16 %v289
  %v312 = vunpack.c.l.b16 %v290
  %v313 = vunpack.c.h.b16 %v290
  %v314 = vunpack.c.l.b16 %v291
  %v315 = vunpack.c.h.b16 %v291
  %v316 = vpack.c.b16 %v300, %v300
  %v317 = vpack.c.b16 %v301, %v301
  %v318 = vpack.c.b16 %v302, %v302
  %v319 = vpack.c.b16 %v303, %v303
  %v320 = vpack.c.b16 %v304, %v304
  %v321 = vpack.c.b16 %v305, %v305
  %v322 = vpack.c.b16 %v306, %v306
  %v323 = vpack.c.b16 %v307, %v307
  %v324 = vpack.c.b16 %v308, %v308
  %v325 = vpack.c.b16 %v309, %v309
  %v326 = vpack.c.b16 %v310, %v310
  %v327 = vpack.c.b16 %v311, %v311
  %v328 = vpack.c.b16 %v312, %v312
  %v329 = vpack.c.b16 %v313, %v313
  %v330 = vpack.c.b16 %v314, %v314
  %v331 = vpack.c.b16 %v315, %v315
  %348 = vst [vmem:[%s4] sm:$0xf] %v316
  %349 = vst [vmem:[%s4 + $0x4] sm:$0xf] %v317
  %350 = vst [vmem:[%s4 + $0x8] sm:$0xf] %v318
  %351 = vst [vmem:[%s4 + $0xc] sm:$0xf] %v319
  %352 = vst [vmem:[%s4 + $0x10] sm:$0xf] %v320
  %353 = vst [vmem:[%s4 + $0x14] sm:$0xf] %v321
  %354 = vst [vmem:[%s4 + $0x18] sm:$0xf] %v322
  %355 = vst [vmem:[%s4 + $0x1c] sm:$0xf] %v323
  %356 = vst [vmem:[%s4 + $0x20] sm:$0xf] %v324
  %357 = vst [vmem:[%s4 + $0x24] sm:$0xf] %v325
  %358 = vst [vmem:[%s4 + $0x28] sm:$0xf] %v326
  %359 = vst [vmem:[%s4 + $0x2c] sm:$0xf] %v327
  %360 = vst [vmem:[%s4 + $0x30] sm:$0xf] %v328
  %361 = vst [vmem:[%s4 + $0x34] sm:$0xf] %v329
  %362 = vst [vmem:[%s4 + $0x38] sm:$0xf] %v330
  %363 = vst [vmem:[%s4 + $0x3c] sm:$0xf] %v331
  %v364 = vadd.f32 %v222, %v225
  %v365 = vadd.f32 %v364, %v230
  %v366 = vadd.f32 %v365, %v233
  %v367 = vadd.f32 %v366, %v238
  %v368 = vadd.f32 %v367, %v241
  %v369 = vadd.f32 %v368, %v246
  %v370 = vadd.f32 %v369, %v249
  %v371 = vadd.f32 %v370, %v254
  %v372 = vadd.f32 %v371, %v257
  %v373 = vadd.f32 %v372, %v262
  %v374 = vadd.f32 %v373, %v265
  %v375 = vadd.f32 %v374, %v270
  %v376 = vadd.f32 %v375, %v273
  %v377 = vadd.f32 %v376, %v278
  %v378 = vadd.f32 %v377, %v281
  %v379 = vrot.slane %v378, 4
  %v380 = vadd.f32 %v378, %v379
  %v381 = vrot.slane %v380, 2
  %v382 = vadd.f32 %v380, %v381
  %v383 = vrot.slane %v382, 1
  %v384 = vadd.f32 %v382, %v383
  %385 = vst [vmem:[%s5] sm:$0x1] %v384
  %v386 = vmul.f32 %v222, %v222
  %v387 = vmul.f32 %v225, %v225
  %v388 = vmul.f32 %v230, %v230
  %v389 = vmul.f32 %v233, %v233
  %v390 = vmul.f32 %v238, %v238
  %v391 = vmul.f32 %v241, %v241
  %v392 = vmul.f32 %v246, %v246
  %v393 = vmul.f32 %v249, %v249
  %v394 = vmul.f32 %v254, %v254
  %v395 = vmul.f32 %v257, %v257
  %v396 = vmul.f32 %v262, %v262
  %v397 = vmul.f32 %v265, %v265
  %v398 = vmul.f32 %v270, %v270
  %v399 = vmul.f32 %v273, %v273
  %v400 = vmul.f32 %v278, %v278
  %v401 = vmul.f32 %v281, %v281
  %v402 = vadd.f32 %v386, %v387
  %v403 = vadd.f32 %v402, %v388
  %v404 = vadd.f32 %v403, %v389
  %v405 = vadd.f32 %v404, %v390
  %v406 = vadd.f32 %v405, %v391
  %v407 = vadd.f32 %v406, %v392
  %v408 = vadd.f32 %v407, %v393
  %v409 = vadd.f32 %v408, %v394
  %v410 = vadd.f32 %v409, %v395
  %v411 = vadd.f32 %v410, %v396
  %v412 = vadd.f32 %v411, %v397
  %v413 = vadd.f32 %v412, %v398
  %v414 = vadd.f32 %v413, %v399
  %v415 = vadd.f32 %v414, %v400
  %v416 = vadd.f32 %v415, %v401
  %v417 = vrot.slane %v416, 4
  %v418 = vadd.f32 %v416, %v417
  %v419 = vrot.slane %v418, 2
  %v420 = vadd.f32 %v418, %v419
  %v421 = vrot.slane %v420, 1
  %v422 = vadd.f32 %v420, %v421
  %423 = vst [vmem:[%s6] sm:$0x1] %v422
  // Predicated region
  $region18: #{bottleneck_forward.9} parent=0 // pred_check
    _
  $region19: #{bottleneck_forward.9} parent=0 // pred_check_branch
    %425 = sbr.rel (0) target = $region21
  $region20: #{bottleneck_forward.9} parent=0 // pred_region
    _
  $region21: #{bottleneck_forward.9} parent=0 // pred_fallthru
    _
  // Predicated region
  $region22: #{bottleneck_forward.9} parent=0 // pred_check
    _
  $region23: #{bottleneck_forward.9} parent=0 // pred_check_branch
    %427 = sbr.rel (0) target = $region25
  $region24: #{bottleneck_forward.9} parent=0 // pred_region
    _
  $region25: #{bottleneck_forward.9} parent=0 // pred_fallthru
    _
  // Predicated region
  $region26: #{bottleneck_forward.9} parent=0 // pred_check
    _
  $region27: #{bottleneck_forward.9} parent=0 // pred_check_branch
    %429 = sbr.rel (0) target = $region29
  $region28: #{bottleneck_forward.9} parent=0 // pred_region
    _
  $region29: #{bottleneck_forward.9} parent=0 // pred_fallthru
    _
  // Predicated region
  $region30: #{bottleneck_forward.9} parent=0 // pred_check
    _
  $region31: #{bottleneck_forward.9} parent=0 // pred_check_branch
    %431 = sbr.rel (0) target = $region33
  $region32: #{bottleneck_forward.9} parent=0 // pred_region
    _
  $region33: #{bottleneck_forward.9} parent=0 // pred_fallthru
    _
  // Predicated region
  $region34: #{bottleneck_forward.9} parent=0 // pred_check
    _
  $region35: #{bottleneck_forward.9} parent=0 // pred_check_branch
    %433 = sbr.rel (0) target = $region37
  $region36: #{bottleneck_forward.9} parent=0 // pred_region
    _
  $region37: #{bottleneck_forward.9} parent=0 // pred_fallthru
    _
  // Predicated region
  $region38: #{bottleneck_forward.9} parent=0 // pred_check
    _
  $region39: #{bottleneck_forward.9} parent=0 // pred_check_branch
    %435 = sbr.rel (0) target = $region41
  $region40: #{bottleneck_forward.9} parent=0 // pred_region
    _
  $region41: #{bottleneck_forward.9} parent=0 // pred_fallthru
    _

// kernel: bottleneck_forward.8
$region0: #{bottleneck_forward.8}
  #allocation0 [shape = 'u32[]', space=smem, size = 0x4, offset = 0x4, fixed_abs, tag = 'smem constant byte address 0x4 - core index']
  #allocation1 [shape = 'u32[144,128]{1,0:T(1,128)}', space=vmem, size = 0x12000, scoped, tag = 'internal scratch']
  %s0 = inlined_call_operand.vmem [shape: bf16[2,36,9,128], index: 0, kind: input, shape index: {}]
  %s1 = inlined_call_operand.vmem [shape: bf16[9,128,128], index: 1, kind: input, shape index: {}]
  %s2 = inlined_call_operand.vmem [shape: bf16[2,64,128], index: 2, kind: output, shape index: {0}]
  %s3 = inlined_call_operand.vmem [shape: f32[2,1,128], index: 3, kind: output, shape index: {1}]
  %s4 = inlined_call_operand.vmem [shape: f32[2,1,128], index: 4, kind: output, shape index: {2}]
  %5 = xla_tuple %s2, %s3, %s4
  %s6 = sld [smem:[#allocation0]]
  $region57: #{bottleneck_forward.8} parent=0
    _
  %s8 = ssub.s32 1, %s6
  %s9 = scalar_select 0, %s8, %s6
  loop: start=0, step=1, limit=4
  $region2: #{bottleneck_forward.8} parent=0 // loop_pre_header
    _
  $region3: #{bottleneck_forward.8} parent=0 // loop_header
    %s11 = sphi 0, %s15
    %p12 = scmp.ge.s32.totalorder %s11, 4
    %s21 = sphi 0, %s23
    %s24 = sphi 0, %s21
    %s25 = sphi 0, %s24
    %s41 = sphi 0, %s25
    %s45 = sphi 0, %s45
    %s47 = sphi 0, %s45
    %s48 = sphi 0, %s47
    %s62 = sphi 0, %s48
    %s68 = sphi 0, %s70
    %s71 = sphi 0, %s68
    %s72 = sphi 0, %s71
    %s88 = sphi 0, %s72
    %s94 = sphi 0, %s96
    %s97 = sphi 0, %s94
    %s98 = sphi 0, %s97
    %s114 = sphi 0, %s98
    %s120 = sphi 0, %s122
    %s123 = sphi 0, %s120
    %s124 = sphi 0, %s123
    %s140 = sphi 0, %s124
  $region4: #{bottleneck_forward.8} parent=0 // loop_header_branch
    %14 = sbr.rel (%p12) target = $region8
  $region5: #{bottleneck_forward.8} parent=0 // loop_body
    %s16 = ssub.s32 %s11, 1
    %s17 = ssub.s32 %s11, 2
    %s18 = sadd.s32 %s11, 1
    %s19 = ssub.s32 %s11, %s18
    %p20 = scmp.eq.s32.totalorder %s19, 0
    %s22 = sadd.s32 %s21, 1
    %s23 = scalar_select %p20, %s21, %s22
    %p26 = pneg %p20
    %p27 = scmp.eq.s32.totalorder %s11, 1
    %p28 = por %p26, %p27
    %p29 = scmp.ne.s32.totalorder %s21, %s24
    %p30 = scmp.eq.s32.totalorder %s11, 0
    %p31 = por %p29, %p30
    %p32 = scmp.ne.s32.totalorder %s21, %s24
    %p33 = scmp.eq.s32.totalorder %s16, 1
    %p34 = por %p32, %p33
    %p35 = scmp.ne.s32.totalorder %s24, %s25
    %p36 = scmp.eq.s32.totalorder %s16, 0
    %p37 = por %p35, %p36
    %p38 = scmp.ne.s32.totalorder %s24, %s25
    %p39 = scmp.eq.s32.totalorder %s17, 1
    %p40 = por %p38, %p39
    %p42 = scmp.ne.s32.totalorder %s25, %s41
    %p43 = scmp.eq.s32.totalorder %s17, 0
    %p44 = por %p42, %p43
    %s46 = sadd.s32 %s45, 1
    %p49 = scmp.eq.s32.totalorder %s11, 1
    %p50 = scmp.ne.s32.totalorder %s45, %s47
    %p51 = scmp.eq.s32.totalorder %s11, 0
    %p52 = por %p50, %p51
    %p53 = scmp.ne.s32.totalorder %s45, %s47
    %p54 = scmp.eq.s32.totalorder %s16, 1
    %p55 = por %p53, %p54
    %p56 = scmp.ne.s32.totalorder %s47, %s48
    %p57 = scmp.eq.s32.totalorder %s16, 0
    %p58 = por %p56, %p57
    %p59 = scmp.ne.s32.totalorder %s47, %s48
    %p60 = scmp.eq.s32.totalorder %s17, 1
    %p61 = por %p59, %p60
    %p63 = scmp.ne.s32.totalorder %s48, %s62
    %p64 = scmp.eq.s32.totalorder %s17, 0
    %p65 = por %p63, %p64
    %s66 = ssub.s32 %s11, %s18
    %p67 = scmp.eq.s32.totalorder %s66, 0
    %s69 = sadd.s32 %s68, 1
    %s70 = scalar_select %p67, %s68, %s69
    %p73 = pneg %p67
    %p74 = scmp.eq.s32.totalorder %s11, 1
    %p75 = por %p73, %p74
    %p76 = scmp.ne.s32.totalorder %s68, %s71
    %p77 = scmp.eq.s32.totalorder %s11, 0
    %p78 = por %p76, %p77
    %p79 = scmp.ne.s32.totalorder %s68, %s71
    %p80 = scmp.eq.s32.totalorder %s16, 1
    %p81 = por %p79, %p80
    %p82 = scmp.ne.s32.totalorder %s71, %s72
    %p83 = scmp.eq.s32.totalorder %s16, 0
    %p84 = por %p82, %p83
    %p85 = scmp.ne.s32.totalorder %s71, %s72
    %p86 = scmp.eq.s32.totalorder %s17, 1
    %p87 = por %p85, %p86
    %p89 = scmp.ne.s32.totalorder %s72, %s88
    %p90 = scmp.eq.s32.totalorder %s17, 0
    %p91 = por %p89, %p90
    %s92 = ssub.s32 %s11, %s18
    %p93 = scmp.eq.s32.totalorder %s92, 0
    %s95 = sadd.s32 %s94, 1
    %s96 = scalar_select %p93, %s94, %s95
    %p99 = pneg %p93
    %p100 = scmp.eq.s32.totalorder %s11, 1
    %p101 = por %p99, %p100
    %p102 = scmp.ne.s32.totalorder %s94, %s97
    %p103 = scmp.eq.s32.totalorder %s11, 0
    %p104 = por %p102, %p103
    %p105 = scmp.ne.s32.totalorder %s94, %s97
    %p106 = scmp.eq.s32.totalorder %s16, 1
    %p107 = por %p105, %p106
    %p108 = scmp.ne.s32.totalorder %s97, %s98
    %p109 = scmp.eq.s32.totalorder %s16, 0
    %p110 = por %p108, %p109
    %p111 = scmp.ne.s32.totalorder %s97, %s98
    %p112 = scmp.eq.s32.totalorder %s17, 1
    %p113 = por %p111, %p112
    %p115 = scmp.ne.s32.totalorder %s98, %s114
    %p116 = scmp.eq.s32.totalorder %s17, 0
    %p117 = por %p115, %p116
    %s118 = ssub.s32 %s11, %s18
    %p119 = scmp.eq.s32.totalorder %s118, 0
    %s121 = sadd.s32 %s120, 1
    %s122 = scalar_select %p119, %s120, %s121
    %p125 = pneg %p119
    %p126 = scmp.eq.s32.totalorder %s11, 1
    %p127 = por %p125, %p126
    %p128 = scmp.ne.s32.totalorder %s120, %s123
    %p129 = scmp.eq.s32.totalorder %s11, 0
    %p130 = por %p128, %p129
    %p131 = scmp.ne.s32.totalorder %s120, %s123
    %p132 = scmp.eq.s32.totalorder %s16, 1
    %p133 = por %p131, %p132
    %p134 = scmp.ne.s32.totalorder %s123, %s124
    %p135 = scmp.eq.s32.totalorder %s16, 0
    %p136 = por %p134, %p135
    %p137 = scmp.ne.s32.totalorder %s123, %s124
    %p138 = scmp.eq.s32.totalorder %s17, 1
    %p139 = por %p137, %p138
    %p141 = scmp.ne.s32.totalorder %s124, %s140
    %p142 = scmp.eq.s32.totalorder %s17, 0
    %p143 = por %p141, %p142
    %p144 = scmp.le.s32.totalorder 1, %s11
    %p145 = scmp.lt.s32.totalorder %s11, 3
    %p146 = pnand %p144, %p145
    %p147 = pneg %p146
    // Predicated region
    $region9: #{bottleneck_forward.8} parent=5 // pred_check
      _
    $region10: #{bottleneck_forward.8} parent=5 // pred_check_branch
      %149 = sbr.rel (%p146) target = $region12
    $region11: #{bottleneck_forward.8} parent=5 // pred_region
      %s150 = ssub.s32 %s11, 1
      // Predicated region
      $region13: #{bottleneck_forward.8} parent=11 // pred_check
        %p151 = pneg %p58
      $region14: #{bottleneck_forward.8} parent=11 // pred_check_branch
        %153 = sbr.rel (%p151) target = $region16
      $region15: #{bottleneck_forward.8} parent=11 // pred_region
        _
      $region16: #{bottleneck_forward.8} parent=11 // pred_fallthru
        _
    $region12: #{bottleneck_forward.8} parent=5 // pred_fallthru
      _
    %p154 = scmp.lt.s32.totalorder %s11, 2
    // Predicated region
    $region17: #{bottleneck_forward.8} parent=5 // pred_check
      %p155 = pneg %p154
    $region18: #{bottleneck_forward.8} parent=5 // pred_check_branch
      %157 = sbr.rel (%p155) target = $region20
    $region19: #{bottleneck_forward.8} parent=5 // pred_region
      // Predicated region
      $region21: #{bottleneck_forward.8} parent=19 // pred_check
        %p158 = pneg %p31
      $region22: #{bottleneck_forward.8} parent=19 // pred_check_branch
        %160 = sbr.rel (%p158) target = $region24
      $region23: #{bottleneck_forward.8} parent=19 // pred_region
        %p161 = scmp.lt.s32.totalorder %s11, 1
        %s162 = scalar_select %p161, %s11, 1
        %s163 = smul.addr %s162, 72
        %s164 = smul.addr %s163, 4
        %s165 = scalar_lea.vmem %s0, %s164
      $region24: #{bottleneck_forward.8} parent=19 // pred_fallthru
        _
    $region20: #{bottleneck_forward.8} parent=5 // pred_fallthru
      _
    %p166 = scmp.le.s32.totalorder 1, %s11
    %p167 = scmp.lt.s32.totalorder %s11, 3
    %p168 = pnand %p166, %p167
    %p169 = pneg %p168
    // Predicated region
    $region25: #{bottleneck_forward.8} parent=5 // pred_check
      _
    $region26: #{bottleneck_forward.8} parent=5 // pred_check_branch
      %171 = sbr.rel (%p168) target = $region28
    $region27: #{bottleneck_forward.8} parent=5 // pred_region
      %s172 = ssub.s32 %s11, 1
      %p173 = scmp.lt.s32.totalorder %s16, 1
      %s174 = scalar_select %p173, %s16, 1
      %s175 = smul.addr %s174, 72
      %s176 = smul.addr %s175, 4
      %s177 = scalar_lea.vmem %s0, %s176
      %p178 = pneg %p37
      %p179 = pneg %p34
      %p180 = pneg %p58
      %p181 = pneg %p55
      %p182 = pneg %p84
      %p183 = pneg %p81
      %p184 = scmp.lt.s32.totalorder %s16, 1
      %s185 = scalar_select %p184, %s16, 1
      %s186 = smul.addr %s185, 8
      %s187 = smul.addr %s186, 4
      %s188 = scalar_lea.vmem %s2, %s187
      %p189 = pneg %p110
      %p190 = pneg %p107
      %p191 = scmp.lt.s32.totalorder %s16, 1
      %s192 = scalar_select %p191, %s16, 1
      %s193 = scalar_lea.vmem %s3, %s192
      %p194 = pneg %p136
      %p195 = pneg %p133
      %p196 = scmp.lt.s32.totalorder %s16, 1
      %s197 = scalar_select %p196, %s16, 1
      %s198 = scalar_lea.vmem %s4, %s197
      %p199 = scmp.lt.s32.totalorder %s16, 1
      %s200 = scalar_select %p199, %s16, 1
      %s201 = smul.addr %s200, 72
      %s202 = smul.addr %s201, 4
      %s203 = scalar_lea.vmem %s0, %s202
      %p204 = scmp.lt.s32.totalorder %s16, 1
      %s205 = scalar_select %p204, %s16, 1
      %s206 = smul.addr %s205, 8
      %s207 = smul.addr %s206, 4
      %s208 = scalar_lea.vmem %s2, %s207
      %p209 = scmp.lt.s32.totalorder %s16, 1
      %s210 = scalar_select %p209, %s16, 1
      %s211 = scalar_lea.vmem %s3, %s210
      %p212 = scmp.lt.s32.totalorder %s16, 1
      %s213 = scalar_select %p212, %s16, 1
      %s214 = scalar_lea.vmem %s4, %s213
      %v216 = vld [vmem:[%s203] sm:$0xf]
      %v217 = vld [vmem:[%s203 + $0x8] sm:$0xf]
      %v218 = vld [vmem:[%s203 + $0x10] sm:$0xf]
      %v219 = vld [vmem:[%s203 + $0x18] sm:$0xf]
      %v220 = vld [vmem:[%s203 + $0x20] sm:$0xf]
      %v221 = vld [vmem:[%s203 + $0x28] sm:$0xf]
      %v222 = vld [vmem:[%s203 + $0x30] sm:$0xf]
      %v223 = vld [vmem:[%s203 + $0x38] sm:$0xf]
      %v224 = vld [vmem:[%s1] sm:$0xf]
      %v225 = vld [vmem:[%s1 + $0x4] sm:$0xf]
      %v226 = vld [vmem:[%s1 + $0x8] sm:$0xf]
      %v227 = vld [vmem:[%s1 + $0xc] sm:$0xf]
      %v228 = vld [vmem:[%s1 + $0x10] sm:$0xf]
      %v229 = vld [vmem:[%s1 + $0x14] sm:$0xf]
      %v230 = vld [vmem:[%s1 + $0x18] sm:$0xf]
      %v231 = vld [vmem:[%s1 + $0x1c] sm:$0xf]
      %v232 = vld [vmem:[%s1 + $0x20] sm:$0xf]
      %v233 = vld [vmem:[%s1 + $0x24] sm:$0xf]
      %v234 = vld [vmem:[%s1 + $0x28] sm:$0xf]
      %v235 = vld [vmem:[%s1 + $0x2c] sm:$0xf]
      %v236 = vld [vmem:[%s1 + $0x30] sm:$0xf]
      %v237 = vld [vmem:[%s1 + $0x34] sm:$0xf]
      %v238 = vld [vmem:[%s1 + $0x38] sm:$0xf]
      %v239 = vld [vmem:[%s1 + $0x3c] sm:$0xf]
      %s240 = scalar_lea.vmem %s203, 72
      %v241 = vld [vmem:[%s240] sm:$0xf]
      %v242 = vld [vmem:[%s240 + $0x8] sm:$0xf]
      %v243 = vld [vmem:[%s240 + $0x10] sm:$0xf]
      %v244 = vld [vmem:[%s240 + $0x18] sm:$0xf]
      %v245 = vld [vmem:[%s240 + $0x20] sm:$0xf]
      %v246 = vld [vmem:[%s240 + $0x28] sm:$0xf]
      %v247 = vld [vmem:[%s240 + $0x30] sm:$0xf]
      %v248 = vld [vmem:[%s240 + $0x38] sm:$0xf]
      %s249 = scalar_lea.vmem %s1, 64
      %v250 = vld [vmem:[%s249] sm:$0xf]
      %v251 = vld [vmem:[%s249 + $0x4] sm:$0xf]
      %v252 = vld [vmem:[%s249 + $0x8] sm:$0xf]
      %v253 = vld [vmem:[%s249 + $0xc] sm:$0xf]
      %v254 = vld [vmem:[%s249 + $0x10] sm:$0xf]
      %v255 = vld [vmem:[%s249 + $0x14] sm:$0xf]
      %v256 = vld [vmem:[%s249 + $0x18] sm:$0xf]
      %v257 = vld [vmem:[%s249 + $0x1c] sm:$0xf]
      %v258 = vld [vmem:[%s249 + $0x20] sm:$0xf]
      %v259 = vld [vmem:[%s249 + $0x24] sm:$0xf]
      %v260 = vld [vmem:[%s249 + $0x28] sm:$0xf]
      %v261 = vld [vmem:[%s249 + $0x2c] sm:$0xf]
      %v262 = vld [vmem:[%s249 + $0x30] sm:$0xf]
      %v263 = vld [vmem:[%s249 + $0x34] sm:$0xf]
      %v264 = vld [vmem:[%s249 + $0x38] sm:$0xf]
      %v265 = vld [vmem:[%s249 + $0x3c] sm:$0xf]
      %v274 = vunpack.c.l.b16 %v241
      %v275 = vunpack.c.l.b16 %v242
      %v276 = vunpack.c.l.b16 %v243
      %v277 = vunpack.c.l.b16 %v244
      %v278 = vunpack.c.l.b16 %v245
      %v279 = vunpack.c.l.b16 %v246
      %v280 = vunpack.c.l.b16 %v247
      %v281 = vunpack.c.l.b16 %v248
      %v282 = vpack.c.b16 %v275, %v274
      %v283 = vpack.c.b16 %v277, %v276
      %v284 = vpack.c.b16 %v279, %v278
      %v285 = vpack.c.b16 %v281, %v280
      %v306 = vunpack.c.l.b16 %v250
      %v307 = vunpack.c.l.b16 %v251
      %v308 = vunpack.c.l.b16 %v252
      %v309 = vunpack.c.l.b16 %v253
      %v310 = vunpack.c.l.b16 %v254
      %v311 = vunpack.c.l.b16 %v255
      %v312 = vunpack.c.l.b16 %v256
      %v313 = vunpack.c.l.b16 %v257
      %v314 = vunpack.c.l.b16 %v258
      %v315 = vunpack.c.l.b16 %v259
      %v316 = vunpack.c.l.b16 %v260
      %v317 = vunpack.c.l.b16 %v261
      %v318 = vunpack.c.l.b16 %v262
      %v319 = vunpack.c.l.b16 %v263
      %v320 = vunpack.c.l.b16 %v264
      %v321 = vunpack.c.l.b16 %v265
      %v322 = vpack.c.b16 %v307, %v306
      %v323 = vpack.c.b16 %v309, %v308
      %v324 = vpack.c.b16 %v311, %v310
      %v325 = vpack.c.b16 %v313, %v312
      %v326 = vpack.c.b16 %v315, %v314
      %v327 = vpack.c.b16 %v317, %v316
      %v328 = vpack.c.b16 %v319, %v318
      %v329 = vpack.c.b16 %v321, %v320
      %338 = vmatprep.subr.bf16.mxu0 0
      %339 = vmatpush1.bf16.msra.mxu0 %v322
      %340 = vmatprep.subr.bf16.mxu0 0
      %341 = vmatpush1.bf16.msra.mxu0 %v323
      %342 = vmatprep.subr.bf16.mxu0 0
      %343 = vmatpush1.bf16.msra.mxu0 %v324
      %344 = vmatprep.subr.bf16.mxu0 0
      %345 = vmatpush1.bf16.msra.mxu0 %v325
      %346 = vmatprep.subr.bf16.mxu0 0
      %347 = vmatpush1.bf16.msra.mxu0 %v326
      %348 = vmatprep.subr.bf16.mxu0 0
      %349 = vmatpush1.bf16.msra.mxu0 %v327
      %350 = vmatprep.subr.bf16.mxu0 0
      %351 = vmatpush1.bf16.msra.mxu0 %v328
      %352 = vmatprep.subr.bf16.mxu0 0
      %353 = vmatpush1.bf16.msra.mxu0 %v329
      %354 = vmatprep.subr.bf16.mxu0 0
      %355 = vmatpush1.bf16.msra.mxu0 0
      %356 = vmatprep.subr.bf16.mxu0 0
      %357 = vmatpush1.bf16.msra.mxu0 0
      %358 = vmatprep.subr.bf16.mxu0 0
      %359 = vmatpush1.bf16.msra.mxu0 0
      %360 = vmatprep.subr.bf16.mxu0 0
      %361 = vmatpush1.bf16.msra.mxu0 0
      %362 = vmatprep.subr.bf16.mxu0 0
      %363 = vmatpush1.bf16.msra.mxu0 0
      %364 = vmatprep.subr.bf16.mxu0 0
      %365 = vmatpush1.bf16.msra.mxu0 0
      %366 = vmatprep.subr.bf16.mxu0 0
      %367 = vmatpush1.bf16.msra.mxu0 0
      %368 = vmatprep.subr.bf16.mxu0 0
      %369 = vmatpush1.bf16.msra.mxu0 0
      %370 = vmatprep.mubr.bf16.mxu0 0
      %371 = vmatmul.mubr.bf16.gmra.mrb[0].mxu0 %v282
      %v372 = vpop.f32.mrb[0].mxu0
      %v373 = vadd.f32 0.0, %v372
      %v374 = vpop.f32.mrb[0].mxu0
      %v375 = vpop.f32.mrb[0].mxu0
      %v376 = vadd.f32 0.0, %v375
      %v377 = vpop.f32.mrb[0].mxu0
      %378 = vmatprep.mubr.bf16.mxu0 0
      %379 = vmatmul.mubr.bf16.gmra.mrb[0].mxu0 %v283
      %v380 = vpop.f32.mrb[0].mxu0
      %v381 = vadd.f32 0.0, %v380
      %v382 = vpop.f32.mrb[0].mxu0
      %v383 = vpop.f32.mrb[0].mxu0
      %v384 = vadd.f32 0.0, %v383
      %v385 = vpop.f32.mrb[0].mxu0
      %386 = vmatprep.mubr.bf16.mxu0 0
      %387 = vmatmul.mubr.bf16.gmra.mrb[0].mxu0 %v284
      %v388 = vpop.f32.mrb[0].mxu0
      %v389 = vadd.f32 0.0, %v388
      %v390 = vpop.f32.mrb[0].mxu0
      %v391 = vpop.f32.mrb[0].mxu0
      %v392 = vadd.f32 0.0, %v391
      %v393 = vpop.f32.mrb[0].mxu0
      %394 = vmatprep.mubr.bf16.mxu0 0
      %395 = vmatmul.mubr.bf16.gmra.mrb[0].mxu0 %v285
      %v396 = vpop.f32.mrb[0].mxu0
      %v397 = vadd.f32 0.0, %v396
      %v398 = vpop.f32.mrb[0].mxu0
      %v399 = vpop.f32.mrb[0].mxu0
      %v400 = vadd.f32 0.0, %v399
      %v401 = vpop.f32.mrb[0].mxu0
      %402 = vdwg.mxu0
      %v411 = vunpack.c.l.b16 %v216
      %v412 = vunpack.c.l.b16 %v217
      %v413 = vunpack.c.l.b16 %v218
      %v414 = vunpack.c.l.b16 %v219
      %v415 = vunpack.c.l.b16 %v220
      %v416 = vunpack.c.l.b16 %v221
      %v417 = vunpack.c.l.b16 %v222
      %v418 = vunpack.c.l.b16 %v223
      %v419 = vpack.c.b16 %v412, %v411
      %v420 = vpack.c.b16 %v414, %v413
      %v421 = vpack.c.b16 %v416, %v415
      %v422 = vpack.c.b16 %v418, %v417
      %v443 = vunpack.c.l.b16 %v224
      %v444 = vunpack.c.l.b16 %v225
      %v445 = vunpack.c.l.b16 %v226
      %v446 = vunpack.c.l.b16 %v227
      %v447 = vunpack.c.l.b16 %v228
      %v448 = vunpack.c.l.b16 %v229
      %v449 = vunpack.c.l.b16 %v230
      %v450 = vunpack.c.l.b16 %v231
      %v451 = vunpack.c.l.b16 %v232
      %v452 = vunpack.c.l.b16 %v233
      %v453 = vunpack.c.l.b16 %v234
      %v454 = vunpack.c.l.b16 %v235
      %v455 = vunpack.c.l.b16 %v236
      %v456 = vunpack.c.l.b16 %v237
      %v457 = vunpack.c.l.b16 %v238
      %v458 = vunpack.c.l.b16 %v239
      %v459 = vpack.c.b16 %v444, %v443
      %v460 = vpack.c.b16 %v446, %v445
      %v461 = vpack.c.b16 %v448, %v447
      %v462 = vpack.c.b16 %v450, %v449
      %v463 = vpack.c.b16 %v452, %v451
      %v464 = vpack.c.b16 %v454, %v453
      %v465 = vpack.c.b16 %v456, %v455
      %v466 = vpack.c.b16 %v458, %v457
      %475 = vmatprep.subr.bf16.mxu0 0
      %476 = vmatpush1.bf16.msra.mxu0 %v459
      %477 = vmatprep.subr.bf16.mxu0 0
      %478 = vmatpush1.bf16.msra.mxu0 %v460
      %479 = vmatprep.subr.bf16.mxu0 0
      %480 = vmatpush1.bf16.msra.mxu0 %v461
      %481 = vmatprep.subr.bf16.mxu0 0
      %482 = vmatpush1.bf16.msra.mxu0 %v462
      %483 = vmatprep.subr.bf16.mxu0 0
      %484 = vmatpush1.bf16.msra.mxu0 %v463
      %485 = vmatprep.subr.bf16.mxu0 0
      %486 = vmatpush1.bf16.msra.mxu0 %v464
      %487 = vmatprep.subr.bf16.mxu0 0
      %488 = vmatpush1.bf16.msra.mxu0 %v465
      %489 = vmatprep.subr.bf16.mxu0 0
      %490 = vmatpush1.bf16.msra.mxu0 %v466
      %491 = vmatprep.subr.bf16.mxu0 0
      %492 = vmatpush1.bf16.msra.mxu0 0
      %493 = vmatprep.subr.bf16.mxu0 0
      %494 = vmatpush1.bf16.msra.mxu0 0
      %495 = vmatprep.subr.bf16.mxu0 0
      %496 = vmatpush1.bf16.msra.mxu0 0
      %497 = vmatprep.subr.bf16.mxu0 0
      %498 = vmatpush1.bf16.msra.mxu0 0
      %499 = vmatprep.subr.bf16.mxu0 0
      %500 = vmatpush1.bf16.msra.mxu0 0
      %501 = vmatprep.subr.bf16.mxu0 0
      %502 = vmatpush1.bf16.msra.mxu0 0
      %503 = vmatprep.subr.bf16.mxu0 0
      %504 = vmatpush1.bf16.msra.mxu0 0
      %505 = vmatprep.subr.bf16.mxu0 0
      %506 = vmatpush1.bf16.msra.mxu0 0
      %507 = vmatprep.mubr.bf16.mxu0 0
      %508 = vmatmul.mubr.bf16.gmra.mrb[0].mxu0 %v419
      %v509 = vpop.f32.mrb[0].mxu0
      %v510 = vadd.f32 %v373, %v509
      %v511 = vpop.f32.mrb[0].mxu0
      %v512 = vpop.f32.mrb[0].mxu0
      %v513 = vadd.f32 %v376, %v512
      %v514 = vpop.f32.mrb[0].mxu0
      %515 = vmatprep.mubr.bf16.mxu0 0
      %516 = vmatmul.mubr.bf16.gmra.mrb[0].mxu0 %v420
      %v517 = vpop.f32.mrb[0].mxu0
      %v518 = vadd.f32 %v381, %v517
      %v519 = vpop.f32.mrb[0].mxu0
      %v520 = vpop.f32.mrb[0].mxu0
      %v521 = vadd.f32 %v384, %v520
      %v522 = vpop.f32.mrb[0].mxu0
      %523 = vmatprep.mubr.bf16.mxu0 0
      %524 = vmatmul.mubr.bf16.gmra.mrb[0].mxu0 %v421
      %v525 = vpop.f32.mrb[0].mxu0
      %v526 = vadd.f32 %v389, %v525
      %v527 = vpop.f32.mrb[0].mxu0
      %v528 = vpop.f32.mrb[0].mxu0
      %v529 = vadd.f32 %v392, %v528
      %v530 = vpop.f32.mrb[0].mxu0
      %531 = vmatprep.mubr.bf16.mxu0 0
      %532 = vmatmul.mubr.bf16.gmra.mrb[0].mxu0 %v422
      %v533 = vpop.f32.mrb[0].mxu0
      %v534 = vadd.f32 %v397, %v533
      %v535 = vpop.f32.mrb[0].mxu0
      %v536 = vpop.f32.mrb[0].mxu0
      %v537 = vadd.f32 %v400, %v536
      %v538 = vpop.f32.mrb[0].mxu0
      %539 = vdwg.mxu0
      %v540 = vld [vmem:[%s203] sm:$0xf]
      %v541 = vld [vmem:[%s203 + $0x4] sm:$0x1]
      %v542 = vld [vmem:[%s203 + $0x8] sm:$0xf]
      %v543 = vld [vmem:[%s203 + $0xc] sm:$0x1]
      %v544 = vld [vmem:[%s203 + $0x10] sm:$0xf]
      %v545 = vld [vmem:[%s203 + $0x14] sm:$0x1]
      %v546 = vld [vmem:[%s203 + $0x18] sm:$0xf]
      %v547 = vld [vmem:[%s203 + $0x1c] sm:$0x1]
      %v548 = vld [vmem:[%s203 + $0x20] sm:$0xf]
      %v549 = vld [vmem:[%s203 + $0x24] sm:$0x1]
      %v550 = vld [vmem:[%s203 + $0x28] sm:$0xf]
      %v551 = vld [vmem:[%s203 + $0x2c] sm:$0x1]
      %v552 = vld [vmem:[%s203 + $0x30] sm:$0xf]
      %v553 = vld [vmem:[%s203 + $0x34] sm:$0x1]
      %v554 = vld [vmem:[%s203 + $0x38] sm:$0xf]
      %v555 = vld [vmem:[%s203 + $0x3c] sm:$0x1]
      %vm556 = vsmask.f32 3328
      %vm557 = vsmask.f32 7440
      %vm558 = vmor %vm556, %vm557
      %v560 = vshrl.u32 %v540, 16
      %v562 = vrot.slane %v560, 4
      %v563 = vshll.u32 %v540, 16
      %v565 = vrot.slane %v563, 5
      %v566 = vor.u32 %v562, %v565
      %v567 = vrot.slane %v566, 4
      %v569 = vshll.u32 %v541, 16
      %v571 = vrot.slane %v569, 5
      %v572 = vsel %vm558, %v567, %v571
      %v574 = vshrl.u32 %v542, 16
      %v576 = vrot.slane %v574, 4
      %v577 = vshll.u32 %v542, 16
      %v579 = vrot.slane %v577, 5
      %v580 = vor.u32 %v576, %v579
      %v581 = vrot.slane %v580, 4
      %v583 = vshll.u32 %v543, 16
      %v585 = vrot.slane %v583, 5
      %v586 = vsel %vm558, %v581, %v585
      %v588 = vshrl.u32 %v544, 16
      %v590 = vrot.slane %v588, 4
      %v591 = vshll.u32 %v544, 16
      %v593 = vrot.slane %v591, 5
      %v594 = vor.u32 %v590, %v593
      %v595 = vrot.slane %v594, 4
      %v597 = vshll.u32 %v545, 16
      %v599 = vrot.slane %v597, 5
      %v600 = vsel %vm558, %v595, %v599
      %v602 = vshrl.u32 %v546, 16
      %v604 = vrot.slane %v602, 4
      %v605 = vshll.u32 %v546, 16
      %v607 = vrot.slane %v605, 5
      %v608 = vor.u32 %v604, %v607
      %v609 = vrot.slane %v608, 4
      %v611 = vshll.u32 %v547, 16
      %v613 = vrot.slane %v611, 5
      %v614 = vsel %vm558, %v609, %v613
      %v616 = vshrl.u32 %v548, 16
      %v618 = vrot.slane %v616, 4
      %v619 = vshll.u32 %v548, 16
      %v621 = vrot.slane %v619, 5
      %v622 = vor.u32 %v618, %v621
      %v623 = vrot.slane %v622, 4
      %v625 = vshll.u32 %v549, 16
      %v627 = vrot.slane %v625, 5
      %v628 = vsel %vm558, %v623, %v627
      %v630 = vshrl.u32 %v550, 16
      %v632 = vrot.slane %v630, 4
      %v633 = vshll.u32 %v550, 16
      %v635 = vrot.slane %v633, 5
      %v636 = vor.u32 %v632, %v635
      %v637 = vrot.slane %v636, 4
      %v639 = vshll.u32 %v551, 16
      %v641 = vrot.slane %v639, 5
      %v642 = vsel %vm558, %v637, %v641
      %v644 = vshrl.u32 %v552, 16
      %v646 = vrot.slane %v644, 4
      %v647 = vshll.u32 %v552, 16
      %v649 = vrot.slane %v647, 5
      %v650 = vor.u32 %v646, %v649
      %v651 = vrot.slane %v650, 4
      %v653 = vshll.u32 %v553, 16
      %v655 = vrot.slane %v653, 5
      %v656 = vsel %vm558, %v651, %v655
      %v658 = vshrl.u32 %v554, 16
      %v660 = vrot.slane %v658, 4
      %v661 = vshll.u32 %v554, 16
      %v663 = vrot.slane %v661, 5
      %v664 = vor.u32 %v660, %v663
      %v665 = vrot.slane %v664, 4
      %v667 = vshll.u32 %v555, 16
      %v669 = vrot.slane %v667, 5
      %v670 = vsel %vm558, %v665, %v669
      %s671 = scalar_lea.vmem %s1, 128
      %v672 = vld [vmem:[%s671] sm:$0xf]
      %v673 = vld [vmem:[%s671 + $0x4] sm:$0xf]
      %v674 = vld [vmem:[%s671 + $0x8] sm:$0xf]
      %v675 = vld [vmem:[%s671 + $0xc] sm:$0xf]
      %v676 = vld [vmem:[%s671 + $0x10] sm:$0xf]
      %v677 = vld [vmem:[%s671 + $0x14] sm:$0xf]
      %v678 = vld [vmem:[%s671 + $0x18] sm:$0xf]
      %v679 = vld [vmem:[%s671 + $0x1c] sm:$0xf]
      %v680 = vld [vmem:[%s671 + $0x20] sm:$0xf]
      %v681 = vld [vmem:[%s671 + $0x24] sm:$0xf]
      %v682 = vld [vmem:[%s671 + $0x28] sm:$0xf]
      %v683 = vld [vmem:[%s671 + $0x2c] sm:$0xf]
      %v684 = vld [vmem:[%s671 + $0x30] sm:$0xf]
      %v685 = vld [vmem:[%s671 + $0x34] sm:$0xf]
      %v686 = vld [vmem:[%s671 + $0x38] sm:$0xf]
      %v687 = vld [vmem:[%s671 + $0x3c] sm:$0xf]
      %v688 = vunpack.c.l.b16 %v572
      %v689 = vunpack.c.l.b16 %v586
      %v690 = vunpack.c.l.b16 %v600
      %v691 = vunpack.c.l.b16 %v614
      %v692 = vunpack.c.l.b16 %v628
      %v693 = vunpack.c.l.b16 %v642
      %v694 = vunpack.c.l.b16 %v656
      %v695 = vunpack.c.l.b16 %v670
      %v696 = vpack.c.b16 %v689, %v688
      %v697 = vpack.c.b16 %v691, %v690
      %v698 = vpack.c.b16 %v693, %v692
      %v699 = vpack.c.b16 %v695, %v694
      %v720 = vunpack.c.l.b16 %v672
      %v721 = vunpack.c.l.b16 %v673
      %v722 = vunpack.c.l.b16 %v674
      %v723 = vunpack.c.l.b16 %v675
      %v724 = vunpack.c.l.b16 %v676
      %v725 = vunpack.c.l.b16 %v677
      %v726 = vunpack.c.l.b16 %v678
      %v727 = vunpack.c.l.b16 %v679
      %v728 = vunpack.c.l.b16 %v680
      %v729 = vunpack.c.l.b16 %v681
      %v730 = vunpack.c.l.b16 %v682
      %v731 = vunpack.c.l.b16 %v683
      %v732 = vunpack.c.l.b16 %v684
      %v733 = vunpack.c.l.b16 %v685
      %v734 = vunpack.c.l.b16 %v686
      %v735 = vunpack.c.l.b16 %v687
      %v736 = vpack.c.b16 %v721, %v720
      %v737 = vpack.c.b16 %v723, %v722
      %v738 = vpack.c.b16 %v725, %v724
      %v739 = vpack.c.b16 %v727, %v726
      %v740 = vpack.c.b16 %v729, %v728
      %v741 = vpack.c.b16 %v731, %v730
      %v742 = vpack.c.b16 %v733, %v732
      %v743 = vpack.c.b16 %v735, %v734
      %752 = vmatprep.subr.bf16.mxu0 0
      %753 = vmatpush1.bf16.msra.mxu0 %v736
      %754 = vmatprep.subr.bf16.mxu0 0
      %755 = vmatpush1.bf16.msra.mxu0 %v737
      %756 = vmatprep.subr.bf16.mxu0 0
      %757 = vmatpush1.bf16.msra.mxu0 %v738
      %758 = vmatprep.subr.bf16.mxu0 0
      %759 = vmatpush1.bf16.msra.mxu0 %v739
      %760 = vmatprep.subr.bf16.mxu0 0
      %761 = vmatpush1.bf16.msra.mxu0 %v740
      %762 = vmatprep.subr.bf16.mxu0 0
      %763 = vmatpush1.bf16.msra.mxu0 %v741
      %764 = vmatprep.subr.bf16.mxu0 0
      %765 = vmatpush1.bf16.msra.mxu0 %v742
      %766 = vmatprep.subr.bf16.mxu0 0
      %767 = vmatpush1.bf16.msra.mxu0 %v743
      %768 = vmatprep.subr.bf16.mxu0 0
      %769 = vmatpush1.bf16.msra.mxu0 0
      %770 = vmatprep.subr.bf16.mxu0 0
      %771 = vmatpush1.bf16.msra.mxu0 0
      %772 = vmatprep.subr.bf16.mxu0 0
      %773 = vmatpush1.bf16.msra.mxu0 0
      %774 = vmatprep.subr.bf16.mxu0 0
      %775 = vmatpush1.bf16.msra.mxu0 0
      %776 = vmatprep.subr.bf16.mxu0 0
      %777 = vmatpush1.bf16.msra.mxu0 0
      %778 = vmatprep.subr.bf16.mxu0 0
      %779 = vmatpush1.bf16.msra.mxu0 0
      %780 = vmatprep.subr.bf16.mxu0 0
      %781 = vmatpush1.bf16.msra.mxu0 0
      %782 = vmatprep.subr.bf16.mxu0 0
      %783 = vmatpush1.bf16.msra.mxu0 0
      %784 = vmatprep.mubr.bf16.mxu0 0
      %785 = vmatmul.mubr.bf16.gmra.mrb[0].mxu0 %v696
      %v786 = vpop.f32.mrb[0].mxu0
      %v787 = vadd.f32 0.0, %v786
      %v788 = vpop.f32.mrb[0].mxu0
      %v789 = vpop.f32.mrb[0].mxu0
      %v790 = vadd.f32 0.0, %v789
      %v791 = vpop.f32.mrb[0].mxu0
      %792 = vmatprep.mubr.bf16.mxu0 0
      %793 = vmatmul.mubr.bf16.gmra.mrb[0].mxu0 %v697
      %v794 = vpop.f32.mrb[0].mxu0
      %v795 = vadd.f32 0.0, %v794
      %v796 = vpop.f32.mrb[0].mxu0
      %v797 = vpop.f32.mrb[0].mxu0
      %v798 = vadd.f32 0.0, %v797
      %v799 = vpop.f32.mrb[0].mxu0
      %800 = vmatprep.mubr.bf16.mxu0 0
      %801 = vmatmul.mubr.bf16.gmra.mrb[0].mxu0 %v698
      %v802 = vpop.f32.mrb[0].mxu0
      %v803 = vadd.f32 0.0, %v802
      %v804 = vpop.f32.mrb[0].mxu0
      %v805 = vpop.f32.mrb[0].mxu0
      %v806 = vadd.f32 0.0, %v805
      %v807 = vpop.f32.mrb[0].mxu0
      %808 = vmatprep.mubr.bf16.mxu0 0
      %809 = vmatmul.mubr.bf16.gmra.mrb[0].mxu0 %v699
      %v810 = vpop.f32.mrb[0].mxu0
      %v811 = vadd.f32 0.0, %v810
      %v812 = vpop.f32.mrb[0].mxu0
      %v813 = vpop.f32.mrb[0].mxu0
      %v814 = vadd.f32 0.0, %v813
      %v815 = vpop.f32.mrb[0].mxu0
      %816 = vdwg.mxu0
      %v817 = vadd.f32 %v510, %v787
      %v818 = vadd.f32 %v513, %v790
      %v819 = vadd.f32 %v518, %v795
      %v820 = vadd.f32 %v521, %v798
      %v821 = vadd.f32 %v526, %v803
      %v822 = vadd.f32 %v529, %v806
      %v823 = vadd.f32 %v534, %v811
      %v824 = vadd.f32 %v537, %v814
      %s825 = scalar_lea.vmem %s203, 144
      %v826 = vld [vmem:[%s825] sm:$0xf]
      %v827 = vld [vmem:[%s825 + $0x8] sm:$0xf]
      %v828 = vld [vmem:[%s825 + $0x10] sm:$0xf]
      %v829 = vld [vmem:[%s825 + $0x18] sm:$0xf]
      %v830 = vld [vmem:[%s825 + $0x20] sm:$0xf]
      %v831 = vld [vmem:[%s825 + $0x28] sm:$0xf]
      %v832 = vld [vmem:[%s825 + $0x30] sm:$0xf]
      %v833 = vld [vmem:[%s825 + $0x38] sm:$0xf]
      %s834 = scalar_lea.vmem %s1, 192
      %v835 = vld [vmem:[%s834] sm:$0xf]
      %v836 = vld [vmem:[%s834 + $0x4] sm:$0xf]
      %v837 = vld [vmem:[%s834 + $0x8] sm:$0xf]
      %v838 = vld [vmem:[%s834 + $0xc] sm:$0xf]
      %v839 = vld [vmem:[%s834 + $0x10] sm:$0xf]
      %v840 = vld [vmem:[%s834 + $0x14] sm:$0xf]
      %v841 = vld [vmem:[%s834 + $0x18] sm:$0xf]
      %v842 = vld [vmem:[%s834 + $0x1c] sm:$0xf]
      %v843 = vld [vmem:[%s834 + $0x20] sm:$0xf]
      %v844 = vld [vmem:[%s834 + $0x24] sm:$0xf]
      %v845 = vld [vmem:[%s834 + $0x28] sm:$0xf]
      %v846 = vld [vmem:[%s834 + $0x2c] sm:$0xf]
      %v847 = vld [vmem:[%s834 + $0x30] sm:$0xf]
      %v848 = vld [vmem:[%s834 + $0x34] sm:$0xf]
      %v849 = vld [vmem:[%s834 + $0x38] sm:$0xf]
      %v850 = vld [vmem:[%s834 + $0x3c] sm:$0xf]
      %v859 = vunpack.c.l.b16 %v826
      %v860 = vunpack.c.l.b16 %v827
      %v861 = vunpack.c.l.b16 %v828
      %v862 = vunpack.c.l.b16 %v829
      %v863 = vunpack.c.l.b16 %v830
      %v864 = vunpack.c.l.b16 %v831
      %v865 = vunpack.c.l.b16 %v832
      %v866 = vunpack.c.l.b16 %v833
      %v867 = vpack.c.b16 %v860, %v859
      %v868 = vpack.c.b16 %v862, %v861
      %v869 = vpack.c.b16 %v864, %v863
      %v870 = vpack.c.b16 %v866, %v865
      %v891 = vunpack.c.l.b16 %v835
      %v892 = vunpack.c.l.b16 %v836
      %v893 = vunpack.c.l.b16 %v837
      %v894 = vunpack.c.l.b16 %v838
      %v895 = vunpack.c.l.b16 %v839
      %v896 = vunpack.c.l.b16 %v840
      %v897 = vunpack.c.l.b16 %v841
      %v898 = vunpack.c.l.b16 %v842
      %v899 = vunpack.c.l.b16 %v843
      %v900 = vunpack.c.l.b16 %v844
      %v901 = vunpack.c.l.b16 %v845
      %v902 = vunpack.c.l.b16 %v846
      %v903 = vunpack.c.l.b16 %v847
      %v904 = vunpack.c.l.b16 %v848
      %v905 = vunpack.c.l.b16 %v849
      %v906 = vunpack.c.l.b16 %v850
      %v907 = vpack.c.b16 %v892, %v891
      %v908 = vpack.c.b16 %v894, %v893
      %v909 = vpack.c.b16 %v896, %v895
      %v910 = vpack.c.b16 %v898, %v897
      %v911 = vpack.c.b16 %v900, %v899
      %v912 = vpack.c.b16 %v902, %v901
      %v913 = vpack.c.b16 %v904, %v903
      %v914 = vpack.c.b16 %v906, %v905
      %923 = vmatprep.subr.bf16.mxu0 0
      %924 = vmatpush1.bf16.msra.mxu0 %v907
      %925 = vmatprep.subr.bf16.mxu0 0
      %926 = vmatpush1.bf16.msra.mxu0 %v908
      %927 = vmatprep.subr.bf16.mxu0 0
      %928 = vmatpush1.bf16.msra.mxu0 %v909
      %929 = vmatprep.subr.bf16.mxu0 0
      %930 = vmatpush1.bf16.msra.mxu0 %v910
      %931 = vmatprep.subr.bf16.mxu0 0
      %932 = vmatpush1.bf16.msra.mxu0 %v911
      %933 = vmatprep.subr.bf16.mxu0 0
      %934 = vmatpush1.bf16.msra.mxu0 %v912
      %935 = vmatprep.subr.bf16.mxu0 0
      %936 = vmatpush1.bf16.msra.mxu0 %v913
      %937 = vmatprep.subr.bf16.mxu0 0
      %938 = vmatpush1.bf16.msra.mxu0 %v914
      %939 = vmatprep.subr.bf16.mxu0 0
      %940 = vmatpush1.bf16.msra.mxu0 0
      %941 = vmatprep.subr.bf16.mxu0 0
      %942 = vmatpush1.bf16.msra.mxu0 0
      %943 = vmatprep.subr.bf16.mxu0 0
      %944 = vmatpush1.bf16.msra.mxu0 0
      %945 = vmatprep.subr.bf16.mxu0 0
      %946 = vmatpush1.bf16.msra.mxu0 0
      %947 = vmatprep.subr.bf16.mxu0 0
      %948 = vmatpush1.bf16.msra.mxu0 0
      %949 = vmatprep.subr.bf16.mxu0 0
      %950 = vmatpush1.bf16.msra.mxu0 0
      %951 = vmatprep.subr.bf16.mxu0 0
      %952 = vmatpush1.bf16.msra.mxu0 0
      %953 = vmatprep.subr.bf16.mxu0 0
      %954 = vmatpush1.bf16.msra.mxu0 0
      %955 = vmatprep.mubr.bf16.mxu0 0
      %956 = vmatmul.mubr.bf16.gmra.mrb[0].mxu0 %v867
      %v957 = vpop.f32.mrb[0].mxu0
      %v958 = vadd.f32 0.0, %v957
      %v959 = vpop.f32.mrb[0].mxu0
      %v960 = vpop.f32.mrb[0].mxu0
      %v961 = vadd.f32 0.0, %v960
      %v962 = vpop.f32.mrb[0].mxu0
      %963 = vmatprep.mubr.bf16.mxu0 0
      %964 = vmatmul.mubr.bf16.gmra.mrb[0].mxu0 %v868
      %v965 = vpop.f32.mrb[0].mxu0
      %v966 = vadd.f32 0.0, %v965
      %v967 = vpop.f32.mrb[0].mxu0
      %v968 = vpop.f32.mrb[0].mxu0
      %v969 = vadd.f32 0.0, %v968
      %v970 = vpop.f32.mrb[0].mxu0
      %971 = vmatprep.mubr.bf16.mxu0 0
      %972 = vmatmul.mubr.bf16.gmra.mrb[0].mxu0 %v869
      %v973 = vpop.f32.mrb[0].mxu0
      %v974 = vadd.f32 0.0, %v973
      %v975 = vpop.f32.mrb[0].mxu0
      %v976 = vpop.f32.mrb[0].mxu0
      %v977 = vadd.f32 0.0, %v976
      %v978 = vpop.f32.mrb[0].mxu0
      %979 = vmatprep.mubr.bf16.mxu0 0
      %980 = vmatmul.mubr.bf16.gmra.mrb[0].mxu0 %v870
      %v981 = vpop.f32.mrb[0].mxu0
      %v982 = vadd.f32 0.0, %v981
      %v983 = vpop.f32.mrb[0].mxu0
      %v984 = vpop.f32.mrb[0].mxu0
      %v985 = vadd.f32 0.0, %v984
      %v986 = vpop.f32.mrb[0].mxu0
      %987 = vdwg.mxu0
      %v988 = vadd.f32 %v817, %v958
      %v989 = vadd.f32 %v818, %v961
      %v990 = vadd.f32 %v819, %v966
      %v991 = vadd.f32 %v820, %v969
      %v992 = vadd.f32 %v821, %v974
      %v993 = vadd.f32 %v822, %v977
      %v994 = vadd.f32 %v823, %v982
      %v995 = vadd.f32 %v824, %v985
      %s996 = scalar_lea.vmem %s203, 216
      %v997 = vld [vmem:[%s996] sm:$0xf]
      %v998 = vld [vmem:[%s996 + $0x8] sm:$0xf]
      %v999 = vld [vmem:[%s996 + $0x10] sm:$0xf]
      %v1000 = vld [vmem:[%s996 + $0x18] sm:$0xf]
      %v1001 = vld [vmem:[%s996 + $0x20] sm:$0xf]
      %v1002 = vld [vmem:[%s996 + $0x28] sm:$0xf]
      %v1003 = vld [vmem:[%s996 + $0x30] sm:$0xf]
      %v1004 = vld [vmem:[%s996 + $0x38] sm:$0xf]
      %s1005 = scalar_lea.vmem %s1, 256
      %v1006 = vld [vmem:[%s1005] sm:$0xf]
      %v1007 = vld [vmem:[%s1005 + $0x4] sm:$0xf]
      %v1008 = vld [vmem:[%s1005 + $0x8] sm:$0xf]
      %v1009 = vld [vmem:[%s1005 + $0xc] sm:$0xf]
      %v1010 = vld [vmem:[%s1005 + $0x10] sm:$0xf]
      %v1011 = vld [vmem:[%s1005 + $0x14] sm:$0xf]
      %v1012 = vld [vmem:[%s1005 + $0x18] sm:$0xf]
      %v1013 = vld [vmem:[%s1005 + $0x1c] sm:$0xf]
      %v1014 = vld [vmem:[%s1005 + $0x20] sm:$0xf]
      %v1015 = vld [vmem:[%s1005 + $0x24] sm:$0xf]
      %v1016 = vld [vmem:[%s1005 + $0x28] sm:$0xf]
      %v1017 = vld [vmem:[%s1005 + $0x2c] sm:$0xf]
      %v1018 = vld [vmem:[%s1005 + $0x30] sm:$0xf]
      %v1019 = vld [vmem:[%s1005 + $0x34] sm:$0xf]
      %v1020 = vld [vmem:[%s1005 + $0x38] sm:$0xf]
      %v1021 = vld [vmem:[%s1005 + $0x3c] sm:$0xf]
      %v1030 = vunpack.c.l.b16 %v997
      %v1031 = vunpack.c.l.b16 %v998
      %v1032 = vunpack.c.l.b16 %v999
      %v1033 = vunpack.c.l.b16 %v1000
      %v1034 = vunpack.c.l.b16 %v1001
      %v1035 = vunpack.c.l.b16 %v1002
      %v1036 = vunpack.c.l.b16 %v1003
      %v1037 = vunpack.c.l.b16 %v1004
      %v1038 = vpack.c.b16 %v1031, %v1030
      %v1039 = vpack.c.b16 %v1033, %v1032
      %v1040 = vpack.c.b16 %v1035, %v1034
      %v1041 = vpack.c.b16 %v1037, %v1036
      %v1062 = vunpack.c.l.b16 %v1006
      %v1063 = vunpack.c.l.b16 %v1007
      %v1064 = vunpack.c.l.b16 %v1008
      %v1065 = vunpack.c.l.b16 %v1009
      %v1066 = vunpack.c.l.b16 %v1010
      %v1067 = vunpack.c.l.b16 %v1011
      %v1068 = vunpack.c.l.b16 %v1012
      %v1069 = vunpack.c.l.b16 %v1013
      %v1070 = vunpack.c.l.b16 %v1014
      %v1071 = vunpack.c.l.b16 %v1015
      %v1072 = vunpack.c.l.b16 %v1016
      %v1073 = vunpack.c.l.b16 %v1017
      %v1074 = vunpack.c.l.b16 %v1018
      %v1075 = vunpack.c.l.b16 %v1019
      %v1076 = vunpack.c.l.b16 %v1020
      %v1077 = vunpack.c.l.b16 %v1021
      %v1078 = vpack.c.b16 %v1063, %v1062
      %v1079 = vpack.c.b16 %v1065, %v1064
      %v1080 = vpack.c.b16 %v1067, %v1066
      %v1081 = vpack.c.b16 %v1069, %v1068
      %v1082 = vpack.c.b16 %v1071, %v1070
      %v1083 = vpack.c.b16 %v1073, %v1072
      %v1084 = vpack.c.b16 %v1075, %v1074
      %v1085 = vpack.c.b16 %v1077, %v1076
      %1094 = vmatprep.subr.bf16.mxu0 0
      %1095 = vmatpush1.bf16.msra.mxu0 %v1078
      %1096 = vmatprep.subr.bf16.mxu0 0
      %1097 = vmatpush1.bf16.msra.mxu0 %v1079
      %1098 = vmatprep.subr.bf16.mxu0 0
      %1099 = vmatpush1.bf16.msra.mxu0 %v1080
      %1100 = vmatprep.subr.bf16.mxu0 0
      %1101 = vmatpush1.bf16.msra.mxu0 %v1081
      %1102 = vmatprep.subr.bf16.mxu0 0
      %1103 = vmatpush1.bf16.msra.mxu0 %v1082
      %1104 = vmatprep.subr.bf16.mxu0 0
      %1105 = vmatpush1.bf16.msra.mxu0 %v1083
      %1106 = vmatprep.subr.bf16.mxu0 0
      %1107 = vmatpush1.bf16.msra.mxu0 %v1084
      %1108 = vmatprep.subr.bf16.mxu0 0
      %1109 = vmatpush1.bf16.msra.mxu0 %v1085
      %1110 = vmatprep.subr.bf16.mxu0 0
      %1111 = vmatpush1.bf16.msra.mxu0 0
      %1112 = vmatprep.subr.bf16.mxu0 0
      %1113 = vmatpush1.bf16.msra.mxu0 0
      %1114 = vmatprep.subr.bf16.mxu0 0
      %1115 = vmatpush1.bf16.msra.mxu0 0
      %1116 = vmatprep.subr.bf16.mxu0 0
      %1117 = vmatpush1.bf16.msra.mxu0 0
      %1118 = vmatprep.subr.bf16.mxu0 0
      %1119 = vmatpush1.bf16.msra.mxu0 0
      %1120 = vmatprep.subr.bf16.mxu0 0
      %1121 = vmatpush1.bf16.msra.mxu0 0
      %1122 = vmatprep.subr.bf16.mxu0 0
      %1123 = vmatpush1.bf16.msra.mxu0 0
      %1124 = vmatprep.subr.bf16.mxu0 0
      %1125 = vmatpush1.bf16.msra.mxu0 0
      %1126 = vmatprep.mubr.bf16.mxu0 0
      %1127 = vmatmul.mubr.bf16.gmra.mrb[0].mxu0 %v1038
      %v1128 = vpop.f32.mrb[0].mxu0
      %v1129 = vadd.f32 0.0, %v1128
      %v1130 = vpop.f32.mrb[0].mxu0
      %v1131 = vpop.f32.mrb[0].mxu0
      %v1132 = vadd.f32 0.0, %v1131
      %v1133 = vpop.f32.mrb[0].mxu0
      %1134 = vmatprep.mubr.bf16.mxu0 0
      %1135 = vmatmul.mubr.bf16.gmra.mrb[0].mxu0 %v1039
      %v1136 = vpop.f32.mrb[0].mxu0
      %v1137 = vadd.f32 0.0, %v1136
      %v1138 = vpop.f32.mrb[0].mxu0
      %v1139 = vpop.f32.mrb[0].mxu0
      %v1140 = vadd.f32 0.0, %v1139
      %v1141 = vpop.f32.mrb[0].mxu0
      %1142 = vmatprep.mubr.bf16.mxu0 0
      %1143 = vmatmul.mubr.bf16.gmra.mrb[0].mxu0 %v1040
      %v1144 = vpop.f32.mrb[0].mxu0
      %v1145 = vadd.f32 0.0, %v1144
      %v1146 = vpop.f32.mrb[0].mxu0
      %v1147 = vpop.f32.mrb[0].mxu0
      %v1148 = vadd.f32 0.0, %v1147
      %v1149 = vpop.f32.mrb[0].mxu0
      %1150 = vmatprep.mubr.bf16.mxu0 0
      %1151 = vmatmul.mubr.bf16.gmra.mrb[0].mxu0 %v1041
      %v1152 = vpop.f32.mrb[0].mxu0
      %v1153 = vadd.f32 0.0, %v1152
      %v1154 = vpop.f32.mrb[0].mxu0
      %v1155 = vpop.f32.mrb[0].mxu0
      %v1156 = vadd.f32 0.0, %v1155
      %v1157 = vpop.f32.mrb[0].mxu0
      %1158 = vdwg.mxu0
      %v1159 = vadd.f32 %v988, %v1129
      %v1160 = vadd.f32 %v989, %v1132
      %v1161 = vadd.f32 %v990, %v1137
      %v1162 = vadd.f32 %v991, %v1140
      %v1163 = vadd.f32 %v992, %v1145
      %v1164 = vadd.f32 %v993, %v1148
      %v1165 = vadd.f32 %v994, %v1153
      %v1166 = vadd.f32 %v995, %v1156
      %v1167 = vld [vmem:[%s825] sm:$0xf]
      %v1168 = vld [vmem:[%s825 + $0x4] sm:$0x1]
      %v1169 = vld [vmem:[%s825 + $0x8] sm:$0xf]
      %v1170 = vld [vmem:[%s825 + $0xc] sm:$0x1]
      %v1171 = vld [vmem:[%s825 + $0x10] sm:$0xf]
      %v1172 = vld [vmem:[%s825 + $0x14] sm:$0x1]
      %v1173 = vld [vmem:[%s825 + $0x18] sm:$0xf]
      %v1174 = vld [vmem:[%s825 + $0x1c] sm:$0x1]
      %v1175 = vld [vmem:[%s825 + $0x20] sm:$0xf]
      %v1176 = vld [vmem:[%s825 + $0x24] sm:$0x1]
      %v1177 = vld [vmem:[%s825 + $0x28] sm:$0xf]
      %v1178 = vld [vmem:[%s825 + $0x2c] sm:$0x1]
      %v1179 = vld [vmem:[%s825 + $0x30] sm:$0xf]
      %v1180 = vld [vmem:[%s825 + $0x34] sm:$0x1]
      %v1181 = vld [vmem:[%s825 + $0x38] sm:$0xf]
      %v1182 = vld [vmem:[%s825 + $0x3c] sm:$0x1]
      %v1184 = vshrl.u32 %v1167, 16
      %v1186 = vrot.slane %v1184, 4
      %v1187 = vshll.u32 %v1167, 16
      %v1189 = vrot.slane %v1187, 5
      %v1190 = vor.u32 %v1186, %v1189
      %v1191 = vrot.slane %v1190, 4
      %v1193 = vshll.u32 %v1168, 16
      %v1195 = vrot.slane %v1193, 5
      %v1196 = vsel %vm558, %v1191, %v1195
      %v1198 = vshrl.u32 %v1169, 16
      %v1200 = vrot.slane %v1198, 4
      %v1201 = vshll.u32 %v1169, 16
      %v1203 = vrot.slane %v1201, 5
      %v1204 = vor.u32 %v1200, %v1203
      %v1205 = vrot.slane %v1204, 4
      %v1207 = vshll.u32 %v1170, 16
      %v1209 = vrot.slane %v1207, 5
      %v1210 = vsel %vm558, %v1205, %v1209
      %v1212 = vshrl.u32 %v1171, 16
      %v1214 = vrot.slane %v1212, 4
      %v1215 = vshll.u32 %v1171, 16
      %v1217 = vrot.slane %v1215, 5
      %v1218 = vor.u32 %v1214, %v1217
      %v1219 = vrot.slane %v1218, 4
      %v1221 = vshll.u32 %v1172, 16
      %v1223 = vrot.slane %v1221, 5
      %v1224 = vsel %vm558, %v1219, %v1223
      %v1226 = vshrl.u32 %v1173, 16
      %v1228 = vrot.slane %v1226, 4
      %v1229 = vshll.u32 %v1173, 16
      %v1231 = vrot.slane %v1229, 5
      %v1232 = vor.u32 %v1228, %v1231
      %v1233 = vrot.slane %v1232, 4
      %v1235 = vshll.u32 %v1174, 16
      %v1237 = vrot.slane %v1235, 5
      %v1238 = vsel %vm558, %v1233, %v1237
      %v1240 = vshrl.u32 %v1175, 16
      %v1242 = vrot.slane %v1240, 4
      %v1243 = vshll.u32 %v1175, 16
      %v1245 = vrot.slane %v1243, 5
      %v1246 = vor.u32 %v1242, %v1245
      %v1247 = vrot.slane %v1246, 4
      %v1249 = vshll.u32 %v1176, 16
      %v1251 = vrot.slane %v1249, 5
      %v1252 = vsel %vm558, %v1247, %v1251
      %v1254 = vshrl.u32 %v1177, 16
      %v1256 = vrot.slane %v1254, 4
      %v1257 = vshll.u32 %v1177, 16
      %v1259 = vrot.slane %v1257, 5
      %v1260 = vor.u32 %v1256, %v1259
      %v1261 = vrot.slane %v1260, 4
      %v1263 = vshll.u32 %v1178, 16
      %v1265 = vrot.slane %v1263, 5
      %v1266 = vsel %vm558, %v1261, %v1265
      %v1268 = vshrl.u32 %v1179, 16
      %v1270 = vrot.slane %v1268, 4
      %v1271 = vshll.u32 %v1179, 16
      %v1273 = vrot.slane %v1271, 5
      %v1274 = vor.u32 %v1270, %v1273
      %v1275 = vrot.slane %v1274, 4
      %v1277 = vshll.u32 %v1180, 16
      %v1279 = vrot.slane %v1277, 5
      %v1280 = vsel %vm558, %v1275, %v1279
      %v1282 = vshrl.u32 %v1181, 16
      %v1284 = vrot.slane %v1282, 4
      %v1285 = vshll.u32 %v1181, 16
      %v1287 = vrot.slane %v1285, 5
      %v1288 = vor.u32 %v1284, %v1287
      %v1289 = vrot.slane %v1288, 4
      %v1291 = vshll.u32 %v1182, 16
      %v1293 = vrot.slane %v1291, 5
      %v1294 = vsel %vm558, %v1289, %v1293
      %s1295 = scalar_lea.vmem %s1, 320
      %v1296 = vld [vmem:[%s1295] sm:$0xf]
      %v1297 = vld [vmem:[%s1295 + $0x4] sm:$0xf]
      %v1298 = vld [vmem:[%s1295 + $0x8] sm:$0xf]
      %v1299 = vld [vmem:[%s1295 + $0xc] sm:$0xf]
      %v1300 = vld [vmem:[%s1295 + $0x10] sm:$0xf]
      %v1301 = vld [vmem:[%s1295 + $0x14] sm:$0xf]
      %v1302 = vld [vmem:[%s1295 + $0x18] sm:$0xf]
      %v1303 = vld [vmem:[%s1295 + $0x1c] sm:$0xf]
      %v1304 = vld [vmem:[%s1295 + $0x20] sm:$0xf]
      %v1305 = vld [vmem:[%s1295 + $0x24] sm:$0xf]
      %v1306 = vld [vmem:[%s1295 + $0x28] sm:$0xf]
      %v1307 = vld [vmem:[%s1295 + $0x2c] sm:$0xf]
      %v1308 = vld [vmem:[%s1295 + $0x30] sm:$0xf]
      %v1309 = vld [vmem:[%s1295 + $0x34] sm:$0xf]
      %v1310 = vld [vmem:[%s1295 + $0x38] sm:$0xf]
      %v1311 = vld [vmem:[%s1295 + $0x3c] sm:$0xf]
      %v1312 = vunpack.c.l.b16 %v1196
      %v1313 = vunpack.c.l.b16 %v1210
      %v1314 = vunpack.c.l.b16 %v1224
      %v1315 = vunpack.c.l.b16 %v1238
      %v1316 = vunpack.c.l.b16 %v1252
      %v1317 = vunpack.c.l.b16 %v1266
      %v1318 = vunpack.c.l.b16 %v1280
      %v1319 = vunpack.c.l.b16 %v1294
      %v1320 = vpack.c.b16 %v1313, %v1312
      %v1321 = vpack.c.b16 %v1315, %v1314
      %v1322 = vpack.c.b16 %v1317, %v1316
      %v1323 = vpack.c.b16 %v1319, %v1318
      %v1344 = vunpack.c.l.b16 %v1296
      %v1345 = vunpack.c.l.b16 %v1297
      %v1346 = vunpack.c.l.b16 %v1298
      %v1347 = vunpack.c.l.b16 %v1299
      %v1348 = vunpack.c.l.b16 %v1300
      %v1349 = vunpack.c.l.b16 %v1301
      %v1350 = vunpack.c.l.b16 %v1302
      %v1351 = vunpack.c.l.b16 %v1303
      %v1352 = vunpack.c.l.b16 %v1304
      %v1353 = vunpack.c.l.b16 %v1305
      %v1354 = vunpack.c.l.b16 %v1306
      %v1355 = vunpack.c.l.b16 %v1307
      %v1356 = vunpack.c.l.b16 %v1308
      %v1357 = vunpack.c.l.b16 %v1309
      %v1358 = vunpack.c.l.b16 %v1310
      %v1359 = vunpack.c.l.b16 %v1311
      %v1360 = vpack.c.b16 %v1345, %v1344
      %v1361 = vpack.c.b16 %v1347, %v1346
      %v1362 = vpack.c.b16 %v1349, %v1348
      %v1363 = vpack.c.b16 %v1351, %v1350
      %v1364 = vpack.c.b16 %v1353, %v1352
      %v1365 = vpack.c.b16 %v1355, %v1354
      %v1366 = vpack.c.b16 %v1357, %v1356
      %v1367 = vpack.c.b16 %v1359, %v1358
      %1376 = vmatprep.subr.bf16.mxu0 0
      %1377 = vmatpush1.bf16.msra.mxu0 %v1360
      %1378 = vmatprep.subr.bf16.mxu0 0
      %1379 = vmatpush1.bf16.msra.mxu0 %v1361
      %1380 = vmatprep.subr.bf16.mxu0 0
      %1381 = vmatpush1.bf16.msra.mxu0 %v1362
      %1382 = vmatprep.subr.bf16.mxu0 0
      %1383 = vmatpush1.bf16.msra.mxu0 %v1363
      %1384 = vmatprep.subr.bf16.mxu0 0
      %1385 = vmatpush1.bf16.msra.mxu0 %v1364
      %1386 = vmatprep.subr.bf16.mxu0 0
      %1387 = vmatpush1.bf16.msra.mxu0 %v1365
      %1388 = vmatprep.subr.bf16.mxu0 0
      %1389 = vmatpush1.bf16.msra.mxu0 %v1366
      %1390 = vmatprep.subr.bf16.mxu0 0
      %1391 = vmatpush1.bf16.msra.mxu0 %v1367
      %1392 = vmatprep.subr.bf16.mxu0 0
      %1393 = vmatpush1.bf16.msra.mxu0 0
      %1394 = vmatprep.subr.bf16.mxu0 0
      %1395 = vmatpush1.bf16.msra.mxu0 0
      %1396 = vmatprep.subr.bf16.mxu0 0
      %1397 = vmatpush1.bf16.msra.mxu0 0
      %1398 = vmatprep.subr.bf16.mxu0 0
      %1399 = vmatpush1.bf16.msra.mxu0 0
      %1400 = vmatprep.subr.bf16.mxu0 0
      %1401 = vmatpush1.bf16.msra.mxu0 0
      %1402 = vmatprep.subr.bf16.mxu0 0
      %1403 = vmatpush1.bf16.msra.mxu0 0
      %1404 = vmatprep.subr.bf16.mxu0 0
      %1405 = vmatpush1.bf16.msra.mxu0 0
      %1406 = vmatprep.subr.bf16.mxu0 0
      %1407 = vmatpush1.bf16.msra.mxu0 0
      %1408 = vmatprep.mubr.bf16.mxu0 0
      %1409 = vmatmul.mubr.bf16.gmra.mrb[0].mxu0 %v1320
      %v1410 = vpop.f32.mrb[0].mxu0
      %v1411 = vadd.f32 0.0, %v1410
      %v1412 = vpop.f32.mrb[0].mxu0
      %v1413 = vpop.f32.mrb[0].mxu0
      %v1414 = vadd.f32 0.0, %v1413
      %v1415 = vpop.f32.mrb[0].mxu0
      %1416 = vmatprep.mubr.bf16.mxu0 0
      %1417 = vmatmul.mubr.bf16.gmra.mrb[0].mxu0 %v1321
      %v1418 = vpop.f32.mrb[0].mxu0
      %v1419 = vadd.f32 0.0, %v1418
      %v1420 = vpop.f32.mrb[0].mxu0
      %v1421 = vpop.f32.mrb[0].mxu0
      %v1422 = vadd.f32 0.0, %v1421
      %v1423 = vpop.f32.mrb[0].mxu0
      %1424 = vmatprep.mubr.bf16.mxu0 0
      %1425 = vmatmul.mubr.bf16.gmra.mrb[0].mxu0 %v1322
      %v1426 = vpop.f32.mrb[0].mxu0
      %v1427 = vadd.f32 0.0, %v1426
      %v1428 = vpop.f32.mrb[0].mxu0
      %v1429 = vpop.f32.mrb[0].mxu0
      %v1430 = vadd.f32 0.0, %v1429
      %v1431 = vpop.f32.mrb[0].mxu0
      %1432 = vmatprep.mubr.bf16.mxu0 0
      %1433 = vmatmul.mubr.bf16.gmra.mrb[0].mxu0 %v1323
      %v1434 = vpop.f32.mrb[0].mxu0
      %v1435 = vadd.f32 0.0, %v1434
      %v1436 = vpop.f32.mrb[0].mxu0
      %v1437 = vpop.f32.mrb[0].mxu0
      %v1438 = vadd.f32 0.0, %v1437
      %v1439 = vpop.f32.mrb[0].mxu0
      %1440 = vdwg.mxu0
      %v1441 = vadd.f32 %v1159, %v1411
      %v1442 = vadd.f32 %v1160, %v1414
      %v1443 = vadd.f32 %v1161, %v1419
      %v1444 = vadd.f32 %v1162, %v1422
      %v1445 = vadd.f32 %v1163, %v1427
      %v1446 = vadd.f32 %v1164, %v1430
      %v1447 = vadd.f32 %v1165, %v1435
      %v1448 = vadd.f32 %v1166, %v1438
      %s1449 = scalar_lea.vmem %s203, 8
      %v1450 = vld [vmem:[%s1449] sm:$0xf]
      %v1451 = vld [vmem:[%s1449 + $0x8] sm:$0xf]
      %v1452 = vld [vmem:[%s1449 + $0x10] sm:$0xf]
      %v1453 = vld [vmem:[%s1449 + $0x18] sm:$0xf]
      %v1454 = vld [vmem:[%s1449 + $0x20] sm:$0xf]
      %v1455 = vld [vmem:[%s1449 + $0x28] sm:$0xf]
      %v1456 = vld [vmem:[%s1449 + $0x30] sm:$0xf]
      %v1457 = vld [vmem:[%s1449 + $0x38] sm:$0xf]
      %s1458 = scalar_lea.vmem %s1, 384
      %v1459 = vld [vmem:[%s1458] sm:$0xf]
      %v1460 = vld [vmem:[%s1458 + $0x4] sm:$0xf]
      %v1461 = vld [vmem:[%s1458 + $0x8] sm:$0xf]
      %v1462 = vld [vmem:[%s1458 + $0xc] sm:$0xf]
      %v1463 = vld [vmem:[%s1458 + $0x10] sm:$0xf]
      %v1464 = vld [vmem:[%s1458 + $0x14] sm:$0xf]
      %v1465 = vld [vmem:[%s1458 + $0x18] sm:$0xf]
      %v1466 = vld [vmem:[%s1458 + $0x1c] sm:$0xf]
      %v1467 = vld [vmem:[%s1458 + $0x20] sm:$0xf]
      %v1468 = vld [vmem:[%s1458 + $0x24] sm:$0xf]
      %v1469 = vld [vmem:[%s1458 + $0x28] sm:$0xf]
      %v1470 = vld [vmem:[%s1458 + $0x2c] sm:$0xf]
      %v1471 = vld [vmem:[%s1458 + $0x30] sm:$0xf]
      %v1472 = vld [vmem:[%s1458 + $0x34] sm:$0xf]
      %v1473 = vld [vmem:[%s1458 + $0x38] sm:$0xf]
      %v1474 = vld [vmem:[%s1458 + $0x3c] sm:$0xf]
      %v1483 = vunpack.c.l.b16 %v1450
      %v1484 = vunpack.c.l.b16 %v1451
      %v1485 = vunpack.c.l.b16 %v1452
      %v1486 = vunpack.c.l.b16 %v1453
      %v1487 = vunpack.c.l.b16 %v1454
      %v1488 = vunpack.c.l.b16 %v1455
      %v1489 = vunpack.c.l.b16 %v1456
      %v1490 = vunpack.c.l.b16 %v1457
      %v1491 = vpack.c.b16 %v1484, %v1483
      %v1492 = vpack.c.b16 %v1486, %v1485
      %v1493 = vpack.c.b16 %v1488, %v1487
      %v1494 = vpack.c.b16 %v1490, %v1489
      %v1515 = vunpack.c.l.b16 %v1459
      %v1516 = vunpack.c.l.b16 %v1460
      %v1517 = vunpack.c.l.b16 %v1461
      %v1518 = vunpack.c.l.b16 %v1462
      %v1519 = vunpack.c.l.b16 %v1463
      %v1520 = vunpack.c.l.b16 %v1464
      %v1521 = vunpack.c.l.b16 %v1465
      %v1522 = vunpack.c.l.b16 %v1466
      %v1523 = vunpack.c.l.b16 %v1467
      %v1524 = vunpack.c.l.b16 %v1468
      %v1525 = vunpack.c.l.b16 %v1469
      %v1526 = vunpack.c.l.b16 %v1470
      %v1527 = vunpack.c.l.b16 %v1471
      %v1528 = vunpack.c.l.b16 %v1472
      %v1529 = vunpack.c.l.b16 %v1473
      %v1530 = vunpack.c.l.b16 %v1474
      %v1531 = vpack.c.b16 %v1516, %v1515
      %v1532 = vpack.c.b16 %v1518, %v1517
      %v1533 = vpack.c.b16 %v1520, %v1519
      %v1534 = vpack.c.b16 %v1522, %v1521
      %v1535 = vpack.c.b16 %v1524, %v1523
      %v1536 = vpack.c.b16 %v1526, %v1525
      %v1537 = vpack.c.b16 %v1528, %v1527
      %v1538 = vpack.c.b16 %v1530, %v1529
      %1547 = vmatprep.subr.bf16.mxu0 0
      %1548 = vmatpush1.bf16.msra.mxu0 %v1531
      %1549 = vmatprep.subr.bf16.mxu0 0
      %1550 = vmatpush1.bf16.msra.mxu0 %v1532
      %1551 = vmatprep.subr.bf16.mxu0 0
      %1552 = vmatpush1.bf16.msra.mxu0 %v1533
      %1553 = vmatprep.subr.bf16.mxu0 0
      %1554 = vmatpush1.bf16.msra.mxu0 %v1534
      %1555 = vmatprep.subr.bf16.mxu0 0
      %1556 = vmatpush1.bf16.msra.mxu0 %v1535
      %1557 = vmatprep.subr.bf16.mxu0 0
      %1558 = vmatpush1.bf16.msra.mxu0 %v1536
      %1559 = vmatprep.subr.bf16.mxu0 0
      %1560 = vmatpush1.bf16.msra.mxu0 %v1537
      %1561 = vmatprep.subr.bf16.mxu0 0
      %1562 = vmatpush1.bf16.msra.mxu0 %v1538
      %1563 = vmatprep.subr.bf16.mxu0 0
      %1564 = vmatpush1.bf16.msra.mxu0 0
      %1565 = vmatprep.subr.bf16.mxu0 0
      %1566 = vmatpush1.bf16.msra.mxu0 0
      %1567 = vmatprep.subr.bf16.mxu0 0
      %1568 = vmatpush1.bf16.msra.mxu0 0
      %1569 = vmatprep.subr.bf16.mxu0 0
      %1570 = vmatpush1.bf16.msra.mxu0 0
      %1571 = vmatprep.subr.bf16.mxu0 0
      %1572 = vmatpush1.bf16.msra.mxu0 0
      %1573 = vmatprep.subr.bf16.mxu0 0
      %1574 = vmatpush1.bf16.msra.mxu0 0
      %1575 = vmatprep.subr.bf16.mxu0 0
      %1576 = vmatpush1.bf16.msra.mxu0 0
      %1577 = vmatprep.subr.bf16.mxu0 0
      %1578 = vmatpush1.bf16.msra.mxu0 0
      %1579 = vmatprep.mubr.bf16.mxu0 0
      %1580 = vmatmul.mubr.bf16.gmra.mrb[0].mxu0 %v1491
      %v1581 = vpop.f32.mrb[0].mxu0
      %v1582 = vadd.f32 0.0, %v1581
      %v1583 = vpop.f32.mrb[0].mxu0
      %v1584 = vpop.f32.mrb[0].mxu0
      %v1585 = vadd.f32 0.0, %v1584
      %v1586 = vpop.f32.mrb[0].mxu0
      %1587 = vmatprep.mubr.bf16.mxu0 0
      %1588 = vmatmul.mubr.bf16.gmra.mrb[0].mxu0 %v1492
      %v1589 = vpop.f32.mrb[0].mxu0
      %v1590 = vadd.f32 0.0, %v1589
      %v1591 = vpop.f32.mrb[0].mxu0
      %v1592 = vpop.f32.mrb[0].mxu0
      %v1593 = vadd.f32 0.0, %v1592
      %v1594 = vpop.f32.mrb[0].mxu0
      %1595 = vmatprep.mubr.bf16.mxu0 0
      %1596 = vmatmul.mubr.bf16.gmra.mrb[0].mxu0 %v1493
      %v1597 = vpop.f32.mrb[0].mxu0
      %v1598 = vadd.f32 0.0, %v1597
      %v1599 = vpop.f32.mrb[0].mxu0
      %v1600 = vpop.f32.mrb[0].mxu0
      %v1601 = vadd.f32 0.0, %v1600
      %v1602 = vpop.f32.mrb[0].mxu0
      %1603 = vmatprep.mubr.bf16.mxu0 0
      %1604 = vmatmul.mubr.bf16.gmra.mrb[0].mxu0 %v1494
      %v1605 = vpop.f32.mrb[0].mxu0
      %v1606 = vadd.f32 0.0, %v1605
      %v1607 = vpop.f32.mrb[0].mxu0
      %v1608 = vpop.f32.mrb[0].mxu0
      %v1609 = vadd.f32 0.0, %v1608
      %v1610 = vpop.f32.mrb[0].mxu0
      %1611 = vdwg.mxu0
      %v1612 = vadd.f32 %v1441, %v1582
      %v1613 = vadd.f32 %v1442, %v1585
      %v1614 = vadd.f32 %v1443, %v1590
      %v1615 = vadd.f32 %v1444, %v1593
      %v1616 = vadd.f32 %v1445, %v1598
      %v1617 = vadd.f32 %v1446, %v1601
      %v1618 = vadd.f32 %v1447, %v1606
      %v1619 = vadd.f32 %v1448, %v1609
      %s1620 = scalar_lea.vmem %s203, 80
      %v1621 = vld [vmem:[%s1620] sm:$0xf]
      %v1622 = vld [vmem:[%s1620 + $0x8] sm:$0xf]
      %v1623 = vld [vmem:[%s1620 + $0x10] sm:$0xf]
      %v1624 = vld [vmem:[%s1620 + $0x18] sm:$0xf]
      %v1625 = vld [vmem:[%s1620 + $0x20] sm:$0xf]
      %v1626 = vld [vmem:[%s1620 + $0x28] sm:$0xf]
      %v1627 = vld [vmem:[%s1620 + $0x30] sm:$0xf]
      %v1628 = vld [vmem:[%s1620 + $0x38] sm:$0xf]
      %s1629 = scalar_lea.vmem %s1, 448
      %v1630 = vld [vmem:[%s1629] sm:$0xf]
      %v1631 = vld [vmem:[%s1629 + $0x4] sm:$0xf]
      %v1632 = vld [vmem:[%s1629 + $0x8] sm:$0xf]
      %v1633 = vld [vmem:[%s1629 + $0xc] sm:$0xf]
      %v1634 = vld [vmem:[%s1629 + $0x10] sm:$0xf]
      %v1635 = vld [vmem:[%s1629 + $0x14] sm:$0xf]
      %v1636 = vld [vmem:[%s1629 + $0x18] sm:$0xf]
      %v1637 = vld [vmem:[%s1629 + $0x1c] sm:$0xf]
      %v1638 = vld [vmem:[%s1629 + $0x20] sm:$0xf]
      %v1639 = vld [vmem:[%s1629 + $0x24] sm:$0xf]
      %v1640 = vld [vmem:[%s1629 + $0x28] sm:$0xf]
      %v1641 = vld [vmem:[%s1629 + $0x2c] sm:$0xf]
      %v1642 = vld [vmem:[%s1629 + $0x30] sm:$0xf]
      %v1643 = vld [vmem:[%s1629 + $0x34] sm:$0xf]
      %v1644 = vld [vmem:[%s1629 + $0x38] sm:$0xf]
      %v1645 = vld [vmem:[%s1629 + $0x3c] sm:$0xf]
      %v1654 = vunpack.c.l.b16 %v1621
      %v1655 = vunpack.c.l.b16 %v1622
      %v1656 = vunpack.c.l.b16 %v1623
      %v1657 = vunpack.c.l.b16 %v1624
      %v1658 = vunpack.c.l.b16 %v1625
      %v1659 = vunpack.c.l.b16 %v1626
      %v1660 = vunpack.c.l.b16 %v1627
      %v1661 = vunpack.c.l.b16 %v1628
      %v1662 = vpack.c.b16 %v1655, %v1654
      %v1663 = vpack.c.b16 %v1657, %v1656
      %v1664 = vpack.c.b16 %v1659, %v1658
      %v1665 = vpack.c.b16 %v1661, %v1660
      %v1686 = vunpack.c.l.b16 %v1630
      %v1687 = vunpack.c.l.b16 %v1631
      %v1688 = vunpack.c.l.b16 %v1632
      %v1689 = vunpack.c.l.b16 %v1633
      %v1690 = vunpack.c.l.b16 %v1634
      %v1691 = vunpack.c.l.b16 %v1635
      %v1692 = vunpack.c.l.b16 %v1636
      %v1693 = vunpack.c.l.b16 %v1637
      %v1694 = vunpack.c.l.b16 %v1638
      %v1695 = vunpack.c.l.b16 %v1639
      %v1696 = vunpack.c.l.b16 %v1640
      %v1697 = vunpack.c.l.b16 %v1641
      %v1698 = vunpack.c.l.b16 %v1642
      %v1699 = vunpack.c.l.b16 %v1643
      %v1700 = vunpack.c.l.b16 %v1644
      %v1701 = vunpack.c.l.b16 %v1645
      %v1702 = vpack.c.b16 %v1687, %v1686
      %v1703 = vpack.c.b16 %v1689, %v1688
      %v1704 = vpack.c.b16 %v1691, %v1690
      %v1705 = vpack.c.b16 %v1693, %v1692
      %v1706 = vpack.c.b16 %v1695, %v1694
      %v1707 = vpack.c.b16 %v1697, %v1696
      %v1708 = vpack.c.b16 %v1699, %v1698
      %v1709 = vpack.c.b16 %v1701, %v1700
      %1718 = vmatprep.subr.bf16.mxu0 0
      %1719 = vmatpush1.bf16.msra.mxu0 %v1702
      %1720 = vmatprep.subr.bf16.mxu0 0
      %1721 = vmatpush1.bf16.msra.mxu0 %v1703
      %1722 = vmatprep.subr.bf16.mxu0 0
      %1723 = vmatpush1.bf16.msra.mxu0 %v1704
      %1724 = vmatprep.subr.bf16.mxu0 0
      %1725 = vmatpush1.bf16.msra.mxu0 %v1705
      %1726 = vmatprep.subr.bf16.mxu0 0
      %1727 = vmatpush1.bf16.msra.mxu0 %v1706
      %1728 = vmatprep.subr.bf16.mxu0 0
      %1729 = vmatpush1.bf16.msra.mxu0 %v1707
      %1730 = vmatprep.subr.bf16.mxu0 0
      %1731 = vmatpush1.bf16.msra.mxu0 %v1708
      %1732 = vmatprep.subr.bf16.mxu0 0
      %1733 = vmatpush1.bf16.msra.mxu0 %v1709
      %1734 = vmatprep.subr.bf16.mxu0 0
      %1735 = vmatpush1.bf16.msra.mxu0 0
      %1736 = vmatprep.subr.bf16.mxu0 0
      %1737 = vmatpush1.bf16.msra.mxu0 0
      %1738 = vmatprep.subr.bf16.mxu0 0
      %1739 = vmatpush1.bf16.msra.mxu0 0
      %1740 = vmatprep.subr.bf16.mxu0 0
      %1741 = vmatpush1.bf16.msra.mxu0 0
      %1742 = vmatprep.subr.bf16.mxu0 0
      %1743 = vmatpush1.bf16.msra.mxu0 0
      %1744 = vmatprep.subr.bf16.mxu0 0
      %1745 = vmatpush1.bf16.msra.mxu0 0
      %1746 = vmatprep.subr.bf16.mxu0 0
      %1747 = vmatpush1.bf16.msra.mxu0 0
      %1748 = vmatprep.subr.bf16.mxu0 0
      %1749 = vmatpush1.bf16.msra.mxu0 0
      %1750 = vmatprep.mubr.bf16.mxu0 0
      %1751 = vmatmul.mubr.bf16.gmra.mrb[0].mxu0 %v1662
      %v1752 = vpop.f32.mrb[0].mxu0
      %v1753 = vadd.f32 0.0, %v1752
      %v1754 = vpop.f32.mrb[0].mxu0
      %v1755 = vpop.f32.mrb[0].mxu0
      %v1756 = vadd.f32 0.0, %v1755
      %v1757 = vpop.f32.mrb[0].mxu0
      %1758 = vmatprep.mubr.bf16.mxu0 0
      %1759 = vmatmul.mubr.bf16.gmra.mrb[0].mxu0 %v1663
      %v1760 = vpop.f32.mrb[0].mxu0
      %v1761 = vadd.f32 0.0, %v1760
      %v1762 = vpop.f32.mrb[0].mxu0
      %v1763 = vpop.f32.mrb[0].mxu0
      %v1764 = vadd.f32 0.0, %v1763
      %v1765 = vpop.f32.mrb[0].mxu0
      %1766 = vmatprep.mubr.bf16.mxu0 0
      %1767 = vmatmul.mubr.bf16.gmra.mrb[0].mxu0 %v1664
      %v1768 = vpop.f32.mrb[0].mxu0
      %v1769 = vadd.f32 0.0, %v1768
      %v1770 = vpop.f32.mrb[0].mxu0
      %v1771 = vpop.f32.mrb[0].mxu0
      %v1772 = vadd.f32 0.0, %v1771
      %v1773 = vpop.f32.mrb[0].mxu0
      %1774 = vmatprep.mubr.bf16.mxu0 0
      %1775 = vmatmul.mubr.bf16.gmra.mrb[0].mxu0 %v1665
      %v1776 = vpop.f32.mrb[0].mxu0
      %v1777 = vadd.f32 0.0, %v1776
      %v1778 = vpop.f32.mrb[0].mxu0
      %v1779 = vpop.f32.mrb[0].mxu0
      %v1780 = vadd.f32 0.0, %v1779
      %v1781 = vpop.f32.mrb[0].mxu0
      %1782 = vdwg.mxu0
      %v1783 = vadd.f32 %v1612, %v1753
      %v1784 = vadd.f32 %v1613, %v1756
      %v1785 = vadd.f32 %v1614, %v1761
      %v1786 = vadd.f32 %v1615, %v1764
      %v1787 = vadd.f32 %v1616, %v1769
      %v1788 = vadd.f32 %v1617, %v1772
      %v1789 = vadd.f32 %v1618, %v1777
      %v1790 = vadd.f32 %v1619, %v1780
      %v1791 = vld [vmem:[%s1449] sm:$0xf]
      %v1792 = vld [vmem:[%s1449 + $0x4] sm:$0x1]
      %v1793 = vld [vmem:[%s1449 + $0x8] sm:$0xf]
      %v1794 = vld [vmem:[%s1449 + $0xc] sm:$0x1]
      %v1795 = vld [vmem:[%s1449 + $0x10] sm:$0xf]
      %v1796 = vld [vmem:[%s1449 + $0x14] sm:$0x1]
      %v1797 = vld [vmem:[%s1449 + $0x18] sm:$0xf]
      %v1798 = vld [vmem:[%s1449 + $0x1c] sm:$0x1]
      %v1799 = vld [vmem:[%s1449 + $0x20] sm:$0xf]
      %v1800 = vld [vmem:[%s1449 + $0x24] sm:$0x1]
      %v1801 = vld [vmem:[%s1449 + $0x28] sm:$0xf]
      %v1802 = vld [vmem:[%s1449 + $0x2c] sm:$0x1]
      %v1803 = vld [vmem:[%s1449 + $0x30] sm:$0xf]
      %v1804 = vld [vmem:[%s1449 + $0x34] sm:$0x1]
      %v1805 = vld [vmem:[%s1449 + $0x38] sm:$0xf]
      %v1806 = vld [vmem:[%s1449 + $0x3c] sm:$0x1]
      %v1808 = vshrl.u32 %v1791, 16
      %v1810 = vrot.slane %v1808, 4
      %v1811 = vshll.u32 %v1791, 16
      %v1813 = vrot.slane %v1811, 5
      %v1814 = vor.u32 %v1810, %v1813
      %v1815 = vrot.slane %v1814, 4
      %v1817 = vshll.u32 %v1792, 16
      %v1819 = vrot.slane %v1817, 5
      %v1820 = vsel %vm558, %v1815, %v1819
      %v1822 = vshrl.u32 %v1793, 16
      %v1824 = vrot.slane %v1822, 4
      %v1825 = vshll.u32 %v1793, 16
      %v1827 = vrot.slane %v1825, 5
      %v1828 = vor.u32 %v1824, %v1827
      %v1829 = vrot.slane %v1828, 4
      %v1831 = vshll.u32 %v1794, 16
      %v1833 = vrot.slane %v1831, 5
      %v1834 = vsel %vm558, %v1829, %v1833
      %v1836 = vshrl.u32 %v1795, 16
      %v1838 = vrot.slane %v1836, 4
      %v1839 = vshll.u32 %v1795, 16
      %v1841 = vrot.slane %v1839, 5
      %v1842 = vor.u32 %v1838, %v1841
      %v1843 = vrot.slane %v1842, 4
      %v1845 = vshll.u32 %v1796, 16
      %v1847 = vrot.slane %v1845, 5
      %v1848 = vsel %vm558, %v1843, %v1847
      %v1850 = vshrl.u32 %v1797, 16
      %v1852 = vrot.slane %v1850, 4
      %v1853 = vshll.u32 %v1797, 16
      %v1855 = vrot.slane %v1853, 5
      %v1856 = vor.u32 %v1852, %v1855
      %v1857 = vrot.slane %v1856, 4
      %v1859 = vshll.u32 %v1798, 16
      %v1861 = vrot.slane %v1859, 5
      %v1862 = vsel %vm558, %v1857, %v1861
      %v1864 = vshrl.u32 %v1799, 16
      %v1866 = vrot.slane %v1864, 4
      %v1867 = vshll.u32 %v1799, 16
      %v1869 = vrot.slane %v1867, 5
      %v1870 = vor.u32 %v1866, %v1869
      %v1871 = vrot.slane %v1870, 4
      %v1873 = vshll.u32 %v1800, 16
      %v1875 = vrot.slane %v1873, 5
      %v1876 = vsel %vm558, %v1871, %v1875
      %v1878 = vshrl.u32 %v1801, 16
      %v1880 = vrot.slane %v1878, 4
      %v1881 = vshll.u32 %v1801, 16
      %v1883 = vrot.slane %v1881, 5
      %v1884 = vor.u32 %v1880, %v1883
      %v1885 = vrot.slane %v1884, 4
      %v1887 = vshll.u32 %v1802, 16
      %v1889 = vrot.slane %v1887, 5
      %v1890 = vsel %vm558, %v1885, %v1889
      %v1892 = vshrl.u32 %v1803, 16
      %v1894 = vrot.slane %v1892, 4
      %v1895 = vshll.u32 %v1803, 16
      %v1897 = vrot.slane %v1895, 5
      %v1898 = vor.u32 %v1894, %v1897
      %v1899 = vrot.slane %v1898, 4
      %v1901 = vshll.u32 %v1804, 16
      %v1903 = vrot.slane %v1901, 5
      %v1904 = vsel %vm558, %v1899, %v1903
      %v1906 = vshrl.u32 %v1805, 16
      %v1908 = vrot.slane %v1906, 4
      %v1909 = vshll.u32 %v1805, 16
      %v1911 = vrot.slane %v1909, 5
      %v1912 = vor.u32 %v1908, %v1911
      %v1913 = vrot.slane %v1912, 4
      %v1915 = vshll.u32 %v1806, 16
      %v1917 = vrot.slane %v1915, 5
      %v1918 = vsel %vm558, %v1913, %v1917
      %s1919 = scalar_lea.vmem %s1, 512
      %v1920 = vld [vmem:[%s1919] sm:$0xf]
      %v1921 = vld [vmem:[%s1919 + $0x4] sm:$0xf]
      %v1922 = vld [vmem:[%s1919 + $0x8] sm:$0xf]
      %v1923 = vld [vmem:[%s1919 + $0xc] sm:$0xf]
      %v1924 = vld [vmem:[%s1919 + $0x10] sm:$0xf]
      %v1925 = vld [vmem:[%s1919 + $0x14] sm:$0xf]
      %v1926 = vld [vmem:[%s1919 + $0x18] sm:$0xf]
      %v1927 = vld [vmem:[%s1919 + $0x1c] sm:$0xf]
      %v1928 = vld [vmem:[%s1919 + $0x20] sm:$0xf]
      %v1929 = vld [vmem:[%s1919 + $0x24] sm:$0xf]
      %v1930 = vld [vmem:[%s1919 + $0x28] sm:$0xf]
      %v1931 = vld [vmem:[%s1919 + $0x2c] sm:$0xf]
      %v1932 = vld [vmem:[%s1919 + $0x30] sm:$0xf]
      %v1933 = vld [vmem:[%s1919 + $0x34] sm:$0xf]
      %v1934 = vld [vmem:[%s1919 + $0x38] sm:$0xf]
      %v1935 = vld [vmem:[%s1919 + $0x3c] sm:$0xf]
      %v1936 = vunpack.c.l.b16 %v1820
      %v1937 = vunpack.c.l.b16 %v1834
      %v1938 = vunpack.c.l.b16 %v1848
      %v1939 = vunpack.c.l.b16 %v1862
      %v1940 = vunpack.c.l.b16 %v1876
      %v1941 = vunpack.c.l.b16 %v1890
      %v1942 = vunpack.c.l.b16 %v1904
      %v1943 = vunpack.c.l.b16 %v1918
      %v1944 = vpack.c.b16 %v1937, %v1936
      %v1945 = vpack.c.b16 %v1939, %v1938
      %v1946 = vpack.c.b16 %v1941, %v1940
      %v1947 = vpack.c.b16 %v1943, %v1942
      %v1968 = vunpack.c.l.b16 %v1920
      %v1969 = vunpack.c.l.b16 %v1921
      %v1970 = vunpack.c.l.b16 %v1922
      %v1971 = vunpack.c.l.b16 %v1923
      %v1972 = vunpack.c.l.b16 %v1924
      %v1973 = vunpack.c.l.b16 %v1925
      %v1974 = vunpack.c.l.b16 %v1926
      %v1975 = vunpack.c.l.b16 %v1927
      %v1976 = vunpack.c.l.b16 %v1928
      %v1977 = vunpack.c.l.b16 %v1929
      %v1978 = vunpack.c.l.b16 %v1930
      %v1979 = vunpack.c.l.b16 %v1931
      %v1980 = vunpack.c.l.b16 %v1932
      %v1981 = vunpack.c.l.b16 %v1933
      %v1982 = vunpack.c.l.b16 %v1934
      %v1983 = vunpack.c.l.b16 %v1935
      %v1984 = vpack.c.b16 %v1969, %v1968
      %v1985 = vpack.c.b16 %v1971, %v1970
      %v1986 = vpack.c.b16 %v1973, %v1972
      %v1987 = vpack.c.b16 %v1975, %v1974
      %v1988 = vpack.c.b16 %v1977, %v1976
      %v1989 = vpack.c.b16 %v1979, %v1978
      %v1990 = vpack.c.b16 %v1981, %v1980
      %v1991 = vpack.c.b16 %v1983, %v1982
      %2000 = vmatprep.subr.bf16.mxu0 0
      %2001 = vmatpush1.bf16.msra.mxu0 %v1984
      %2002 = vmatprep.subr.bf16.mxu0 0
      %2003 = vmatpush1.bf16.msra.mxu0 %v1985
      %2004 = vmatprep.subr.bf16.mxu0 0
      %2005 = vmatpush1.bf16.msra.mxu0 %v1986
      %2006 = vmatprep.subr.bf16.mxu0 0
      %2007 = vmatpush1.bf16.msra.mxu0 %v1987
      %2008 = vmatprep.subr.bf16.mxu0 0
      %2009 = vmatpush1.bf16.msra.mxu0 %v1988
      %2010 = vmatprep.subr.bf16.mxu0 0
      %2011 = vmatpush1.bf16.msra.mxu0 %v1989
      %2012 = vmatprep.subr.bf16.mxu0 0
      %2013 = vmatpush1.bf16.msra.mxu0 %v1990
      %2014 = vmatprep.subr.bf16.mxu0 0
      %2015 = vmatpush1.bf16.msra.mxu0 %v1991
      %2016 = vmatprep.subr.bf16.mxu0 0
      %2017 = vmatpush1.bf16.msra.mxu0 0
      %2018 = vmatprep.subr.bf16.mxu0 0
      %2019 = vmatpush1.bf16.msra.mxu0 0
      %2020 = vmatprep.subr.bf16.mxu0 0
      %2021 = vmatpush1.bf16.msra.mxu0 0
      %2022 = vmatprep.subr.bf16.mxu0 0
      %2023 = vmatpush1.bf16.msra.mxu0 0
      %2024 = vmatprep.subr.bf16.mxu0 0
      %2025 = vmatpush1.bf16.msra.mxu0 0
      %2026 = vmatprep.subr.bf16.mxu0 0
      %2027 = vmatpush1.bf16.msra.mxu0 0
      %2028 = vmatprep.subr.bf16.mxu0 0
      %2029 = vmatpush1.bf16.msra.mxu0 0
      %2030 = vmatprep.subr.bf16.mxu0 0
      %2031 = vmatpush1.bf16.msra.mxu0 0
      %2032 = vmatprep.mubr.bf16.mxu0 0
      %2033 = vmatmul.mubr.bf16.gmra.mrb[0].mxu0 %v1944
      %v2034 = vpop.f32.mrb[0].mxu0
      %v2035 = vadd.f32 0.0, %v2034
      %v2036 = vpop.f32.mrb[0].mxu0
      %v2037 = vpop.f32.mrb[0].mxu0
      %v2038 = vadd.f32 0.0, %v2037
      %v2039 = vpop.f32.mrb[0].mxu0
      %2040 = vmatprep.mubr.bf16.mxu0 0
      %2041 = vmatmul.mubr.bf16.gmra.mrb[0].mxu0 %v1945
      %v2042 = vpop.f32.mrb[0].mxu0
      %v2043 = vadd.f32 0.0, %v2042
      %v2044 = vpop.f32.mrb[0].mxu0
      %v2045 = vpop.f32.mrb[0].mxu0
      %v2046 = vadd.f32 0.0, %v2045
      %v2047 = vpop.f32.mrb[0].mxu0
      %2048 = vmatprep.mubr.bf16.mxu0 0
      %2049 = vmatmul.mubr.bf16.gmra.mrb[0].mxu0 %v1946
      %v2050 = vpop.f32.mrb[0].mxu0
      %v2051 = vadd.f32 0.0, %v2050
      %v2052 = vpop.f32.mrb[0].mxu0
      %v2053 = vpop.f32.mrb[0].mxu0
      %v2054 = vadd.f32 0.0, %v2053
      %v2055 = vpop.f32.mrb[0].mxu0
      %2056 = vmatprep.mubr.bf16.mxu0 0
      %2057 = vmatmul.mubr.bf16.gmra.mrb[0].mxu0 %v1947
      %v2058 = vpop.f32.mrb[0].mxu0
      %v2059 = vadd.f32 0.0, %v2058
      %v2060 = vpop.f32.mrb[0].mxu0
      %v2061 = vpop.f32.mrb[0].mxu0
      %v2062 = vadd.f32 0.0, %v2061
      %v2063 = vpop.f32.mrb[0].mxu0
      %2064 = vdwg.mxu0
      %v2065 = vadd.f32 %v1783, %v2035
      %v2066 = vadd.f32 %v1784, %v2038
      %v2067 = vadd.f32 %v1785, %v2043
      %v2068 = vadd.f32 %v1786, %v2046
      %v2069 = vadd.f32 %v1787, %v2051
      %v2070 = vadd.f32 %v1788, %v2054
      %v2071 = vadd.f32 %v1789, %v2059
      %v2072 = vadd.f32 %v1790, %v2062
      %v2073 = vpack.c.bf16 %v2066, %v2065
      %v2074 = vpack.c.bf16 %v2068, %v2067
      %v2075 = vpack.c.bf16 %v2070, %v2069
      %v2076 = vpack.c.bf16 %v2072, %v2071
      %v2081 = vunpack.c.l.b16 %v2073
      %v2082 = vunpack.c.h.b16 %v2073
      %v2083 = vunpack.c.l.b16 %v2074
      %v2084 = vunpack.c.h.b16 %v2074
      %v2085 = vunpack.c.l.b16 %v2075
      %v2086 = vunpack.c.h.b16 %v2075
      %v2087 = vunpack.c.l.b16 %v2076
      %v2088 = vunpack.c.h.b16 %v2076
      %v2089 = vpack.c.b16 %v2081, %v2081
      %v2090 = vpack.c.b16 %v2082, %v2082
      %v2091 = vpack.c.b16 %v2083, %v2083
      %v2092 = vpack.c.b16 %v2084, %v2084
      %v2093 = vpack.c.b16 %v2085, %v2085
      %v2094 = vpack.c.b16 %v2086, %v2086
      %v2095 = vpack.c.b16 %v2087, %v2087
      %v2096 = vpack.c.b16 %v2088, %v2088
      %2105 = vst [vmem:[%s208] sm:$0xf] %v2089
      %2106 = vst [vmem:[%s208 + $0x4] sm:$0xf] %v2090
      %2107 = vst [vmem:[%s208 + $0x8] sm:$0xf] %v2091
      %2108 = vst [vmem:[%s208 + $0xc] sm:$0xf] %v2092
      %2109 = vst [vmem:[%s208 + $0x10] sm:$0xf] %v2093
      %2110 = vst [vmem:[%s208 + $0x14] sm:$0xf] %v2094
      %2111 = vst [vmem:[%s208 + $0x18] sm:$0xf] %v2095
      %2112 = vst [vmem:[%s208 + $0x1c] sm:$0xf] %v2096
      %v2113 = vadd.f32 %v2065, %v2066
      %v2114 = vadd.f32 %v2113, %v2067
      %v2115 = vadd.f32 %v2114, %v2068
      %v2116 = vadd.f32 %v2115, %v2069
      %v2117 = vadd.f32 %v2116, %v2070
      %v2118 = vadd.f32 %v2117, %v2071
      %v2119 = vadd.f32 %v2118, %v2072
      %v2120 = vrot.slane %v2119, 4
      %v2121 = vadd.f32 %v2119, %v2120
      %v2122 = vrot.slane %v2121, 2
      %v2123 = vadd.f32 %v2121, %v2122
      %v2124 = vrot.slane %v2123, 1
      %v2125 = vadd.f32 %v2123, %v2124
      %2126 = vst [vmem:[%s211] sm:$0x1] %v2125
      %v2127 = vmul.f32 %v2065, %v2065
      %v2128 = vmul.f32 %v2066, %v2066
      %v2129 = vmul.f32 %v2067, %v2067
      %v2130 = vmul.f32 %v2068, %v2068
      %v2131 = vmul.f32 %v2069, %v2069
      %v2132 = vmul.f32 %v2070, %v2070
      %v2133 = vmul.f32 %v2071, %v2071
      %v2134 = vmul.f32 %v2072, %v2072
      %v2135 = vadd.f32 %v2127, %v2128
      %v2136 = vadd.f32 %v2135, %v2129
      %v2137 = vadd.f32 %v2136, %v2130
      %v2138 = vadd.f32 %v2137, %v2131
      %v2139 = vadd.f32 %v2138, %v2132
      %v2140 = vadd.f32 %v2139, %v2133
      %v2141 = vadd.f32 %v2140, %v2134
      %v2142 = vrot.slane %v2141, 4
      %v2143 = vadd.f32 %v2141, %v2142
      %v2144 = vrot.slane %v2143, 2
      %v2145 = vadd.f32 %v2143, %v2144
      %v2146 = vrot.slane %v2145, 1
      %v2147 = vadd.f32 %v2145, %v2146
      %2148 = vst [vmem:[%s214] sm:$0x1] %v2147
      %p2149 = scmp.lt.s32.totalorder %s16, 1
      %s2150 = scalar_select %p2149, %s16, 1
      %s2151 = smul.addr %s2150, 8
      %s2152 = smul.addr %s2151, 4
      %s2153 = scalar_lea.vmem %s2, %s2152
      %p2154 = scmp.lt.s32.totalorder %s16, 1
      %s2155 = scalar_select %p2154, %s16, 1
      %s2156 = scalar_lea.vmem %s3, %s2155
      %p2157 = scmp.lt.s32.totalorder %s16, 1
      %s2158 = scalar_select %p2157, %s16, 1
      %s2159 = scalar_lea.vmem %s4, %s2158
      // Predicated region
      $region29: #{bottleneck_forward.8} parent=27 // pred_check
        %p2160 = pneg %p81
      $region30: #{bottleneck_forward.8} parent=27 // pred_check_branch
        %2162 = sbr.rel (%p2160) target = $region32
      $region31: #{bottleneck_forward.8} parent=27 // pred_region
        _
      $region32: #{bottleneck_forward.8} parent=27 // pred_fallthru
        _
      // Predicated region
      $region33: #{bottleneck_forward.8} parent=27 // pred_check
        %p2163 = pneg %p107
      $region34: #{bottleneck_forward.8} parent=27 // pred_check_branch
        %2165 = sbr.rel (%p2163) target = $region36
      $region35: #{bottleneck_forward.8} parent=27 // pred_region
        _
      $region36: #{bottleneck_forward.8} parent=27 // pred_fallthru
        _
      // Predicated region
      $region37: #{bottleneck_forward.8} parent=27 // pred_check
        %p2166 = pneg %p133
      $region38: #{bottleneck_forward.8} parent=27 // pred_check_branch
        %2168 = sbr.rel (%p2166) target = $region40
      $region39: #{bottleneck_forward.8} parent=27 // pred_region
        _
      $region40: #{bottleneck_forward.8} parent=27 // pred_fallthru
        _
    $region28: #{bottleneck_forward.8} parent=5 // pred_fallthru
      _
    %p2169 = scmp.le.s32.totalorder 2, %s11
    // Predicated region
    $region41: #{bottleneck_forward.8} parent=5 // pred_check
      %p2170 = pneg %p2169
    $region42: #{bottleneck_forward.8} parent=5 // pred_check_branch
      %2172 = sbr.rel (%p2170) target = $region44
    $region43: #{bottleneck_forward.8} parent=5 // pred_region
      %s2173 = ssub.s32 %s11, 2
      // Predicated region
      $region45: #{bottleneck_forward.8} parent=43 // pred_check
        %p2174 = pneg %p87
      $region46: #{bottleneck_forward.8} parent=43 // pred_check_branch
        %2176 = sbr.rel (%p2174) target = $region48
      $region47: #{bottleneck_forward.8} parent=43 // pred_region
        %p2177 = scmp.lt.s32.totalorder %s17, 1
        %s2178 = scalar_select %p2177, %s17, 1
        %s2179 = smul.addr %s2178, 8
        %s2180 = smul.addr %s2179, 4
        %s2181 = scalar_lea.vmem %s2, %s2180
      $region48: #{bottleneck_forward.8} parent=43 // pred_fallthru
        _
      // Predicated region
      $region49: #{bottleneck_forward.8} parent=43 // pred_check
        %p2182 = pneg %p113
      $region50: #{bottleneck_forward.8} parent=43 // pred_check_branch
        %2184 = sbr.rel (%p2182) target = $region52
      $region51: #{bottleneck_forward.8} parent=43 // pred_region
        %p2185 = scmp.lt.s32.totalorder %s17, 1
        %s2186 = scalar_select %p2185, %s17, 1
        %s2187 = scalar_lea.vmem %s3, %s2186
      $region52: #{bottleneck_forward.8} parent=43 // pred_fallthru
        _
      // Predicated region
      $region53: #{bottleneck_forward.8} parent=43 // pred_check
        %p2188 = pneg %p139
      $region54: #{bottleneck_forward.8} parent=43 // pred_check_branch
        %2190 = sbr.rel (%p2188) target = $region56
      $region55: #{bottleneck_forward.8} parent=43 // pred_region
        %p2191 = scmp.lt.s32.totalorder %s17, 1
        %s2192 = scalar_select %p2191, %s17, 1
        %s2193 = scalar_lea.vmem %s4, %s2192
      $region56: #{bottleneck_forward.8} parent=43 // pred_fallthru
        _
    $region44: #{bottleneck_forward.8} parent=5 // pred_fallthru
      _
  $region6: #{bottleneck_forward.8} parent=0 // loop_footer
    %s15 = sadd.s32 1, %s11
  $region7: #{bottleneck_forward.8} parent=0 // loop_footer_branch
    %10 = sbr.rel target = $region3
  $region8: #{bottleneck_forward.8} parent=0 // loop_exit
    _

// kernel: bottleneck_forward.11
$region0: #{bottleneck_forward.11}
  #allocation0 [shape = 'u32[]', space=smem, size = 0x4, offset = 0x4, fixed_abs, tag = 'smem constant byte address 0x4 - core index']
  #allocation1 [shape = 'u32[144,128]{1,0:T(1,128)}', space=vmem, size = 0x12000, scoped, tag = 'internal scratch']
  %s0 = inlined_call_operand.vmem [shape: bf16[128,128], index: 0, kind: input, shape index: {}]
  %s1 = inlined_call_operand.vmem [shape: bf16[128,128], index: 1, kind: input, shape index: {}]
  %s2 = inlined_call_operand.vmem [shape: f32[1,128], index: 2, kind: input, shape index: {}]
  %s3 = inlined_call_operand.vmem [shape: f32[1,128], index: 3, kind: input, shape index: {}]
  %s4 = inlined_call_operand.vmem [shape: f32[1,128], index: 4, kind: input, shape index: {}]
  %s5 = inlined_call_operand.vmem [shape: f32[1,128], index: 5, kind: input, shape index: {}]
  %s6 = inlined_call_operand.vmem [shape: bf16[128,128], index: 6, kind: output, shape index: {}]
  %s7 = sld [smem:[#allocation0]]
  $region34: #{bottleneck_forward.11} parent=0
    _
  %s9 = ssub.s32 1, %s7
  %s10 = scalar_select 0, %s9, %s7
  // Predicated region
  $region2: #{bottleneck_forward.11} parent=0 // pred_check
    _
  $region3: #{bottleneck_forward.11} parent=0 // pred_check_branch
    %12 = sbr.rel (0) target = $region5
  $region4: #{bottleneck_forward.11} parent=0 // pred_region
    _
  $region5: #{bottleneck_forward.11} parent=0 // pred_fallthru
    _
  // Predicated region
  $region6: #{bottleneck_forward.11} parent=0 // pred_check
    _
  $region7: #{bottleneck_forward.11} parent=0 // pred_check_branch
    %14 = sbr.rel (0) target = $region9
  $region8: #{bottleneck_forward.11} parent=0 // pred_region
    _
  $region9: #{bottleneck_forward.11} parent=0 // pred_fallthru
    _
  // Predicated region
  $region10: #{bottleneck_forward.11} parent=0 // pred_check
    _
  $region11: #{bottleneck_forward.11} parent=0 // pred_check_branch
    %16 = sbr.rel (0) target = $region13
  $region12: #{bottleneck_forward.11} parent=0 // pred_region
    _
  $region13: #{bottleneck_forward.11} parent=0 // pred_fallthru
    _
  // Predicated region
  $region14: #{bottleneck_forward.11} parent=0 // pred_check
    _
  $region15: #{bottleneck_forward.11} parent=0 // pred_check_branch
    %18 = sbr.rel (0) target = $region17
  $region16: #{bottleneck_forward.11} parent=0 // pred_region
    _
  $region17: #{bottleneck_forward.11} parent=0 // pred_fallthru
    _
  // Predicated region
  $region18: #{bottleneck_forward.11} parent=0 // pred_check
    _
  $region19: #{bottleneck_forward.11} parent=0 // pred_check_branch
    %20 = sbr.rel (0) target = $region21
  $region20: #{bottleneck_forward.11} parent=0 // pred_region
    _
  $region21: #{bottleneck_forward.11} parent=0 // pred_fallthru
    _
  // Predicated region
  $region22: #{bottleneck_forward.11} parent=0 // pred_check
    _
  $region23: #{bottleneck_forward.11} parent=0 // pred_check_branch
    %22 = sbr.rel (0) target = $region25
  $region24: #{bottleneck_forward.11} parent=0 // pred_region
    _
  $region25: #{bottleneck_forward.11} parent=0 // pred_fallthru
    _
  %v23 = vld [vmem:[%s0] sm:$0xf]
  %v24 = vld [vmem:[%s0 + $0x4] sm:$0xf]
  %v25 = vld [vmem:[%s0 + $0x8] sm:$0xf]
  %v26 = vld [vmem:[%s0 + $0xc] sm:$0xf]
  %v27 = vld [vmem:[%s0 + $0x10] sm:$0xf]
  %v28 = vld [vmem:[%s0 + $0x14] sm:$0xf]
  %v29 = vld [vmem:[%s0 + $0x18] sm:$0xf]
  %v30 = vld [vmem:[%s0 + $0x1c] sm:$0xf]
  %v31 = vld [vmem:[%s0 + $0x20] sm:$0xf]
  %v32 = vld [vmem:[%s0 + $0x24] sm:$0xf]
  %v33 = vld [vmem:[%s0 + $0x28] sm:$0xf]
  %v34 = vld [vmem:[%s0 + $0x2c] sm:$0xf]
  %v35 = vld [vmem:[%s0 + $0x30] sm:$0xf]
  %v36 = vld [vmem:[%s0 + $0x34] sm:$0xf]
  %v37 = vld [vmem:[%s0 + $0x38] sm:$0xf]
  %v38 = vld [vmem:[%s0 + $0x3c] sm:$0xf]
  %v39 = vunpack.c.l.bf16 %v23
  %v40 = vunpack.c.l.bf16 %v24
  %v41 = vunpack.c.l.bf16 %v25
  %v42 = vunpack.c.l.bf16 %v26
  %v43 = vunpack.c.l.bf16 %v27
  %v44 = vunpack.c.l.bf16 %v28
  %v45 = vunpack.c.l.bf16 %v29
  %v46 = vunpack.c.l.bf16 %v30
  %v47 = vunpack.c.l.bf16 %v31
  %v48 = vunpack.c.l.bf16 %v32
  %v49 = vunpack.c.l.bf16 %v33
  %v50 = vunpack.c.l.bf16 %v34
  %v51 = vunpack.c.l.bf16 %v35
  %v52 = vunpack.c.l.bf16 %v36
  %v53 = vunpack.c.l.bf16 %v37
  %v54 = vunpack.c.l.bf16 %v38
  %v55 = vld [vmem:[%s2] sm:$0x1]
  %v57 = vlaneseq
  %v58 = vshrl.u32 %v57, 7
  %v59 = vsub.s32 0, %v58
  %v60 = vrot.slane %v55, %v59
  %v62 = vmul.f32 %v39, %v60
  %v63 = vmul.f32 %v40, %v60
  %v64 = vmul.f32 %v41, %v60
  %v65 = vmul.f32 %v42, %v60
  %v66 = vmul.f32 %v43, %v60
  %v67 = vmul.f32 %v44, %v60
  %v68 = vmul.f32 %v45, %v60
  %v69 = vmul.f32 %v46, %v60
  %v70 = vmul.f32 %v47, %v60
  %v71 = vmul.f32 %v48, %v60
  %v72 = vmul.f32 %v49, %v60
  %v73 = vmul.f32 %v50, %v60
  %v74 = vmul.f32 %v51, %v60
  %v75 = vmul.f32 %v52, %v60
  %v76 = vmul.f32 %v53, %v60
  %v77 = vmul.f32 %v54, %v60
  %v78 = vld [vmem:[%s3] sm:$0x1]
  %v80 = vlaneseq
  %v81 = vshrl.u32 %v80, 7
  %v82 = vsub.s32 0, %v81
  %v83 = vrot.slane %v78, %v82
  %v85 = vadd.f32 %v62, %v83
  %v86 = vadd.f32 %v63, %v83
  %v87 = vadd.f32 %v64, %v83
  %v88 = vadd.f32 %v65, %v83
  %v89 = vadd.f32 %v66, %v83
  %v90 = vadd.f32 %v67, %v83
  %v91 = vadd.f32 %v68, %v83
  %v92 = vadd.f32 %v69, %v83
  %v93 = vadd.f32 %v70, %v83
  %v94 = vadd.f32 %v71, %v83
  %v95 = vadd.f32 %v72, %v83
  %v96 = vadd.f32 %v73, %v83
  %v97 = vadd.f32 %v74, %v83
  %v98 = vadd.f32 %v75, %v83
  %v99 = vadd.f32 %v76, %v83
  %v100 = vadd.f32 %v77, %v83
  %v101 = vld [vmem:[%s1] sm:$0xf]
  %v102 = vld [vmem:[%s1 + $0x4] sm:$0xf]
  %v103 = vld [vmem:[%s1 + $0x8] sm:$0xf]
  %v104 = vld [vmem:[%s1 + $0xc] sm:$0xf]
  %v105 = vld [vmem:[%s1 + $0x10] sm:$0xf]
  %v106 = vld [vmem:[%s1 + $0x14] sm:$0xf]
  %v107 = vld [vmem:[%s1 + $0x18] sm:$0xf]
  %v108 = vld [vmem:[%s1 + $0x1c] sm:$0xf]
  %v109 = vld [vmem:[%s1 + $0x20] sm:$0xf]
  %v110 = vld [vmem:[%s1 + $0x24] sm:$0xf]
  %v111 = vld [vmem:[%s1 + $0x28] sm:$0xf]
  %v112 = vld [vmem:[%s1 + $0x2c] sm:$0xf]
  %v113 = vld [vmem:[%s1 + $0x30] sm:$0xf]
  %v114 = vld [vmem:[%s1 + $0x34] sm:$0xf]
  %v115 = vld [vmem:[%s1 + $0x38] sm:$0xf]
  %v116 = vld [vmem:[%s1 + $0x3c] sm:$0xf]
  %v117 = vunpack.c.l.bf16 %v101
  %v118 = vunpack.c.l.bf16 %v102
  %v119 = vunpack.c.l.bf16 %v103
  %v120 = vunpack.c.l.bf16 %v104
  %v121 = vunpack.c.l.bf16 %v105
  %v122 = vunpack.c.l.bf16 %v106
  %v123 = vunpack.c.l.bf16 %v107
  %v124 = vunpack.c.l.bf16 %v108
  %v125 = vunpack.c.l.bf16 %v109
  %v126 = vunpack.c.l.bf16 %v110
  %v127 = vunpack.c.l.bf16 %v111
  %v128 = vunpack.c.l.bf16 %v112
  %v129 = vunpack.c.l.bf16 %v113
  %v130 = vunpack.c.l.bf16 %v114
  %v131 = vunpack.c.l.bf16 %v115
  %v132 = vunpack.c.l.bf16 %v116
  %v133 = vld [vmem:[%s4] sm:$0x1]
  %v135 = vlaneseq
  %v136 = vshrl.u32 %v135, 7
  %v137 = vsub.s32 0, %v136
  %v138 = vrot.slane %v133, %v137
  %v140 = vmul.f32 %v117, %v138
  %v141 = vmul.f32 %v118, %v138
  %v142 = vmul.f32 %v119, %v138
  %v143 = vmul.f32 %v120, %v138
  %v144 = vmul.f32 %v121, %v138
  %v145 = vmul.f32 %v122, %v138
  %v146 = vmul.f32 %v123, %v138
  %v147 = vmul.f32 %v124, %v138
  %v148 = vmul.f32 %v125, %v138
  %v149 = vmul.f32 %v126, %v138
  %v150 = vmul.f32 %v127, %v138
  %v151 = vmul.f32 %v128, %v138
  %v152 = vmul.f32 %v129, %v138
  %v153 = vmul.f32 %v130, %v138
  %v154 = vmul.f32 %v131, %v138
  %v155 = vmul.f32 %v132, %v138
  %v156 = vld [vmem:[%s5] sm:$0x1]
  %v158 = vlaneseq
  %v159 = vshrl.u32 %v158, 7
  %v160 = vsub.s32 0, %v159
  %v161 = vrot.slane %v156, %v160
  %v163 = vadd.f32 %v140, %v161
  %v164 = vadd.f32 %v141, %v161
  %v165 = vadd.f32 %v142, %v161
  %v166 = vadd.f32 %v143, %v161
  %v167 = vadd.f32 %v144, %v161
  %v168 = vadd.f32 %v145, %v161
  %v169 = vadd.f32 %v146, %v161
  %v170 = vadd.f32 %v147, %v161
  %v171 = vadd.f32 %v148, %v161
  %v172 = vadd.f32 %v149, %v161
  %v173 = vadd.f32 %v150, %v161
  %v174 = vadd.f32 %v151, %v161
  %v175 = vadd.f32 %v152, %v161
  %v176 = vadd.f32 %v153, %v161
  %v177 = vadd.f32 %v154, %v161
  %v178 = vadd.f32 %v155, %v161
  %v179 = vadd.f32 %v85, %v163
  %v180 = vadd.f32 %v86, %v164
  %v181 = vadd.f32 %v87, %v165
  %v182 = vadd.f32 %v88, %v166
  %v183 = vadd.f32 %v89, %v167
  %v184 = vadd.f32 %v90, %v168
  %v185 = vadd.f32 %v91, %v169
  %v186 = vadd.f32 %v92, %v170
  %v187 = vadd.f32 %v93, %v171
  %v188 = vadd.f32 %v94, %v172
  %v189 = vadd.f32 %v95, %v173
  %v190 = vadd.f32 %v96, %v174
  %v191 = vadd.f32 %v97, %v175
  %v192 = vadd.f32 %v98, %v176
  %v193 = vadd.f32 %v99, %v177
  %v194 = vadd.f32 %v100, %v178
  %v195 = vmax.f32 %v179, 0.0
  %v196 = vmax.f32 %v180, 0.0
  %v197 = vmax.f32 %v181, 0.0
  %v198 = vmax.f32 %v182, 0.0
  %v199 = vmax.f32 %v183, 0.0
  %v200 = vmax.f32 %v184, 0.0
  %v201 = vmax.f32 %v185, 0.0
  %v202 = vmax.f32 %v186, 0.0
  %v203 = vmax.f32 %v187, 0.0
  %v204 = vmax.f32 %v188, 0.0
  %v205 = vmax.f32 %v189, 0.0
  %v206 = vmax.f32 %v190, 0.0
  %v207 = vmax.f32 %v191, 0.0
  %v208 = vmax.f32 %v192, 0.0
  %v209 = vmax.f32 %v193, 0.0
  %v210 = vmax.f32 %v194, 0.0
  %v211 = vpack.c.bf16 %v196, %v195
  %v212 = vpack.c.bf16 %v198, %v197
  %v213 = vpack.c.bf16 %v200, %v199
  %v214 = vpack.c.bf16 %v202, %v201
  %v215 = vpack.c.bf16 %v204, %v203
  %v216 = vpack.c.bf16 %v206, %v205
  %v217 = vpack.c.bf16 %v208, %v207
  %v218 = vpack.c.bf16 %v210, %v209
  %v227 = vunpack.c.l.b16 %v211
  %v228 = vunpack.c.h.b16 %v211
  %v229 = vunpack.c.l.b16 %v212
  %v230 = vunpack.c.h.b16 %v212
  %v231 = vunpack.c.l.b16 %v213
  %v232 = vunpack.c.h.b16 %v213
  %v233 = vunpack.c.l.b16 %v214
  %v234 = vunpack.c.h.b16 %v214
  %v235 = vunpack.c.l.b16 %v215
  %v236 = vunpack.c.h.b16 %v215
  %v237 = vunpack.c.l.b16 %v216
  %v238 = vunpack.c.h.b16 %v216
  %v239 = vunpack.c.l.b16 %v217
  %v240 = vunpack.c.h.b16 %v217
  %v241 = vunpack.c.l.b16 %v218
  %v242 = vunpack.c.h.b16 %v218
  %v243 = vpack.c.b16 %v227, %v227
  %v244 = vpack.c.b16 %v228, %v228
  %v245 = vpack.c.b16 %v229, %v229
  %v246 = vpack.c.b16 %v230, %v230
  %v247 = vpack.c.b16 %v231, %v231
  %v248 = vpack.c.b16 %v232, %v232
  %v249 = vpack.c.b16 %v233, %v233
  %v250 = vpack.c.b16 %v234, %v234
  %v251 = vpack.c.b16 %v235, %v235
  %v252 = vpack.c.b16 %v236, %v236
  %v253 = vpack.c.b16 %v237, %v237
  %v254 = vpack.c.b16 %v238, %v238
  %v255 = vpack.c.b16 %v239, %v239
  %v256 = vpack.c.b16 %v240, %v240
  %v257 = vpack.c.b16 %v241, %v241
  %v258 = vpack.c.b16 %v242, %v242
  %275 = vst [vmem:[%s6] sm:$0xf] %v243
  %276 = vst [vmem:[%s6 + $0x4] sm:$0xf] %v244
  %277 = vst [vmem:[%s6 + $0x8] sm:$0xf] %v245
  %278 = vst [vmem:[%s6 + $0xc] sm:$0xf] %v246
  %279 = vst [vmem:[%s6 + $0x10] sm:$0xf] %v247
  %280 = vst [vmem:[%s6 + $0x14] sm:$0xf] %v248
  %281 = vst [vmem:[%s6 + $0x18] sm:$0xf] %v249
  %282 = vst [vmem:[%s6 + $0x1c] sm:$0xf] %v250
  %283 = vst [vmem:[%s6 + $0x20] sm:$0xf] %v251
  %284 = vst [vmem:[%s6 + $0x24] sm:$0xf] %v252
  %285 = vst [vmem:[%s6 + $0x28] sm:$0xf] %v253
  %286 = vst [vmem:[%s6 + $0x2c] sm:$0xf] %v254
  %287 = vst [vmem:[%s6 + $0x30] sm:$0xf] %v255
  %288 = vst [vmem:[%s6 + $0x34] sm:$0xf] %v256
  %289 = vst [vmem:[%s6 + $0x38] sm:$0xf] %v257
  %290 = vst [vmem:[%s6 + $0x3c] sm:$0xf] %v258
  // Predicated region
  $region26: #{bottleneck_forward.11} parent=0 // pred_check
    _
  $region27: #{bottleneck_forward.11} parent=0 // pred_check_branch
    %292 = sbr.rel (0) target = $region29
  $region28: #{bottleneck_forward.11} parent=0 // pred_region
    _
  $region29: #{bottleneck_forward.11} parent=0 // pred_fallthru
    _
  // Predicated region
  $region30: #{bottleneck_forward.11} parent=0 // pred_check
    _
  $region31: #{bottleneck_forward.11} parent=0 // pred_check_branch
    %294 = sbr.rel (0) target = $region33
  $region32: #{bottleneck_forward.11} parent=0 // pred_region
    _
  $region33: #{bottleneck_forward.11} parent=0 // pred_fallthru
    _

// kernel: bottleneck_forward.10
$region0: #{bottleneck_forward.10}
  #allocation0 [shape = 'u32[]', space=smem, size = 0x4, offset = 0x4, fixed_abs, tag = 'smem constant byte address 0x4 - core index']
  #allocation1 [shape = 'u32[144,128]{1,0:T(1,128)}', space=vmem, size = 0x12000, scoped, tag = 'internal scratch']
  %s0 = inlined_call_operand.vmem [shape: bf16[128,128], index: 0, kind: input, shape index: {}]
  %s1 = inlined_call_operand.vmem [shape: bf16[128,128], index: 1, kind: input, shape index: {}]
  %s2 = inlined_call_operand.vmem [shape: bf16[128,128], index: 2, kind: output, shape index: {0}]
  %s3 = inlined_call_operand.vmem [shape: f32[1,1,128], index: 3, kind: output, shape index: {1}]
  %s4 = inlined_call_operand.vmem [shape: f32[1,1,128], index: 4, kind: output, shape index: {2}]
  %5 = xla_tuple %s2, %s3, %s4
  %s6 = sld [smem:[#allocation0]]
  $region34: #{bottleneck_forward.10} parent=0
    _
  %s8 = ssub.s32 1, %s6
  %s9 = scalar_select 0, %s8, %s6
  // Predicated region
  $region2: #{bottleneck_forward.10} parent=0 // pred_check
    _
  $region3: #{bottleneck_forward.10} parent=0 // pred_check_branch
    %11 = sbr.rel (0) target = $region5
  $region4: #{bottleneck_forward.10} parent=0 // pred_region
    _
  $region5: #{bottleneck_forward.10} parent=0 // pred_fallthru
    _
  // Predicated region
  $region6: #{bottleneck_forward.10} parent=0 // pred_check
    _
  $region7: #{bottleneck_forward.10} parent=0 // pred_check_branch
    %13 = sbr.rel (0) target = $region9
  $region8: #{bottleneck_forward.10} parent=0 // pred_region
    _
  $region9: #{bottleneck_forward.10} parent=0 // pred_fallthru
    _
  %v15 = vld [vmem:[%s0] sm:$0xf]
  %v16 = vld [vmem:[%s0 + $0x4] sm:$0xf]
  %v17 = vld [vmem:[%s0 + $0x8] sm:$0xf]
  %v18 = vld [vmem:[%s0 + $0xc] sm:$0xf]
  %v19 = vld [vmem:[%s0 + $0x10] sm:$0xf]
  %v20 = vld [vmem:[%s0 + $0x14] sm:$0xf]
  %v21 = vld [vmem:[%s0 + $0x18] sm:$0xf]
  %v22 = vld [vmem:[%s0 + $0x1c] sm:$0xf]
  %v23 = vld [vmem:[%s0 + $0x20] sm:$0xf]
  %v24 = vld [vmem:[%s0 + $0x24] sm:$0xf]
  %v25 = vld [vmem:[%s0 + $0x28] sm:$0xf]
  %v26 = vld [vmem:[%s0 + $0x2c] sm:$0xf]
  %v27 = vld [vmem:[%s0 + $0x30] sm:$0xf]
  %v28 = vld [vmem:[%s0 + $0x34] sm:$0xf]
  %v29 = vld [vmem:[%s0 + $0x38] sm:$0xf]
  %v30 = vld [vmem:[%s0 + $0x3c] sm:$0xf]
  %v31 = vld [vmem:[%s1] sm:$0xf]
  %v32 = vld [vmem:[%s1 + $0x4] sm:$0xf]
  %v33 = vld [vmem:[%s1 + $0x8] sm:$0xf]
  %v34 = vld [vmem:[%s1 + $0xc] sm:$0xf]
  %v35 = vld [vmem:[%s1 + $0x10] sm:$0xf]
  %v36 = vld [vmem:[%s1 + $0x14] sm:$0xf]
  %v37 = vld [vmem:[%s1 + $0x18] sm:$0xf]
  %v38 = vld [vmem:[%s1 + $0x1c] sm:$0xf]
  %v39 = vld [vmem:[%s1 + $0x20] sm:$0xf]
  %v40 = vld [vmem:[%s1 + $0x24] sm:$0xf]
  %v41 = vld [vmem:[%s1 + $0x28] sm:$0xf]
  %v42 = vld [vmem:[%s1 + $0x2c] sm:$0xf]
  %v43 = vld [vmem:[%s1 + $0x30] sm:$0xf]
  %v44 = vld [vmem:[%s1 + $0x34] sm:$0xf]
  %v45 = vld [vmem:[%s1 + $0x38] sm:$0xf]
  %v46 = vld [vmem:[%s1 + $0x3c] sm:$0xf]
  %v63 = vunpack.c.l.b16 %v15
  %v64 = vunpack.c.l.b16 %v16
  %v65 = vunpack.c.l.b16 %v17
  %v66 = vunpack.c.l.b16 %v18
  %v67 = vunpack.c.l.b16 %v19
  %v68 = vunpack.c.l.b16 %v20
  %v69 = vunpack.c.l.b16 %v21
  %v70 = vunpack.c.l.b16 %v22
  %v71 = vunpack.c.l.b16 %v23
  %v72 = vunpack.c.l.b16 %v24
  %v73 = vunpack.c.l.b16 %v25
  %v74 = vunpack.c.l.b16 %v26
  %v75 = vunpack.c.l.b16 %v27
  %v76 = vunpack.c.l.b16 %v28
  %v77 = vunpack.c.l.b16 %v29
  %v78 = vunpack.c.l.b16 %v30
  %v79 = vpack.c.b16 %v64, %v63
  %v80 = vpack.c.b16 %v66, %v65
  %v81 = vpack.c.b16 %v68, %v67
  %v82 = vpack.c.b16 %v70, %v69
  %v83 = vpack.c.b16 %v72, %v71
  %v84 = vpack.c.b16 %v74, %v73
  %v85 = vpack.c.b16 %v76, %v75
  %v86 = vpack.c.b16 %v78, %v77
  %v111 = vunpack.c.l.b16 %v31
  %v112 = vunpack.c.l.b16 %v32
  %v113 = vunpack.c.l.b16 %v33
  %v114 = vunpack.c.l.b16 %v34
  %v115 = vunpack.c.l.b16 %v35
  %v116 = vunpack.c.l.b16 %v36
  %v117 = vunpack.c.l.b16 %v37
  %v118 = vunpack.c.l.b16 %v38
  %v119 = vunpack.c.l.b16 %v39
  %v120 = vunpack.c.l.b16 %v40
  %v121 = vunpack.c.l.b16 %v41
  %v122 = vunpack.c.l.b16 %v42
  %v123 = vunpack.c.l.b16 %v43
  %v124 = vunpack.c.l.b16 %v44
  %v125 = vunpack.c.l.b16 %v45
  %v126 = vunpack.c.l.b16 %v46
  %v127 = vpack.c.b16 %v112, %v111
  %v128 = vpack.c.b16 %v114, %v113
  %v129 = vpack.c.b16 %v116, %v115
  %v130 = vpack.c.b16 %v118, %v117
  %v131 = vpack.c.b16 %v120, %v119
  %v132 = vpack.c.b16 %v122, %v121
  %v133 = vpack.c.b16 %v124, %v123
  %v134 = vpack.c.b16 %v126, %v125
  %143 = vmatprep.subr.bf16.mxu0 0
  %144 = vmatpush1.bf16.msra.mxu0 %v127
  %145 = vmatprep.subr.bf16.mxu0 0
  %146 = vmatpush1.bf16.msra.mxu0 %v128
  %147 = vmatprep.subr.bf16.mxu0 0
  %148 = vmatpush1.bf16.msra.mxu0 %v129
  %149 = vmatprep.subr.bf16.mxu0 0
  %150 = vmatpush1.bf16.msra.mxu0 %v130
  %151 = vmatprep.subr.bf16.mxu0 0
  %152 = vmatpush1.bf16.msra.mxu0 %v131
  %153 = vmatprep.subr.bf16.mxu0 0
  %154 = vmatpush1.bf16.msra.mxu0 %v132
  %155 = vmatprep.subr.bf16.mxu0 0
  %156 = vmatpush1.bf16.msra.mxu0 %v133
  %157 = vmatprep.subr.bf16.mxu0 0
  %158 = vmatpush1.bf16.msra.mxu0 %v134
  %159 = vmatprep.subr.bf16.mxu0 0
  %160 = vmatpush1.bf16.msra.mxu0 0
  %161 = vmatprep.subr.bf16.mxu0 0
  %162 = vmatpush1.bf16.msra.mxu0 0
  %163 = vmatprep.subr.bf16.mxu0 0
  %164 = vmatpush1.bf16.msra.mxu0 0
  %165 = vmatprep.subr.bf16.mxu0 0
  %166 = vmatpush1.bf16.msra.mxu0 0
  %167 = vmatprep.subr.bf16.mxu0 0
  %168 = vmatpush1.bf16.msra.mxu0 0
  %169 = vmatprep.subr.bf16.mxu0 0
  %170 = vmatpush1.bf16.msra.mxu0 0
  %171 = vmatprep.subr.bf16.mxu0 0
  %172 = vmatpush1.bf16.msra.mxu0 0
  %173 = vmatprep.subr.bf16.mxu0 0
  %174 = vmatpush1.bf16.msra.mxu0 0
  %175 = vmatprep.mubr.bf16.mxu0 0
  %176 = vmatmul.mubr.bf16.gmra.mrb[0].mxu0 %v79
  %v177 = vpop.f32.mrb[0].mxu0
  %v178 = vadd.f32 0.0, %v177
  %v179 = vpop.f32.mrb[0].mxu0
  %v180 = vpop.f32.mrb[0].mxu0
  %v181 = vadd.f32 0.0, %v180
  %v182 = vpop.f32.mrb[0].mxu0
  %183 = vmatprep.mubr.bf16.mxu0 0
  %184 = vmatmul.mubr.bf16.gmra.mrb[0].mxu0 %v80
  %v185 = vpop.f32.mrb[0].mxu0
  %v186 = vadd.f32 0.0, %v185
  %v187 = vpop.f32.mrb[0].mxu0
  %v188 = vpop.f32.mrb[0].mxu0
  %v189 = vadd.f32 0.0, %v188
  %v190 = vpop.f32.mrb[0].mxu0
  %191 = vmatprep.mubr.bf16.mxu0 0
  %192 = vmatmul.mubr.bf16.gmra.mrb[0].mxu0 %v81
  %v193 = vpop.f32.mrb[0].mxu0
  %v194 = vadd.f32 0.0, %v193
  %v195 = vpop.f32.mrb[0].mxu0
  %v196 = vpop.f32.mrb[0].mxu0
  %v197 = vadd.f32 0.0, %v196
  %v198 = vpop.f32.mrb[0].mxu0
  %199 = vmatprep.mubr.bf16.mxu0 0
  %200 = vmatmul.mubr.bf16.gmra.mrb[0].mxu0 %v82
  %v201 = vpop.f32.mrb[0].mxu0
  %v202 = vadd.f32 0.0, %v201
  %v203 = vpop.f32.mrb[0].mxu0
  %v204 = vpop.f32.mrb[0].mxu0
  %v205 = vadd.f32 0.0, %v204
  %v206 = vpop.f32.mrb[0].mxu0
  %207 = vmatprep.mubr.bf16.mxu0 0
  %208 = vmatmul.mubr.bf16.gmra.mrb[0].mxu0 %v83
  %v209 = vpop.f32.mrb[0].mxu0
  %v210 = vadd.f32 0.0, %v209
  %v211 = vpop.f32.mrb[0].mxu0
  %v212 = vpop.f32.mrb[0].mxu0
  %v213 = vadd.f32 0.0, %v212
  %v214 = vpop.f32.mrb[0].mxu0
  %215 = vmatprep.mubr.bf16.mxu0 0
  %216 = vmatmul.mubr.bf16.gmra.mrb[0].mxu0 %v84
  %v217 = vpop.f32.mrb[0].mxu0
  %v218 = vadd.f32 0.0, %v217
  %v219 = vpop.f32.mrb[0].mxu0
  %v220 = vpop.f32.mrb[0].mxu0
  %v221 = vadd.f32 0.0, %v220
  %v222 = vpop.f32.mrb[0].mxu0
  %223 = vmatprep.mubr.bf16.mxu0 0
  %224 = vmatmul.mubr.bf16.gmra.mrb[0].mxu0 %v85
  %v225 = vpop.f32.mrb[0].mxu0
  %v226 = vadd.f32 0.0, %v225
  %v227 = vpop.f32.mrb[0].mxu0
  %v228 = vpop.f32.mrb[0].mxu0
  %v229 = vadd.f32 0.0, %v228
  %v230 = vpop.f32.mrb[0].mxu0
  %231 = vmatprep.mubr.bf16.mxu0 0
  %232 = vmatmul.mubr.bf16.gmra.mrb[0].mxu0 %v86
  %v233 = vpop.f32.mrb[0].mxu0
  %v234 = vadd.f32 0.0, %v233
  %v235 = vpop.f32.mrb[0].mxu0
  %v236 = vpop.f32.mrb[0].mxu0
  %v237 = vadd.f32 0.0, %v236
  %v238 = vpop.f32.mrb[0].mxu0
  %239 = vdwg.mxu0
  %v240 = vpack.c.bf16 %v181, %v178
  %v241 = vpack.c.bf16 %v189, %v186
  %v242 = vpack.c.bf16 %v197, %v194
  %v243 = vpack.c.bf16 %v205, %v202
  %v244 = vpack.c.bf16 %v213, %v210
  %v245 = vpack.c.bf16 %v221, %v218
  %v246 = vpack.c.bf16 %v229, %v226
  %v247 = vpack.c.bf16 %v237, %v234
  %v256 = vunpack.c.l.b16 %v240
  %v257 = vunpack.c.h.b16 %v240
  %v258 = vunpack.c.l.b16 %v241
  %v259 = vunpack.c.h.b16 %v241
  %v260 = vunpack.c.l.b16 %v242
  %v261 = vunpack.c.h.b16 %v242
  %v262 = vunpack.c.l.b16 %v243
  %v263 = vunpack.c.h.b16 %v243
  %v264 = vunpack.c.l.b16 %v244
  %v265 = vunpack.c.h.b16 %v244
  %v266 = vunpack.c.l.b16 %v245
  %v267 = vunpack.c.h.b16 %v245
  %v268 = vunpack.c.l.b16 %v246
  %v269 = vunpack.c.h.b16 %v246
  %v270 = vunpack.c.l.b16 %v247
  %v271 = vunpack.c.h.b16 %v247
  %v272 = vpack.c.b16 %v256, %v256
  %v273 = vpack.c.b16 %v257, %v257
  %v274 = vpack.c.b16 %v258, %v258
  %v275 = vpack.c.b16 %v259, %v259
  %v276 = vpack.c.b16 %v260, %v260
  %v277 = vpack.c.b16 %v261, %v261
  %v278 = vpack.c.b16 %v262, %v262
  %v279 = vpack.c.b16 %v263, %v263
  %v280 = vpack.c.b16 %v264, %v264
  %v281 = vpack.c.b16 %v265, %v265
  %v282 = vpack.c.b16 %v266, %v266
  %v283 = vpack.c.b16 %v267, %v267
  %v284 = vpack.c.b16 %v268, %v268
  %v285 = vpack.c.b16 %v269, %v269
  %v286 = vpack.c.b16 %v270, %v270
  %v287 = vpack.c.b16 %v271, %v271
  %304 = vst [vmem:[%s2] sm:$0xf] %v272
  %305 = vst [vmem:[%s2 + $0x4] sm:$0xf] %v273
  %306 = vst [vmem:[%s2 + $0x8] sm:$0xf] %v274
  %307 = vst [vmem:[%s2 + $0xc] sm:$0xf] %v275
  %308 = vst [vmem:[%s2 + $0x10] sm:$0xf] %v276
  %309 = vst [vmem:[%s2 + $0x14] sm:$0xf] %v277
  %310 = vst [vmem:[%s2 + $0x18] sm:$0xf] %v278
  %311 = vst [vmem:[%s2 + $0x1c] sm:$0xf] %v279
  %312 = vst [vmem:[%s2 + $0x20] sm:$0xf] %v280
  %313 = vst [vmem:[%s2 + $0x24] sm:$0xf] %v281
  %314 = vst [vmem:[%s2 + $0x28] sm:$0xf] %v282
  %315 = vst [vmem:[%s2 + $0x2c] sm:$0xf] %v283
  %316 = vst [vmem:[%s2 + $0x30] sm:$0xf] %v284
  %317 = vst [vmem:[%s2 + $0x34] sm:$0xf] %v285
  %318 = vst [vmem:[%s2 + $0x38] sm:$0xf] %v286
  %319 = vst [vmem:[%s2 + $0x3c] sm:$0xf] %v287
  %v320 = vadd.f32 %v178, %v181
  %v321 = vadd.f32 %v320, %v186
  %v322 = vadd.f32 %v321, %v189
  %v323 = vadd.f32 %v322, %v194
  %v324 = vadd.f32 %v323, %v197
  %v325 = vadd.f32 %v324, %v202
  %v326 = vadd.f32 %v325, %v205
  %v327 = vadd.f32 %v326, %v210
  %v328 = vadd.f32 %v327, %v213
  %v329 = vadd.f32 %v328, %v218
  %v330 = vadd.f32 %v329, %v221
  %v331 = vadd.f32 %v330, %v226
  %v332 = vadd.f32 %v331, %v229
  %v333 = vadd.f32 %v332, %v234
  %v334 = vadd.f32 %v333, %v237
  %v335 = vrot.slane %v334, 4
  %v336 = vadd.f32 %v334, %v335
  %v337 = vrot.slane %v336, 2
  %v338 = vadd.f32 %v336, %v337
  %v339 = vrot.slane %v338, 1
  %v340 = vadd.f32 %v338, %v339
  %341 = vst [vmem:[%s3] sm:$0x1] %v340
  %v342 = vmul.f32 %v178, %v178
  %v343 = vmul.f32 %v181, %v181
  %v344 = vmul.f32 %v186, %v186
  %v345 = vmul.f32 %v189, %v189
  %v346 = vmul.f32 %v194, %v194
  %v347 = vmul.f32 %v197, %v197
  %v348 = vmul.f32 %v202, %v202
  %v349 = vmul.f32 %v205, %v205
  %v350 = vmul.f32 %v210, %v210
  %v351 = vmul.f32 %v213, %v213
  %v352 = vmul.f32 %v218, %v218
  %v353 = vmul.f32 %v221, %v221
  %v354 = vmul.f32 %v226, %v226
  %v355 = vmul.f32 %v229, %v229
  %v356 = vmul.f32 %v234, %v234
  %v357 = vmul.f32 %v237, %v237
  %v358 = vadd.f32 %v342, %v343
  %v359 = vadd.f32 %v358, %v344
  %v360 = vadd.f32 %v359, %v345
  %v361 = vadd.f32 %v360, %v346
  %v362 = vadd.f32 %v361, %v347
  %v363 = vadd.f32 %v362, %v348
  %v364 = vadd.f32 %v363, %v349
  %v365 = vadd.f32 %v364, %v350
  %v366 = vadd.f32 %v365, %v351
  %v367 = vadd.f32 %v366, %v352
  %v368 = vadd.f32 %v367, %v353
  %v369 = vadd.f32 %v368, %v354
  %v370 = vadd.f32 %v369, %v355
  %v371 = vadd.f32 %v370, %v356
  %v372 = vadd.f32 %v371, %v357
  %v373 = vrot.slane %v372, 4
  %v374 = vadd.f32 %v372, %v373
  %v375 = vrot.slane %v374, 2
  %v376 = vadd.f32 %v374, %v375
  %v377 = vrot.slane %v376, 1
  %v378 = vadd.f32 %v376, %v377
  %379 = vst [vmem:[%s4] sm:$0x1] %v378
  // Predicated region
  $region10: #{bottleneck_forward.10} parent=0 // pred_check
    _
  $region11: #{bottleneck_forward.10} parent=0 // pred_check_branch
    %381 = sbr.rel (0) target = $region13
  $region12: #{bottleneck_forward.10} parent=0 // pred_region
    _
  $region13: #{bottleneck_forward.10} parent=0 // pred_fallthru
    _
  // Predicated region
  $region14: #{bottleneck_forward.10} parent=0 // pred_check
    _
  $region15: #{bottleneck_forward.10} parent=0 // pred_check_branch
    %383 = sbr.rel (0) target = $region17
  $region16: #{bottleneck_forward.10} parent=0 // pred_region
    _
  $region17: #{bottleneck_forward.10} parent=0 // pred_fallthru
    _
  // Predicated region
  $region18: #{bottleneck_forward.10} parent=0 // pred_check
    _
  $region19: #{bottleneck_forward.10} parent=0 // pred_check_branch
    %385 = sbr.rel (0) target = $region21
  $region20: #{bottleneck_forward.10} parent=0 // pred_region
    _
  $region21: #{bottleneck_forward.10} parent=0 // pred_fallthru
    _
  // Predicated region
  $region22: #{bottleneck_forward.10} parent=0 // pred_check
    _
  $region23: #{bottleneck_forward.10} parent=0 // pred_check_branch
    %387 = sbr.rel (0) target = $region25
  $region24: #{bottleneck_forward.10} parent=0 // pred_region
    _
  $region25: #{bottleneck_forward.10} parent=0 // pred_fallthru
    _
  // Predicated region
  $region26: #{bottleneck_forward.10} parent=0 // pred_check
    _
  $region27: #{bottleneck_forward.10} parent=0 // pred_check_branch
    %389 = sbr.rel (0) target = $region29
  $region28: #{bottleneck_forward.10} parent=0 // pred_region
    _
  $region29: #{bottleneck_forward.10} parent=0 // pred_fallthru
    _
  // Predicated region
  $region30: #{bottleneck_forward.10} parent=0 // pred_check
    _
  $region31: #{bottleneck_forward.10} parent=0 // pred_check_branch
    %391 = sbr.rel (0) target = $region33
  $region32: #{bottleneck_forward.10} parent=0 // pred_region
    _
  $region33: #{bottleneck_forward.10} parent=0 // pred_fallthru
    _

</llo_original>
